<compile_context>
chip_gen: v5e
topology: v5e:2x2
jax: 0.10.0
libtpu: 0.0.40
codegen_flags: <defaults>
</compile_context>

<pallas_src>
import math

import jax
import jax.numpy as jnp
import numpy as np
from jax.experimental import pallas as pl
from jax.experimental.pallas import tpu as pltpu

# ------------------------- small, module-consistent config -------------------
B = 2
C, H, W = 4, 16, 16            # chan_row_col = (4, 16, 16)
N_PATCHES = 4
PATCH_SIZE = H // N_PATCHES    # 4
INPUT_D = C * PATCH_SIZE * PATCH_SIZE   # 64
HIDDEN_D = 32
N_HEADS = 2
D_HEAD = HIDDEN_D // N_HEADS
N_BLOCKS = 2
NUM_CLASSES = 10
S1 = N_PATCHES * N_PATCHES     # 16 patch tokens
S = S1 + 1                     # + class token = 17
S_PAD = 24                     # padded token rows per batch (multiple of 8)
CLS_ROW = S1                   # class token row inside each batch's S_PAD block
MLP_D = 4 * HIDDEN_D
QKV_D = 3 * HIDDEN_D
LN_EPS = 1e-5
SQRT2 = math.sqrt(2.0)
ATT_SCALE = 1.0 / math.sqrt(D_HEAD)


# ------------------------------- Pallas kernel --------------------------------
def vit_kernel(patches_ref, cls_ref, pos_ref, emb_w_ref, emb_b_ref,
               ln1_w_ref, ln1_b_ref, qkv_w_ref, qkv_b_ref,
               ln2_w_ref, ln2_b_ref, mlp1_w_ref, mlp1_b_ref,
               mlp2_w_ref, mlp2_b_ref, head_w_ref, head_b_ref,
               out_ref, x_sc, att_sc):
    def layernorm(v, w, b):
        mu = jnp.mean(v, axis=-1, keepdims=True)
        var = jnp.mean((v - mu) ** 2, axis=-1, keepdims=True)
        return (v - mu) * jax.lax.rsqrt(var + LN_EPS) * w + b

    def softmax_last(v):
        m = jnp.max(v, axis=-1, keepdims=True)
        e = jnp.exp(v - m)
        return e / jnp.sum(e, axis=-1, keepdims=True)

    # Patch embedding for the whole batch at once: (B*S1, 64) @ (64, 32)
    tok = jnp.dot(patches_ref[...], emb_w_ref[...],
                  preferred_element_type=jnp.float32) + emb_b_ref[...]

    # Assemble the activation buffer (B*S_PAD, HIDDEN_D):
    #   rows [r0, r0+S1)  = patch tokens, row r0+CLS_ROW = class token,
    #   rows [r0+S, r0+S_PAD) = zero padding.  All writes are 8-row aligned
    # except the single class-token row per batch.
    x_sc[...] = jnp.zeros_like(x_sc)
    for b in range(B):
        r0 = b * S_PAD
        x_sc[r0:r0 + S1, :] = tok[b * S1:(b + 1) * S1, :]
        x_sc[r0 + CLS_ROW:r0 + CLS_ROW + 1, :] = cls_ref[...]
    # Multiplicative positional embedding (matches the torch module:
    # out = tokens * pos_embed); pos_ref already permuted/padded/tiled.
    x = x_sc[...] * pos_ref[...]

    # Key-column mask: padded key rows (>= S real tokens) get -1e9 pre-softmax.
    col = jax.lax.broadcasted_iota(jnp.int32, (S_PAD, S_PAD), 1)
    neg_mask = jnp.where(col < S, 0.0, -1e9).astype(jnp.float32)

    for blk in range(N_BLOCKS):
        # ---------------- MSA branch ----------------
        h1 = layernorm(x, ln1_w_ref[blk], ln1_b_ref[blk])
        # Fused Q/K/V projection: (B*S_PAD, 32) @ (32, 96)
        qkv = jnp.dot(h1, qkv_w_ref[blk],
                      preferred_element_type=jnp.float32) + qkv_b_ref[blk]
        for b in range(B):
            r0 = b * S_PAD
            for hh in range(N_HEADS):
                c0 = hh * D_HEAD
                qh = qkv[r0:r0 + S_PAD, c0:c0 + D_HEAD]
                kh = qkv[r0:r0 + S_PAD, HIDDEN_D + c0:HIDDEN_D + c0 + D_HEAD]
                vh = qkv[r0:r0 + S_PAD, 2 * HIDDEN_D + c0:2 * HIDDEN_D + c0 + D_HEAD]
                # contraction over dim 1 of both operands (no explicit .T)
                scores = jax.lax.dot_general(
                    qh, kh, (((1,), (1,)), ((), ())),
                    preferred_element_type=jnp.float32) * ATT_SCALE + neg_mask
                att = softmax_last(scores)
                att_sc[r0:r0 + S_PAD, c0:c0 + D_HEAD] = jnp.dot(
                    att, vh, preferred_element_type=jnp.float32)
        x = x + att_sc[...]

        # ---------------- MLP branch ----------------
        h2 = layernorm(x, ln2_w_ref[blk], ln2_b_ref[blk])
        m = jnp.dot(h2, mlp1_w_ref[blk],
                    preferred_element_type=jnp.float32) + mlp1_b_ref[blk]
        m = 0.5 * m * (1.0 + jax.lax.erf(m / SQRT2))          # exact GELU (torch default)
        m = jnp.dot(m, mlp2_w_ref[blk],
                    preferred_element_type=jnp.float32) + mlp2_b_ref[blk]
        x = x + m

    # Classification head: one matmul over all rows, then pick class-token rows.
    logits = jnp.dot(x, head_w_ref[...],
                     preferred_element_type=jnp.float32) + head_b_ref[...]
    probs = softmax_last(logits)                               # (B*S_PAD, NUM_CLASSES)
    for b in range(B):
        r = b * S_PAD + CLS_ROW
        out_ref[b:b + 1, :] = probs[r:r + 1, :]


# ------------------------------- JAX glue -------------------------------------
def patch_input_jax(x):
    """Reproduce torch patch_input: NCHW -> (B, n_patches^2, C*ps*ps), C-major flatten."""
    b, c, h, w = x.shape
    ps = PATCH_SIZE
    xp = x.reshape(b, c, N_PATCHES, ps, N_PATCHES, ps)
    xp = xp.transpose(0, 2, 4, 1, 3, 5)        # (B, pi, pj, C, ps, ps)
    return xp.reshape(b, N_PATCHES * N_PATCHES, c * ps * ps)


def positional_embedding_jax(seq_len, dim):
    i = jnp.arange(seq_len, dtype=jnp.float32)[:, None]
    j = jnp.arange(dim)[None, :]
    arg = i / (100000.0 ** (j.astype(jnp.float32) / dim))
    return jnp.where(j % 2 == 0, jnp.sin(arg), jnp.cos(arg)).astype(jnp.float32)


def init_params(key):
    ks = jax.random.split(key, 12)
    p = {}
    p["emb_w"] = (jax.random.normal(ks[0], (INPUT_D, HIDDEN_D)) * 0.05).astype(jnp.float32)
    p["emb_b"] = (jax.random.normal(ks[1], (1, HIDDEN_D)) * 0.05).astype(jnp.float32)
    p["cls"] = jax.random.uniform(ks[2], (1, HIDDEN_D), jnp.float32)   # torch.rand
    p["ln1_w"] = jnp.ones((N_BLOCKS, 1, HIDDEN_D), jnp.float32)
    p["ln1_b"] = jnp.zeros((N_BLOCKS, 1, HIDDEN_D), jnp.float32)
    p["ln2_w"] = jnp.ones((N_BLOCKS, 1, HIDDEN_D), jnp.float32)
    p["ln2_b"] = jnp.zeros((N_BLOCKS, 1, HIDDEN_D), jnp.float32)
    # per-head q/k/v linears -> block-diagonal full matrices
    head_w = (jax.random.normal(ks[3], (N_BLOCKS, 3, N_HEADS, D_HEAD, D_HEAD)) * 0.1
              ).astype(jnp.float32)
    qkv_w = jnp.zeros((N_BLOCKS, 3, HIDDEN_D, HIDDEN_D), jnp.float32)
    for hh in range(N_HEADS):
        sl = slice(hh * D_HEAD, (hh + 1) * D_HEAD)
        qkv_w = qkv_w.at[:, :, sl, sl].set(head_w[:, :, hh])
    p["qkv_w"] = qkv_w
    p["qkv_b"] = (jax.random.normal(ks[4], (N_BLOCKS, 3, 1, HIDDEN_D)) * 0.05
                  ).astype(jnp.float32)
    p["mlp1_w"] = (jax.random.normal(ks[5], (N_BLOCKS, HIDDEN_D, MLP_D)) * 0.05
                   ).astype(jnp.float32)
    p["mlp1_b"] = (jax.random.normal(ks[6], (N_BLOCKS, 1, MLP_D)) * 0.05).astype(jnp.float32)
    p["mlp2_w"] = (jax.random.normal(ks[7], (N_BLOCKS, MLP_D, HIDDEN_D)) * 0.05
                   ).astype(jnp.float32)
    p["mlp2_b"] = (jax.random.normal(ks[8], (N_BLOCKS, 1, HIDDEN_D)) * 0.05).astype(jnp.float32)
    p["head_w"] = (jax.random.normal(ks[9], (HIDDEN_D, NUM_CLASSES)) * 0.05).astype(jnp.float32)
    p["head_b"] = (jax.random.normal(ks[10], (1, NUM_CLASSES)) * 0.05).astype(jnp.float32)
    return p


def vit_pallas(x, params, pos):
    # Patch extraction (pure data movement) outside the kernel; flatten batch
    # into the sublane axis so the kernel embeds all B*S1 patches in one matmul.
    patches = patch_input_jax(x).astype(jnp.float32).reshape(B * S1, INPUT_D)

    # Fuse q/k/v weights along the output (lane) axis -> (N_BLOCKS, 32, 96).
    qkv_w = jnp.concatenate([params["qkv_w"][:, i] for i in range(3)], axis=-1)
    qkv_b = jnp.concatenate([params["qkv_b"][:, i] for i in range(3)], axis=-1)

    # Positional embedding permuted to the kernel's row layout
    # (tokens first, class token at CLS_ROW), zero-padded to S_PAD, tiled over B.
    pos_perm = jnp.concatenate([pos[1:S], pos[0:1]], axis=0)          # (S, HIDDEN_D)
    pos_pad = jnp.zeros((S_PAD, HIDDEN_D), jnp.float32).at[:S].set(pos_perm)
    pos_tiled = jnp.tile(pos_pad, (B, 1))                             # (B*S_PAD, HIDDEN_D)

    args = [patches, params["cls"], pos_tiled, params["emb_w"], params["emb_b"],
            params["ln1_w"], params["ln1_b"], qkv_w, qkv_b,
            params["ln2_w"], params["ln2_b"], params["mlp1_w"], params["mlp1_b"],
            params["mlp2_w"], params["mlp2_b"], params["head_w"], params["head_b"]]

    in_specs = [pl.BlockSpec(a.shape, lambda i, nd=a.ndim: (0,) * nd) for a in args]

    out = pl.pallas_call(
        vit_kernel,
        out_shape=jax.ShapeDtypeStruct((B, NUM_CLASSES), jnp.float32),
        grid=(1,),                                   # single invocation: whole batch in one step
        in_specs=in_specs,
        out_specs=pl.BlockSpec((B, NUM_CLASSES), lambda i: (0, 0)),
        scratch_shapes=[pltpu.VMEM((B * S_PAD, HIDDEN_D), jnp.float32),   # x assembly
                        pltpu.VMEM((B * S_PAD, HIDDEN_D), jnp.float32)],  # attention heads
        compiler_params=pltpu.CompilerParams(dimension_semantics=("arbitrary",)),
    )(*args)
    return out


# ------------------------------ pure-JAX reference ----------------------------
def vit_reference(x, params, pos):
    patches = patch_input_jax(x).astype(jnp.float32)

    def layernorm(v, w, b):
        mu = jnp.mean(v, axis=-1, keepdims=True)
        var = jnp.mean((v - mu) ** 2, axis=-1, keepdims=True)
        return (v - mu) / jnp.sqrt(var + LN_EPS) * w + b

    def softmax(v):
        return jax.nn.softmax(v, axis=-1)

    outs = []
    for n in range(B):
        tok = patches[n] @ params["emb_w"] + params["emb_b"]
        xt = jnp.concatenate([params["cls"], tok], axis=0) * pos
        for blk in range(N_BLOCKS):
            h1 = layernorm(xt, params["ln1_w"][blk], params["ln1_b"][blk])
            q = h1 @ params["qkv_w"][blk, 0] + params["qkv_b"][blk, 0]
            k = h1 @ params["qkv_w"][blk, 1] + params["qkv_b"][blk, 1]
            v = h1 @ params["qkv_w"][blk, 2] + params["qkv_b"][blk, 2]
            heads = []
            for hh in range(N_HEADS):
                sl = slice(hh * D_HEAD, (hh + 1) * D_HEAD)
                att = softmax((q[:, sl] @ k[:, sl].T) * ATT_SCALE)
                heads.append(att @ v[:, sl])
            xt = xt + jnp.concatenate(heads, axis=-1)
            h2 = layernorm(xt, params["ln2_w"][blk], params["ln2_b"][blk])
            m = h2 @ params["mlp1_w"][blk] + params["mlp1_b"][blk]
            m = 0.5 * m * (1.0 + jax.lax.erf(m / SQRT2))
            m = m @ params["mlp2_w"][blk] + params["mlp2_b"][blk]
            xt = xt + m
        logits = xt[0:1, :] @ params["head_w"] + params["head_b"]
        outs.append(softmax(logits)[0])
    return jnp.stack(outs)


# ----------------------------------- main --------------------------------------
if __name__ == "__main__":
    key_x = jax.random.PRNGKey(0)
    x = jax.random.normal(key_x, (B, C, H, W), jnp.float32)

    params = init_params(jax.random.PRNGKey(42))
    pos = positional_embedding_jax(S, HIDDEN_D)

    out = vit_pallas(x, params, pos)
    jax.block_until_ready(out)

    ref = vit_reference(x, params, pos)
    np.testing.assert_allclose(np.asarray(out), np.asarray(ref), rtol=2e-3, atol=2e-5)

    print("KERNEL_OK")
</pallas_src>

<mosaic_0001>
module attributes {stable_mosaic.version = 11 : i64} {
  func.func @vit_kernel(%arg0: i32, %arg1: memref<32x64xf32, #tpu.memory_space<vmem>>, %arg2: memref<1x32xf32, #tpu.memory_space<vmem>>, %arg3: memref<48x32xf32, #tpu.memory_space<vmem>>, %arg4: memref<64x32xf32, #tpu.memory_space<vmem>>, %arg5: memref<1x32xf32, #tpu.memory_space<vmem>>, %arg6: memref<2x1x32xf32, #tpu.memory_space<vmem>>, %arg7: memref<2x1x32xf32, #tpu.memory_space<vmem>>, %arg8: memref<2x32x96xf32, #tpu.memory_space<vmem>>, %arg9: memref<2x1x96xf32, #tpu.memory_space<vmem>>, %arg10: memref<2x1x32xf32, #tpu.memory_space<vmem>>, %arg11: memref<2x1x32xf32, #tpu.memory_space<vmem>>, %arg12: memref<2x32x128xf32, #tpu.memory_space<vmem>>, %arg13: memref<2x1x128xf32, #tpu.memory_space<vmem>>, %arg14: memref<2x128x32xf32, #tpu.memory_space<vmem>>, %arg15: memref<2x1x32xf32, #tpu.memory_space<vmem>>, %arg16: memref<32x10xf32, #tpu.memory_space<vmem>>, %arg17: memref<1x10xf32, #tpu.memory_space<vmem>>, %arg18: memref<2x10xf32, #tpu.memory_space<vmem>>, %arg19: memref<48x32xf32, #tpu.memory_space<vmem>>, %arg20: memref<48x32xf32, #tpu.memory_space<vmem>>) attributes {dimension_semantics = [#tpu.dimension_semantics<arbitrary>], iteration_bounds = array<i64: 1>, scalar_prefetch = 0 : i64, scratch_operands = 2 : i64, tpu.core_type = #tpu.core_type<tc>, window_params = [{pipeline_mode = #tpu.pipeline_mode<synchronous>, transform_indices = @transform_0, window_bounds = array<i64: 32, 64>}, {pipeline_mode = #tpu.pipeline_mode<synchronous>, transform_indices = @transform_1, window_bounds = array<i64: 1, 32>}, {pipeline_mode = #tpu.pipeline_mode<synchronous>, transform_indices = @transform_2, window_bounds = array<i64: 48, 32>}, {pipeline_mode = #tpu.pipeline_mode<synchronous>, transform_indices = @transform_3, window_bounds = array<i64: 64, 32>}, {pipeline_mode = #tpu.pipeline_mode<synchronous>, transform_indices = @transform_4, window_bounds = array<i64: 1, 32>}, {pipeline_mode = #tpu.pipeline_mode<synchronous>, transform_indices = @transform_5, window_bounds = array<i64: 2, 1, 32>}, {pipeline_mode = #tpu.pipeline_mode<synchronous>, transform_indices = @transform_6, window_bounds = array<i64: 2, 1, 32>}, {pipeline_mode = #tpu.pipeline_mode<synchronous>, transform_indices = @transform_7, window_bounds = array<i64: 2, 32, 96>}, {pipeline_mode = #tpu.pipeline_mode<synchronous>, transform_indices = @transform_8, window_bounds = array<i64: 2, 1, 96>}, {pipeline_mode = #tpu.pipeline_mode<synchronous>, transform_indices = @transform_9, window_bounds = array<i64: 2, 1, 32>}, {pipeline_mode = #tpu.pipeline_mode<synchronous>, transform_indices = @transform_10, window_bounds = array<i64: 2, 1, 32>}, {pipeline_mode = #tpu.pipeline_mode<synchronous>, transform_indices = @transform_11, window_bounds = array<i64: 2, 32, 128>}, {pipeline_mode = #tpu.pipeline_mode<synchronous>, transform_indices = @transform_12, window_bounds = array<i64: 2, 1, 128>}, {pipeline_mode = #tpu.pipeline_mode<synchronous>, transform_indices = @transform_13, window_bounds = array<i64: 2, 128, 32>}, {pipeline_mode = #tpu.pipeline_mode<synchronous>, transform_indices = @transform_14, window_bounds = array<i64: 2, 1, 32>}, {pipeline_mode = #tpu.pipeline_mode<synchronous>, transform_indices = @transform_15, window_bounds = array<i64: 32, 10>}, {pipeline_mode = #tpu.pipeline_mode<synchronous>, transform_indices = @transform_16, window_bounds = array<i64: 1, 10>}, {pipeline_mode = #tpu.pipeline_mode<synchronous>, transform_indices = @transform_17, window_bounds = array<i64: 2, 10>}]} {
    %c0 = arith.constant 0 : index
    %c0_0 = arith.constant 0 : index
    %0 = vector.load %arg1[%c0, %c0_0] : memref<32x64xf32, #tpu.memory_space<vmem>>, vector<32x64xf32>
    %c0_1 = arith.constant 0 : index
    %c0_2 = arith.constant 0 : index
    %1 = vector.load %arg4[%c0_1, %c0_2] : memref<64x32xf32, #tpu.memory_space<vmem>>, vector<64x32xf32>
    %cst = arith.constant dense<0.000000e+00> : vector<32x32xf32>
    %2 = tpu.matmul %0, %1, %cst {dimension_numbers = #tpu.dot_dimension_numbers<[1], [0], [0], [1], [0, 0, 1, 1], [], []>} : vector<32x64xf32>, vector<64x32xf32>, vector<32x32xf32> -> vector<32x32xf32>
    %c0_3 = arith.constant 0 : index
    %c0_4 = arith.constant 0 : index
    %3 = vector.load %arg5[%c0_3, %c0_4] : memref<1x32xf32, #tpu.memory_space<vmem>>, vector<1x32xf32>
    %4 = vector.broadcast %3 : vector<1x32xf32> to vector<32x32xf32>
    %5 = arith.addf %2, %4 : vector<32x32xf32>
    %cst_5 = arith.constant 0.000000e+00 : f32
    %6 = vector.broadcast %cst_5 : f32 to vector<48x32xf32>
    %c0_6 = arith.constant 0 : index
    %c0_7 = arith.constant 0 : index
    %7 = vector.load %arg19[%c0_6, %c0_7] : memref<48x32xf32, #tpu.memory_space<vmem>>, vector<48x32xf32>
    tpu.vector_store %arg19[%c0_6, %c0_7], %6 {strides = array<i32>} : memref<48x32xf32, #tpu.memory_space<vmem>>, vector<48x32xf32>,
    %8 = vector.extract_strided_slice %5 {offsets = [0, 0], sizes = [16, 32], strides = [1, 1]} : vector<32x32xf32> to vector<16x32xf32>
    %c0_8 = arith.constant 0 : index
    %c0_9 = arith.constant 0 : index
    %9 = vector.load %arg19[%c0_8, %c0_9] : memref<48x32xf32, #tpu.memory_space<vmem>>, vector<16x32xf32>
    tpu.vector_store %arg19[%c0_8, %c0_9], %8 {strides = array<i32>} : memref<48x32xf32, #tpu.memory_space<vmem>>, vector<16x32xf32>,
    %c0_10 = arith.constant 0 : index
    %c0_11 = arith.constant 0 : index
    %10 = vector.load %arg2[%c0_10, %c0_11] : memref<1x32xf32, #tpu.memory_space<vmem>>, vector<1x32xf32>
    %c16 = arith.constant 16 : index
    %c0_12 = arith.constant 0 : index
    %11 = vector.load %arg19[%c16, %c0_12] : memref<48x32xf32, #tpu.memory_space<vmem>>, vector<1x32xf32>
    tpu.vector_store %arg19[%c16, %c0_12], %10 {strides = array<i32>} : memref<48x32xf32, #tpu.memory_space<vmem>>, vector<1x32xf32>,
    %12 = vector.extract_strided_slice %5 {offsets = [16, 0], sizes = [16, 32], strides = [1, 1]} : vector<32x32xf32> to vector<16x32xf32>
    %c24 = arith.constant 24 : index
    %c0_13 = arith.constant 0 : index
    %13 = vector.load %arg19[%c24, %c0_13] : memref<48x32xf32, #tpu.memory_space<vmem>>, vector<16x32xf32>
    tpu.vector_store %arg19[%c24, %c0_13], %12 {strides = array<i32>} : memref<48x32xf32, #tpu.memory_space<vmem>>, vector<16x32xf32>,
    %c0_14 = arith.constant 0 : index
    %c0_15 = arith.constant 0 : index
    %14 = vector.load %arg2[%c0_14, %c0_15] : memref<1x32xf32, #tpu.memory_space<vmem>>, vector<1x32xf32>
    %c40 = arith.constant 40 : index
    %c0_16 = arith.constant 0 : index
    %15 = vector.load %arg19[%c40, %c0_16] : memref<48x32xf32, #tpu.memory_space<vmem>>, vector<1x32xf32>
    tpu.vector_store %arg19[%c40, %c0_16], %14 {strides = array<i32>} : memref<48x32xf32, #tpu.memory_space<vmem>>, vector<1x32xf32>,
    %c0_17 = arith.constant 0 : index
    %c0_18 = arith.constant 0 : index
    %16 = vector.load %arg19[%c0_17, %c0_18] : memref<48x32xf32, #tpu.memory_space<vmem>>, vector<48x32xf32>
    %c0_19 = arith.constant 0 : index
    %c0_20 = arith.constant 0 : index
    %17 = vector.load %arg3[%c0_19, %c0_20] : memref<48x32xf32, #tpu.memory_space<vmem>>, vector<48x32xf32>
    %18 = arith.mulf %16, %17 : vector<48x32xf32>
    %19 = tpu.iota {dimensions = array<i32: 1>} : vector<24x24xi32>
    %c17_i32 = arith.constant 17 : i32
    %20 = vector.broadcast %c17_i32 : i32 to vector<24x24xi32>
    %21 = arith.cmpi slt, %19, %20 : vector<24x24xi32>
    %cst_21 = arith.constant 0.000000e+00 : f32
    %cst_22 = arith.constant -1.000000e+09 : f32
    %22 = vector.broadcast %cst_21 : f32 to vector<24x24xf32>
    %23 = vector.broadcast %cst_22 : f32 to vector<24x24xf32>
    %24 = arith.select %21, %22, %23 : vector<24x24xi1>, vector<24x24xf32>
    %c0_23 = arith.constant 0 : index
    %c0_24 = arith.constant 0 : index
    %c0_25 = arith.constant 0 : index
    %25 = vector.load %arg6[%c0_23, %c0_24, %c0_25] : memref<2x1x32xf32, #tpu.memory_space<vmem>>, vector<1x1x32xf32>
    %26 = vector.shape_cast %25 : vector<1x1x32xf32> to vector<1x32xf32>
    %c0_26 = arith.constant 0 : index
    %c0_27 = arith.constant 0 : index
    %c0_28 = arith.constant 0 : index
    %27 = vector.load %arg7[%c0_26, %c0_27, %c0_28] : memref<2x1x32xf32, #tpu.memory_space<vmem>>, vector<1x1x32xf32>
    %28 = vector.shape_cast %27 : vector<1x1x32xf32> to vector<1x32xf32>
    %cst_29 = arith.constant dense<0.000000e+00> : vector<48xf32>
    %29 = vector.multi_reduction <add>, %18, %cst_29 [1] : vector<48x32xf32> to vector<48xf32>
    %30 = vector.shape_cast %29 : vector<48xf32> to vector<48x1xf32>
    %cst_30 = arith.constant 3.200000e+01 : f32
    %31 = vector.broadcast %cst_30 : f32 to vector<48x1xf32>
    %32 = arith.divf %30, %31 : vector<48x1xf32>
    %33 = vector.broadcast %32 : vector<48x1xf32> to vector<48x32xf32>
    %34 = arith.subf %18, %33 : vector<48x32xf32>
    %35 = arith.mulf %34, %34 : vector<48x32xf32>
    %cst_31 = arith.constant dense<0.000000e+00> : vector<48xf32>
    %36 = vector.multi_reduction <add>, %35, %cst_31 [1] : vector<48x32xf32> to vector<48xf32>
    %37 = vector.shape_cast %36 : vector<48xf32> to vector<48x1xf32>
    %cst_32 = arith.constant 3.200000e+01 : f32
    %38 = vector.broadcast %cst_32 : f32 to vector<48x1xf32>
    %39 = arith.divf %37, %38 : vector<48x1xf32>
    %40 = vector.broadcast %32 : vector<48x1xf32> to vector<48x32xf32>
    %41 = arith.subf %18, %40 : vector<48x32xf32>
    %cst_33 = arith.constant 9.99999974E-6 : f32
    %42 = vector.broadcast %cst_33 : f32 to vector<48x1xf32>
    %43 = arith.addf %39, %42 : vector<48x1xf32>
    %44 = math.rsqrt %43 : vector<48x1xf32>
    %45 = vector.broadcast %44 : vector<48x1xf32> to vector<48x32xf32>
    %46 = arith.mulf %41, %45 : vector<48x32xf32>
    %47 = vector.broadcast %26 : vector<1x32xf32> to vector<48x32xf32>
    %48 = arith.mulf %46, %47 : vector<48x32xf32>
    %49 = vector.broadcast %28 : vector<1x32xf32> to vector<48x32xf32>
    %50 = arith.addf %48, %49 : vector<48x32xf32>
    %c0_34 = arith.constant 0 : index
    %c0_35 = arith.constant 0 : index
    %c0_36 = arith.constant 0 : index
    %51 = vector.load %arg8[%c0_34, %c0_35, %c0_36] : memref<2x32x96xf32, #tpu.memory_space<vmem>>, vector<1x32x96xf32>
    %52 = vector.shape_cast %51 : vector<1x32x96xf32> to vector<32x96xf32>
    %cst_37 = arith.constant dense<0.000000e+00> : vector<48x96xf32>
    %53 = tpu.matmul %50, %52, %cst_37 {dimension_numbers = #tpu.dot_dimension_numbers<[1], [0], [0], [1], [0, 0, 1, 1], [], []>} : vector<48x32xf32>, vector<32x96xf32>, vector<48x96xf32> -> vector<48x96xf32>
    %c0_38 = arith.constant 0 : index
    %c0_39 = arith.constant 0 : index
    %c0_40 = arith.constant 0 : index
    %54 = vector.load %arg9[%c0_38, %c0_39, %c0_40] : memref<2x1x96xf32, #tpu.memory_space<vmem>>, vector<1x1x96xf32>
    %55 = vector.shape_cast %54 : vector<1x1x96xf32> to vector<1x96xf32>
    %56 = vector.broadcast %55 : vector<1x96xf32> to vector<48x96xf32>
    %57 = arith.addf %53, %56 : vector<48x96xf32>
    %58 = vector.extract_strided_slice %57 {offsets = [0, 0], sizes = [24, 16], strides = [1, 1]} : vector<48x96xf32> to vector<24x16xf32>
    %59 = vector.extract_strided_slice %57 {offsets = [0, 32], sizes = [24, 16], strides = [1, 1]} : vector<48x96xf32> to vector<24x16xf32>
    %60 = vector.extract_strided_slice %57 {offsets = [0, 64], sizes = [24, 16], strides = [1, 1]} : vector<48x96xf32> to vector<24x16xf32>
    %cst_41 = arith.constant dense<0.000000e+00> : vector<24x24xf32>
    %61 = tpu.matmul %58, %59, %cst_41 {dimension_numbers = #tpu.dot_dimension_numbers<[1], [1], [0], [0], [0, 0, 1, 0], [], []>} : vector<24x16xf32>, vector<24x16xf32>, vector<24x24xf32> -> vector<24x24xf32>
    %cst_42 = arith.constant 2.500000e-01 : f32
    %62 = vector.broadcast %cst_42 : f32 to vector<24x24xf32>
    %63 = arith.mulf %61, %62 : vector<24x24xf32>
    %64 = arith.addf %63, %24 : vector<24x24xf32>
    %cst_43 = arith.constant dense<0xFF800000> : vector<24xf32>
    %65 = vector.multi_reduction <maximumf>, %64, %cst_43 [1] : vector<24x24xf32> to vector<24xf32>
    %66 = vector.shape_cast %65 : vector<24xf32> to vector<24x1xf32>
    %67 = vector.broadcast %66 : vector<24x1xf32> to vector<24x24xf32>
    %68 = arith.subf %64, %67 : vector<24x24xf32>
    %69 = math.exp %68 : vector<24x24xf32>
    %cst_44 = arith.constant dense<0.000000e+00> : vector<24xf32>
    %70 = vector.multi_reduction <add>, %69, %cst_44 [1] : vector<24x24xf32> to vector<24xf32>
    %71 = vector.shape_cast %70 : vector<24xf32> to vector<24x1xf32>
    %72 = vector.broadcast %71 : vector<24x1xf32> to vector<24x24xf32>
    %73 = arith.divf %69, %72 : vector<24x24xf32>
    %cst_45 = arith.constant dense<0.000000e+00> : vector<24x16xf32>
    %74 = tpu.matmul %73, %60, %cst_45 {dimension_numbers = #tpu.dot_dimension_numbers<[1], [0], [0], [1], [0, 0, 1, 1], [], []>} : vector<24x24xf32>, vector<24x16xf32>, vector<24x16xf32> -> vector<24x16xf32>
    %c0_46 = arith.constant 0 : index
    %c0_47 = arith.constant 0 : index
    %75 = vector.load %arg20[%c0_46, %c0_47] : memref<48x32xf32, #tpu.memory_space<vmem>>, vector<24x16xf32>
    tpu.vector_store %arg20[%c0_46, %c0_47], %74 {strides = array<i32>} : memref<48x32xf32, #tpu.memory_space<vmem>>, vector<24x16xf32>,
    %76 = vector.extract_strided_slice %57 {offsets = [0, 16], sizes = [24, 16], strides = [1, 1]} : vector<48x96xf32> to vector<24x16xf32>
    %77 = vector.extract_strided_slice %57 {offsets = [0, 48], sizes = [24, 16], strides = [1, 1]} : vector<48x96xf32> to vector<24x16xf32>
    %78 = vector.extract_strided_slice %57 {offsets = [0, 80], sizes = [24, 16], strides = [1, 1]} : vector<48x96xf32> to vector<24x16xf32>
    %cst_48 = arith.constant dense<0.000000e+00> : vector<24x24xf32>
    %79 = tpu.matmul %76, %77, %cst_48 {dimension_numbers = #tpu.dot_dimension_numbers<[1], [1], [0], [0], [0, 0, 1, 0], [], []>} : vector<24x16xf32>, vector<24x16xf32>, vector<24x24xf32> -> vector<24x24xf32>
    %cst_49 = arith.constant 2.500000e-01 : f32
    %80 = vector.broadcast %cst_49 : f32 to vector<24x24xf32>
    %81 = arith.mulf %79, %80 : vector<24x24xf32>
    %82 = arith.addf %81, %24 : vector<24x24xf32>
    %cst_50 = arith.constant dense<0xFF800000> : vector<24xf32>
    %83 = vector.multi_reduction <maximumf>, %82, %cst_50 [1] : vector<24x24xf32> to vector<24xf32>
    %84 = vector.shape_cast %83 : vector<24xf32> to vector<24x1xf32>
    %85 = vector.broadcast %84 : vector<24x1xf32> to vector<24x24xf32>
    %86 = arith.subf %82, %85 : vector<24x24xf32>
    %87 = math.exp %86 : vector<24x24xf32>
    %cst_51 = arith.constant dense<0.000000e+00> : vector<24xf32>
    %88 = vector.multi_reduction <add>, %87, %cst_51 [1] : vector<24x24xf32> to vector<24xf32>
    %89 = vector.shape_cast %88 : vector<24xf32> to vector<24x1xf32>
    %90 = vector.broadcast %89 : vector<24x1xf32> to vector<24x24xf32>
    %91 = arith.divf %87, %90 : vector<24x24xf32>
    %cst_52 = arith.constant dense<0.000000e+00> : vector<24x16xf32>
    %92 = tpu.matmul %91, %78, %cst_52 {dimension_numbers = #tpu.dot_dimension_numbers<[1], [0], [0], [1], [0, 0, 1, 1], [], []>} : vector<24x24xf32>, vector<24x16xf32>, vector<24x16xf32> -> vector<24x16xf32>
    %c0_53 = arith.constant 0 : index
    %c16_54 = arith.constant 16 : index
    %93 = vector.load %arg20[%c0_53, %c16_54] : memref<48x32xf32, #tpu.memory_space<vmem>>, vector<24x16xf32>
    tpu.vector_store %arg20[%c0_53, %c16_54], %92 {strides = array<i32>} : memref<48x32xf32, #tpu.memory_space<vmem>>, vector<24x16xf32>,
    %94 = vector.extract_strided_slice %57 {offsets = [24, 0], sizes = [24, 16], strides = [1, 1]} : vector<48x96xf32> to vector<24x16xf32>
    %95 = vector.extract_strided_slice %57 {offsets = [24, 32], sizes = [24, 16], strides = [1, 1]} : vector<48x96xf32> to vector<24x16xf32>
    %96 = vector.extract_strided_slice %57 {offsets = [24, 64], sizes = [24, 16], strides = [1, 1]} : vector<48x96xf32> to vector<24x16xf32>
    %cst_55 = arith.constant dense<0.000000e+00> : vector<24x24xf32>
    %97 = tpu.matmul %94, %95, %cst_55 {dimension_numbers = #tpu.dot_dimension_numbers<[1], [1], [0], [0], [0, 0, 1, 0], [], []>} : vector<24x16xf32>, vector<24x16xf32>, vector<24x24xf32> -> vector<24x24xf32>
    %cst_56 = arith.constant 2.500000e-01 : f32
    %98 = vector.broadcast %cst_56 : f32 to vector<24x24xf32>
    %99 = arith.mulf %97, %98 : vector<24x24xf32>
    %100 = arith.addf %99, %24 : vector<24x24xf32>
    %cst_57 = arith.constant dense<0xFF800000> : vector<24xf32>
    %101 = vector.multi_reduction <maximumf>, %100, %cst_57 [1] : vector<24x24xf32> to vector<24xf32>
    %102 = vector.shape_cast %101 : vector<24xf32> to vector<24x1xf32>
    %103 = vector.broadcast %102 : vector<24x1xf32> to vector<24x24xf32>
    %104 = arith.subf %100, %103 : vector<24x24xf32>
    %105 = math.exp %104 : vector<24x24xf32>
    %cst_58 = arith.constant dense<0.000000e+00> : vector<24xf32>
    %106 = vector.multi_reduction <add>, %105, %cst_58 [1] : vector<24x24xf32> to vector<24xf32>
    %107 = vector.shape_cast %106 : vector<24xf32> to vector<24x1xf32>
    %108 = vector.broadcast %107 : vector<24x1xf32> to vector<24x24xf32>
    %109 = arith.divf %105, %108 : vector<24x24xf32>
    %cst_59 = arith.constant dense<0.000000e+00> : vector<24x16xf32>
    %110 = tpu.matmul %109, %96, %cst_59 {dimension_numbers = #tpu.dot_dimension_numbers<[1], [0], [0], [1], [0, 0, 1, 1], [], []>} : vector<24x24xf32>, vector<24x16xf32>, vector<24x16xf32> -> vector<24x16xf32>
    %c24_60 = arith.constant 24 : index
    %c0_61 = arith.constant 0 : index
    %111 = vector.load %arg20[%c24_60, %c0_61] : memref<48x32xf32, #tpu.memory_space<vmem>>, vector<24x16xf32>
    tpu.vector_store %arg20[%c24_60, %c0_61], %110 {strides = array<i32>} : memref<48x32xf32, #tpu.memory_space<vmem>>, vector<24x16xf32>,
    %112 = vector.extract_strided_slice %57 {offsets = [24, 16], sizes = [24, 16], strides = [1, 1]} : vector<48x96xf32> to vector<24x16xf32>
    %113 = vector.extract_strided_slice %57 {offsets = [24, 48], sizes = [24, 16], strides = [1, 1]} : vector<48x96xf32> to vector<24x16xf32>
    %114 = vector.extract_strided_slice %57 {offsets = [24, 80], sizes = [24, 16], strides = [1, 1]} : vector<48x96xf32> to vector<24x16xf32>
    %cst_62 = arith.constant dense<0.000000e+00> : vector<24x24xf32>
    %115 = tpu.matmul %112, %113, %cst_62 {dimension_numbers = #tpu.dot_dimension_numbers<[1], [1], [0], [0], [0, 0, 1, 0], [], []>} : vector<24x16xf32>, vector<24x16xf32>, vector<24x24xf32> -> vector<24x24xf32>
    %cst_63 = arith.constant 2.500000e-01 : f32
    %116 = vector.broadcast %cst_63 : f32 to vector<24x24xf32>
    %117 = arith.mulf %115, %116 : vector<24x24xf32>
    %118 = arith.addf %117, %24 : vector<24x24xf32>
    %cst_64 = arith.constant dense<0xFF800000> : vector<24xf32>
    %119 = vector.multi_reduction <maximumf>, %118, %cst_64 [1] : vector<24x24xf32> to vector<24xf32>
    %120 = vector.shape_cast %119 : vector<24xf32> to vector<24x1xf32>
    %121 = vector.broadcast %120 : vector<24x1xf32> to vector<24x24xf32>
    %122 = arith.subf %118, %121 : vector<24x24xf32>
    %123 = math.exp %122 : vector<24x24xf32>
    %cst_65 = arith.constant dense<0.000000e+00> : vector<24xf32>
    %124 = vector.multi_reduction <add>, %123, %cst_65 [1] : vector<24x24xf32> to vector<24xf32>
    %125 = vector.shape_cast %124 : vector<24xf32> to vector<24x1xf32>
    %126 = vector.broadcast %125 : vector<24x1xf32> to vector<24x24xf32>
    %127 = arith.divf %123, %126 : vector<24x24xf32>
    %cst_66 = arith.constant dense<0.000000e+00> : vector<24x16xf32>
    %128 = tpu.matmul %127, %114, %cst_66 {dimension_numbers = #tpu.dot_dimension_numbers<[1], [0], [0], [1], [0, 0, 1, 1], [], []>} : vector<24x24xf32>, vector<24x16xf32>, vector<24x16xf32> -> vector<24x16xf32>
    %c24_67 = arith.constant 24 : index
    %c16_68 = arith.constant 16 : index
    %129 = vector.load %arg20[%c24_67, %c16_68] : memref<48x32xf32, #tpu.memory_space<vmem>>, vector<24x16xf32>
    tpu.vector_store %arg20[%c24_67, %c16_68], %128 {strides = array<i32>} : memref<48x32xf32, #tpu.memory_space<vmem>>, vector<24x16xf32>,
    %c0_69 = arith.constant 0 : index
    %c0_70 = arith.constant 0 : index
    %130 = vector.load %arg20[%c0_69, %c0_70] : memref<48x32xf32, #tpu.memory_space<vmem>>, vector<48x32xf32>
    %131 = arith.addf %18, %130 : vector<48x32xf32>
    %c0_71 = arith.constant 0 : index
    %c0_72 = arith.constant 0 : index
    %c0_73 = arith.constant 0 : index
    %132 = vector.load %arg10[%c0_71, %c0_72, %c0_73] : memref<2x1x32xf32, #tpu.memory_space<vmem>>, vector<1x1x32xf32>
    %133 = vector.shape_cast %132 : vector<1x1x32xf32> to vector<1x32xf32>
    %c0_74 = arith.constant 0 : index
    %c0_75 = arith.constant 0 : index
    %c0_76 = arith.constant 0 : index
    %134 = vector.load %arg11[%c0_74, %c0_75, %c0_76] : memref<2x1x32xf32, #tpu.memory_space<vmem>>, vector<1x1x32xf32>
    %135 = vector.shape_cast %134 : vector<1x1x32xf32> to vector<1x32xf32>
    %cst_77 = arith.constant dense<0.000000e+00> : vector<48xf32>
    %136 = vector.multi_reduction <add>, %131, %cst_77 [1] : vector<48x32xf32> to vector<48xf32>
    %137 = vector.shape_cast %136 : vector<48xf32> to vector<48x1xf32>
    %cst_78 = arith.constant 3.200000e+01 : f32
    %138 = vector.broadcast %cst_78 : f32 to vector<48x1xf32>
    %139 = arith.divf %137, %138 : vector<48x1xf32>
    %140 = vector.broadcast %139 : vector<48x1xf32> to vector<48x32xf32>
    %141 = arith.subf %131, %140 : vector<48x32xf32>
    %142 = arith.mulf %141, %141 : vector<48x32xf32>
    %cst_79 = arith.constant dense<0.000000e+00> : vector<48xf32>
    %143 = vector.multi_reduction <add>, %142, %cst_79 [1] : vector<48x32xf32> to vector<48xf32>
    %144 = vector.shape_cast %143 : vector<48xf32> to vector<48x1xf32>
    %cst_80 = arith.constant 3.200000e+01 : f32
    %145 = vector.broadcast %cst_80 : f32 to vector<48x1xf32>
    %146 = arith.divf %144, %145 : vector<48x1xf32>
    %147 = vector.broadcast %139 : vector<48x1xf32> to vector<48x32xf32>
    %148 = arith.subf %131, %147 : vector<48x32xf32>
    %cst_81 = arith.constant 9.99999974E-6 : f32
    %149 = vector.broadcast %cst_81 : f32 to vector<48x1xf32>
    %150 = arith.addf %146, %149 : vector<48x1xf32>
    %151 = math.rsqrt %150 : vector<48x1xf32>
    %152 = vector.broadcast %151 : vector<48x1xf32> to vector<48x32xf32>
    %153 = arith.mulf %148, %152 : vector<48x32xf32>
    %154 = vector.broadcast %133 : vector<1x32xf32> to vector<48x32xf32>
    %155 = arith.mulf %153, %154 : vector<48x32xf32>
    %156 = vector.broadcast %135 : vector<1x32xf32> to vector<48x32xf32>
    %157 = arith.addf %155, %156 : vector<48x32xf32>
    %c0_82 = arith.constant 0 : index
    %c0_83 = arith.constant 0 : index
    %c0_84 = arith.constant 0 : index
    %158 = vector.load %arg12[%c0_82, %c0_83, %c0_84] : memref<2x32x128xf32, #tpu.memory_space<vmem>>, vector<1x32x128xf32>
    %159 = vector.shape_cast %158 : vector<1x32x128xf32> to vector<32x128xf32>
    %cst_85 = arith.constant dense<0.000000e+00> : vector<48x128xf32>
    %160 = tpu.matmul %157, %159, %cst_85 {dimension_numbers = #tpu.dot_dimension_numbers<[1], [0], [0], [1], [0, 0, 1, 1], [], []>} : vector<48x32xf32>, vector<32x128xf32>, vector<48x128xf32> -> vector<48x128xf32>
    %c0_86 = arith.constant 0 : index
    %c0_87 = arith.constant 0 : index
    %c0_88 = arith.constant 0 : index
    %161 = vector.load %arg13[%c0_86, %c0_87, %c0_88] : memref<2x1x128xf32, #tpu.memory_space<vmem>>, vector<1x1x128xf32>
    %162 = vector.shape_cast %161 : vector<1x1x128xf32> to vector<1x128xf32>
    %163 = vector.broadcast %162 : vector<1x128xf32> to vector<48x128xf32>
    %164 = arith.addf %160, %163 : vector<48x128xf32>
    %cst_89 = arith.constant 5.000000e-01 : f32
    %165 = vector.broadcast %cst_89 : f32 to vector<48x128xf32>
    %166 = arith.mulf %165, %164 : vector<48x128xf32>
    %cst_90 = arith.constant 1.41421354 : f32
    %167 = vector.broadcast %cst_90 : f32 to vector<48x128xf32>
    %168 = arith.divf %164, %167 : vector<48x128xf32>
    %169 = math.erf %168 : vector<48x128xf32>
    %cst_91 = arith.constant 1.000000e+00 : f32
    %170 = vector.broadcast %cst_91 : f32 to vector<48x128xf32>
    %171 = arith.addf %170, %169 : vector<48x128xf32>
    %172 = arith.mulf %166, %171 : vector<48x128xf32>
    %c0_92 = arith.constant 0 : index
    %c0_93 = arith.constant 0 : index
    %c0_94 = arith.constant 0 : index
    %173 = vector.load %arg14[%c0_92, %c0_93, %c0_94] : memref<2x128x32xf32, #tpu.memory_space<vmem>>, vector<1x128x32xf32>
    %174 = vector.shape_cast %173 : vector<1x128x32xf32> to vector<128x32xf32>
    %cst_95 = arith.constant dense<0.000000e+00> : vector<48x32xf32>
    %175 = tpu.matmul %172, %174, %cst_95 {dimension_numbers = #tpu.dot_dimension_numbers<[1], [0], [0], [1], [0, 0, 1, 1], [], []>} : vector<48x128xf32>, vector<128x32xf32>, vector<48x32xf32> -> vector<48x32xf32>
    %c0_96 = arith.constant 0 : index
    %c0_97 = arith.constant 0 : index
    %c0_98 = arith.constant 0 : index
    %176 = vector.load %arg15[%c0_96, %c0_97, %c0_98] : memref<2x1x32xf32, #tpu.memory_space<vmem>>, vector<1x1x32xf32>
    %177 = vector.shape_cast %176 : vector<1x1x32xf32> to vector<1x32xf32>
    %178 = vector.broadcast %177 : vector<1x32xf32> to vector<48x32xf32>
    %179 = arith.addf %175, %178 : vector<48x32xf32>
    %180 = arith.addf %131, %179 : vector<48x32xf32>
    %c1 = arith.constant 1 : index
    %c0_99 = arith.constant 0 : index
    %c0_100 = arith.constant 0 : index
    %181 = vector.load %arg6[%c1, %c0_99, %c0_100] : memref<2x1x32xf32, #tpu.memory_space<vmem>>, vector<1x1x32xf32>
    %182 = vector.shape_cast %181 : vector<1x1x32xf32> to vector<1x32xf32>
    %c1_101 = arith.constant 1 : index
    %c0_102 = arith.constant 0 : index
    %c0_103 = arith.constant 0 : index
    %183 = vector.load %arg7[%c1_101, %c0_102, %c0_103] : memref<2x1x32xf32, #tpu.memory_space<vmem>>, vector<1x1x32xf32>
    %184 = vector.shape_cast %183 : vector<1x1x32xf32> to vector<1x32xf32>
    %cst_104 = arith.constant dense<0.000000e+00> : vector<48xf32>
    %185 = vector.multi_reduction <add>, %180, %cst_104 [1] : vector<48x32xf32> to vector<48xf32>
    %186 = vector.shape_cast %185 : vector<48xf32> to vector<48x1xf32>
    %cst_105 = arith.constant 3.200000e+01 : f32
    %187 = vector.broadcast %cst_105 : f32 to vector<48x1xf32>
    %188 = arith.divf %186, %187 : vector<48x1xf32>
    %189 = vector.broadcast %188 : vector<48x1xf32> to vector<48x32xf32>
    %190 = arith.subf %180, %189 : vector<48x32xf32>
    %191 = arith.mulf %190, %190 : vector<48x32xf32>
    %cst_106 = arith.constant dense<0.000000e+00> : vector<48xf32>
    %192 = vector.multi_reduction <add>, %191, %cst_106 [1] : vector<48x32xf32> to vector<48xf32>
    %193 = vector.shape_cast %192 : vector<48xf32> to vector<48x1xf32>
    %cst_107 = arith.constant 3.200000e+01 : f32
    %194 = vector.broadcast %cst_107 : f32 to vector<48x1xf32>
    %195 = arith.divf %193, %194 : vector<48x1xf32>
    %196 = vector.broadcast %188 : vector<48x1xf32> to vector<48x32xf32>
    %197 = arith.subf %180, %196 : vector<48x32xf32>
    %cst_108 = arith.constant 9.99999974E-6 : f32
    %198 = vector.broadcast %cst_108 : f32 to vector<48x1xf32>
    %199 = arith.addf %195, %198 : vector<48x1xf32>
    %200 = math.rsqrt %199 : vector<48x1xf32>
    %201 = vector.broadcast %200 : vector<48x1xf32> to vector<48x32xf32>
    %202 = arith.mulf %197, %201 : vector<48x32xf32>
    %203 = vector.broadcast %182 : vector<1x32xf32> to vector<48x32xf32>
    %204 = arith.mulf %202, %203 : vector<48x32xf32>
    %205 = vector.broadcast %184 : vector<1x32xf32> to vector<48x32xf32>
    %206 = arith.addf %204, %205 : vector<48x32xf32>
    %c1_109 = arith.constant 1 : index
    %c0_110 = arith.constant 0 : index
    %c0_111 = arith.constant 0 : index
    %207 = vector.load %arg8[%c1_109, %c0_110, %c0_111] : memref<2x32x96xf32, #tpu.memory_space<vmem>>, vector<1x32x96xf32>
    %208 = vector.shape_cast %207 : vector<1x32x96xf32> to vector<32x96xf32>
    %cst_112 = arith.constant dense<0.000000e+00> : vector<48x96xf32>
    %209 = tpu.matmul %206, %208, %cst_112 {dimension_numbers = #tpu.dot_dimension_numbers<[1], [0], [0], [1], [0, 0, 1, 1], [], []>} : vector<48x32xf32>, vector<32x96xf32>, vector<48x96xf32> -> vector<48x96xf32>
    %c1_113 = arith.constant 1 : index
    %c0_114 = arith.constant 0 : index
    %c0_115 = arith.constant 0 : index
    %210 = vector.load %arg9[%c1_113, %c0_114, %c0_115] : memref<2x1x96xf32, #tpu.memory_space<vmem>>, vector<1x1x96xf32>
    %211 = vector.shape_cast %210 : vector<1x1x96xf32> to vector<1x96xf32>
    %212 = vector.broadcast %211 : vector<1x96xf32> to vector<48x96xf32>
    %213 = arith.addf %209, %212 : vector<48x96xf32>
    %214 = vector.extract_strided_slice %213 {offsets = [0, 0], sizes = [24, 16], strides = [1, 1]} : vector<48x96xf32> to vector<24x16xf32>
    %215 = vector.extract_strided_slice %213 {offsets = [0, 32], sizes = [24, 16], strides = [1, 1]} : vector<48x96xf32> to vector<24x16xf32>
    %216 = vector.extract_strided_slice %213 {offsets = [0, 64], sizes = [24, 16], strides = [1, 1]} : vector<48x96xf32> to vector<24x16xf32>
    %cst_116 = arith.constant dense<0.000000e+00> : vector<24x24xf32>
    %217 = tpu.matmul %214, %215, %cst_116 {dimension_numbers = #tpu.dot_dimension_numbers<[1], [1], [0], [0], [0, 0, 1, 0], [], []>} : vector<24x16xf32>, vector<24x16xf32>, vector<24x24xf32> -> vector<24x24xf32>
    %cst_117 = arith.constant 2.500000e-01 : f32
    %218 = vector.broadcast %cst_117 : f32 to vector<24x24xf32>
    %219 = arith.mulf %217, %218 : vector<24x24xf32>
    %220 = arith.addf %219, %24 : vector<24x24xf32>
    %cst_118 = arith.constant dense<0xFF800000> : vector<24xf32>
    %221 = vector.multi_reduction <maximumf>, %220, %cst_118 [1] : vector<24x24xf32> to vector<24xf32>
    %222 = vector.shape_cast %221 : vector<24xf32> to vector<24x1xf32>
    %223 = vector.broadcast %222 : vector<24x1xf32> to vector<24x24xf32>
    %224 = arith.subf %220, %223 : vector<24x24xf32>
    %225 = math.exp %224 : vector<24x24xf32>
    %cst_119 = arith.constant dense<0.000000e+00> : vector<24xf32>
    %226 = vector.multi_reduction <add>, %225, %cst_119 [1] : vector<24x24xf32> to vector<24xf32>
    %227 = vector.shape_cast %226 : vector<24xf32> to vector<24x1xf32>
    %228 = vector.broadcast %227 : vector<24x1xf32> to vector<24x24xf32>
    %229 = arith.divf %225, %228 : vector<24x24xf32>
    %cst_120 = arith.constant dense<0.000000e+00> : vector<24x16xf32>
    %230 = tpu.matmul %229, %216, %cst_120 {dimension_numbers = #tpu.dot_dimension_numbers<[1], [0], [0], [1], [0, 0, 1, 1], [], []>} : vector<24x24xf32>, vector<24x16xf32>, vector<24x16xf32> -> vector<24x16xf32>
    %c0_121 = arith.constant 0 : index
    %c0_122 = arith.constant 0 : index
    %231 = vector.load %arg20[%c0_121, %c0_122] : memref<48x32xf32, #tpu.memory_space<vmem>>, vector<24x16xf32>
    tpu.vector_store %arg20[%c0_121, %c0_122], %230 {strides = array<i32>} : memref<48x32xf32, #tpu.memory_space<vmem>>, vector<24x16xf32>,
    %232 = vector.extract_strided_slice %213 {offsets = [0, 16], sizes = [24, 16], strides = [1, 1]} : vector<48x96xf32> to vector<24x16xf32>
    %233 = vector.extract_strided_slice %213 {offsets = [0, 48], sizes = [24, 16], strides = [1, 1]} : vector<48x96xf32> to vector<24x16xf32>
    %234 = vector.extract_strided_slice %213 {offsets = [0, 80], sizes = [24, 16], strides = [1, 1]} : vector<48x96xf32> to vector<24x16xf32>
    %cst_123 = arith.constant dense<0.000000e+00> : vector<24x24xf32>
    %235 = tpu.matmul %232, %233, %cst_123 {dimension_numbers = #tpu.dot_dimension_numbers<[1], [1], [0], [0], [0, 0, 1, 0], [], []>} : vector<24x16xf32>, vector<24x16xf32>, vector<24x24xf32> -> vector<24x24xf32>
    %cst_124 = arith.constant 2.500000e-01 : f32
    %236 = vector.broadcast %cst_124 : f32 to vector<24x24xf32>
    %237 = arith.mulf %235, %236 : vector<24x24xf32>
    %238 = arith.addf %237, %24 : vector<24x24xf32>
    %cst_125 = arith.constant dense<0xFF800000> : vector<24xf32>
    %239 = vector.multi_reduction <maximumf>, %238, %cst_125 [1] : vector<24x24xf32> to vector<24xf32>
    %240 = vector.shape_cast %239 : vector<24xf32> to vector<24x1xf32>
    %241 = vector.broadcast %240 : vector<24x1xf32> to vector<24x24xf32>
    %242 = arith.subf %238, %241 : vector<24x24xf32>
    %243 = math.exp %242 : vector<24x24xf32>
    %cst_126 = arith.constant dense<0.000000e+00> : vector<24xf32>
    %244 = vector.multi_reduction <add>, %243, %cst_126 [1] : vector<24x24xf32> to vector<24xf32>
    %245 = vector.shape_cast %244 : vector<24xf32> to vector<24x1xf32>
    %246 = vector.broadcast %245 : vector<24x1xf32> to vector<24x24xf32>
    %247 = arith.divf %243, %246 : vector<24x24xf32>
    %cst_127 = arith.constant dense<0.000000e+00> : vector<24x16xf32>
    %248 = tpu.matmul %247, %234, %cst_127 {dimension_numbers = #tpu.dot_dimension_numbers<[1], [0], [0], [1], [0, 0, 1, 1], [], []>} : vector<24x24xf32>, vector<24x16xf32>, vector<24x16xf32> -> vector<24x16xf32>
    %c0_128 = arith.constant 0 : index
    %c16_129 = arith.constant 16 : index
    %249 = vector.load %arg20[%c0_128, %c16_129] : memref<48x32xf32, #tpu.memory_space<vmem>>, vector<24x16xf32>
    tpu.vector_store %arg20[%c0_128, %c16_129], %248 {strides = array<i32>} : memref<48x32xf32, #tpu.memory_space<vmem>>, vector<24x16xf32>,
    %250 = vector.extract_strided_slice %213 {offsets = [24, 0], sizes = [24, 16], strides = [1, 1]} : vector<48x96xf32> to vector<24x16xf32>
    %251 = vector.extract_strided_slice %213 {offsets = [24, 32], sizes = [24, 16], strides = [1, 1]} : vector<48x96xf32> to vector<24x16xf32>
    %252 = vector.extract_strided_slice %213 {offsets = [24, 64], sizes = [24, 16], strides = [1, 1]} : vector<48x96xf32> to vector<24x16xf32>
    %cst_130 = arith.constant dense<0.000000e+00> : vector<24x24xf32>
    %253 = tpu.matmul %250, %251, %cst_130 {dimension_numbers = #tpu.dot_dimension_numbers<[1], [1], [0], [0], [0, 0, 1, 0], [], []>} : vector<24x16xf32>, vector<24x16xf32>, vector<24x24xf32> -> vector<24x24xf32>
    %cst_131 = arith.constant 2.500000e-01 : f32
    %254 = vector.broadcast %cst_131 : f32 to vector<24x24xf32>
    %255 = arith.mulf %253, %254 : vector<24x24xf32>
    %256 = arith.addf %255, %24 : vector<24x24xf32>
    %cst_132 = arith.constant dense<0xFF800000> : vector<24xf32>
    %257 = vector.multi_reduction <maximumf>, %256, %cst_132 [1] : vector<24x24xf32> to vector<24xf32>
    %258 = vector.shape_cast %257 : vector<24xf32> to vector<24x1xf32>
    %259 = vector.broadcast %258 : vector<24x1xf32> to vector<24x24xf32>
    %260 = arith.subf %256, %259 : vector<24x24xf32>
    %261 = math.exp %260 : vector<24x24xf32>
    %cst_133 = arith.constant dense<0.000000e+00> : vector<24xf32>
    %262 = vector.multi_reduction <add>, %261, %cst_133 [1] : vector<24x24xf32> to vector<24xf32>
    %263 = vector.shape_cast %262 : vector<24xf32> to vector<24x1xf32>
    %264 = vector.broadcast %263 : vector<24x1xf32> to vector<24x24xf32>
    %265 = arith.divf %261, %264 : vector<24x24xf32>
    %cst_134 = arith.constant dense<0.000000e+00> : vector<24x16xf32>
    %266 = tpu.matmul %265, %252, %cst_134 {dimension_numbers = #tpu.dot_dimension_numbers<[1], [0], [0], [1], [0, 0, 1, 1], [], []>} : vector<24x24xf32>, vector<24x16xf32>, vector<24x16xf32> -> vector<24x16xf32>
    %c24_135 = arith.constant 24 : index
    %c0_136 = arith.constant 0 : index
    %267 = vector.load %arg20[%c24_135, %c0_136] : memref<48x32xf32, #tpu.memory_space<vmem>>, vector<24x16xf32>
    tpu.vector_store %arg20[%c24_135, %c0_136], %266 {strides = array<i32>} : memref<48x32xf32, #tpu.memory_space<vmem>>, vector<24x16xf32>,
    %268 = vector.extract_strided_slice %213 {offsets = [24, 16], sizes = [24, 16], strides = [1, 1]} : vector<48x96xf32> to vector<24x16xf32>
    %269 = vector.extract_strided_slice %213 {offsets = [24, 48], sizes = [24, 16], strides = [1, 1]} : vector<48x96xf32> to vector<24x16xf32>
    %270 = vector.extract_strided_slice %213 {offsets = [24, 80], sizes = [24, 16], strides = [1, 1]} : vector<48x96xf32> to vector<24x16xf32>
    %cst_137 = arith.constant dense<0.000000e+00> : vector<24x24xf32>
    %271 = tpu.matmul %268, %269, %cst_137 {dimension_numbers = #tpu.dot_dimension_numbers<[1], [1], [0], [0], [0, 0, 1, 0], [], []>} : vector<24x16xf32>, vector<24x16xf32>, vector<24x24xf32> -> vector<24x24xf32>
    %cst_138 = arith.constant 2.500000e-01 : f32
    %272 = vector.broadcast %cst_138 : f32 to vector<24x24xf32>
    %273 = arith.mulf %271, %272 : vector<24x24xf32>
    %274 = arith.addf %273, %24 : vector<24x24xf32>
    %cst_139 = arith.constant dense<0xFF800000> : vector<24xf32>
    %275 = vector.multi_reduction <maximumf>, %274, %cst_139 [1] : vector<24x24xf32> to vector<24xf32>
    %276 = vector.shape_cast %275 : vector<24xf32> to vector<24x1xf32>
    %277 = vector.broadcast %276 : vector<24x1xf32> to vector<24x24xf32>
    %278 = arith.subf %274, %277 : vector<24x24xf32>
    %279 = math.exp %278 : vector<24x24xf32>
    %cst_140 = arith.constant dense<0.000000e+00> : vector<24xf32>
    %280 = vector.multi_reduction <add>, %279, %cst_140 [1] : vector<24x24xf32> to vector<24xf32>
    %281 = vector.shape_cast %280 : vector<24xf32> to vector<24x1xf32>
    %282 = vector.broadcast %281 : vector<24x1xf32> to vector<24x24xf32>
    %283 = arith.divf %279, %282 : vector<24x24xf32>
    %cst_141 = arith.constant dense<0.000000e+00> : vector<24x16xf32>
    %284 = tpu.matmul %283, %270, %cst_141 {dimension_numbers = #tpu.dot_dimension_numbers<[1], [0], [0], [1], [0, 0, 1, 1], [], []>} : vector<24x24xf32>, vector<24x16xf32>, vector<24x16xf32> -> vector<24x16xf32>
    %c24_142 = arith.constant 24 : index
    %c16_143 = arith.constant 16 : index
    %285 = vector.load %arg20[%c24_142, %c16_143] : memref<48x32xf32, #tpu.memory_space<vmem>>, vector<24x16xf32>
    tpu.vector_store %arg20[%c24_142, %c16_143], %284 {strides = array<i32>} : memref<48x32xf32, #tpu.memory_space<vmem>>, vector<24x16xf32>,
    %c0_144 = arith.constant 0 : index
    %c0_145 = arith.constant 0 : index
    %286 = vector.load %arg20[%c0_144, %c0_145] : memref<48x32xf32, #tpu.memory_space<vmem>>, vector<48x32xf32>
    %287 = arith.addf %180, %286 : vector<48x32xf32>
    %c1_146 = arith.constant 1 : index
    %c0_147 = arith.constant 0 : index
    %c0_148 = arith.constant 0 : index
    %288 = vector.load %arg10[%c1_146, %c0_147, %c0_148] : memref<2x1x32xf32, #tpu.memory_space<vmem>>, vector<1x1x32xf32>
    %289 = vector.shape_cast %288 : vector<1x1x32xf32> to vector<1x32xf32>
    %c1_149 = arith.constant 1 : index
    %c0_150 = arith.constant 0 : index
    %c0_151 = arith.constant 0 : index
    %290 = vector.load %arg11[%c1_149, %c0_150, %c0_151] : memref<2x1x32xf32, #tpu.memory_space<vmem>>, vector<1x1x32xf32>
    %291 = vector.shape_cast %290 : vector<1x1x32xf32> to vector<1x32xf32>
    %cst_152 = arith.constant dense<0.000000e+00> : vector<48xf32>
    %292 = vector.multi_reduction <add>, %287, %cst_152 [1] : vector<48x32xf32> to vector<48xf32>
    %293 = vector.shape_cast %292 : vector<48xf32> to vector<48x1xf32>
    %cst_153 = arith.constant 3.200000e+01 : f32
    %294 = vector.broadcast %cst_153 : f32 to vector<48x1xf32>
    %295 = arith.divf %293, %294 : vector<48x1xf32>
    %296 = vector.broadcast %295 : vector<48x1xf32> to vector<48x32xf32>
    %297 = arith.subf %287, %296 : vector<48x32xf32>
    %298 = arith.mulf %297, %297 : vector<48x32xf32>
    %cst_154 = arith.constant dense<0.000000e+00> : vector<48xf32>
    %299 = vector.multi_reduction <add>, %298, %cst_154 [1] : vector<48x32xf32> to vector<48xf32>
    %300 = vector.shape_cast %299 : vector<48xf32> to vector<48x1xf32>
    %cst_155 = arith.constant 3.200000e+01 : f32
    %301 = vector.broadcast %cst_155 : f32 to vector<48x1xf32>
    %302 = arith.divf %300, %301 : vector<48x1xf32>
    %303 = vector.broadcast %295 : vector<48x1xf32> to vector<48x32xf32>
    %304 = arith.subf %287, %303 : vector<48x32xf32>
    %cst_156 = arith.constant 9.99999974E-6 : f32
    %305 = vector.broadcast %cst_156 : f32 to vector<48x1xf32>
    %306 = arith.addf %302, %305 : vector<48x1xf32>
    %307 = math.rsqrt %306 : vector<48x1xf32>
    %308 = vector.broadcast %307 : vector<48x1xf32> to vector<48x32xf32>
    %309 = arith.mulf %304, %308 : vector<48x32xf32>
    %310 = vector.broadcast %289 : vector<1x32xf32> to vector<48x32xf32>
    %311 = arith.mulf %309, %310 : vector<48x32xf32>
    %312 = vector.broadcast %291 : vector<1x32xf32> to vector<48x32xf32>
    %313 = arith.addf %311, %312 : vector<48x32xf32>
    %c1_157 = arith.constant 1 : index
    %c0_158 = arith.constant 0 : index
    %c0_159 = arith.constant 0 : index
    %314 = vector.load %arg12[%c1_157, %c0_158, %c0_159] : memref<2x32x128xf32, #tpu.memory_space<vmem>>, vector<1x32x128xf32>
    %315 = vector.shape_cast %314 : vector<1x32x128xf32> to vector<32x128xf32>
    %cst_160 = arith.constant dense<0.000000e+00> : vector<48x128xf32>
    %316 = tpu.matmul %313, %315, %cst_160 {dimension_numbers = #tpu.dot_dimension_numbers<[1], [0], [0], [1], [0, 0, 1, 1], [], []>} : vector<48x32xf32>, vector<32x128xf32>, vector<48x128xf32> -> vector<48x128xf32>
    %c1_161 = arith.constant 1 : index
    %c0_162 = arith.constant 0 : index
    %c0_163 = arith.constant 0 : index
    %317 = vector.load %arg13[%c1_161, %c0_162, %c0_163] : memref<2x1x128xf32, #tpu.memory_space<vmem>>, vector<1x1x128xf32>
    %318 = vector.shape_cast %317 : vector<1x1x128xf32> to vector<1x128xf32>
    %319 = vector.broadcast %318 : vector<1x128xf32> to vector<48x128xf32>
    %320 = arith.addf %316, %319 : vector<48x128xf32>
    %cst_164 = arith.constant 5.000000e-01 : f32
    %321 = vector.broadcast %cst_164 : f32 to vector<48x128xf32>
    %322 = arith.mulf %321, %320 : vector<48x128xf32>
    %cst_165 = arith.constant 1.41421354 : f32
    %323 = vector.broadcast %cst_165 : f32 to vector<48x128xf32>
    %324 = arith.divf %320, %323 : vector<48x128xf32>
    %325 = math.erf %324 : vector<48x128xf32>
    %cst_166 = arith.constant 1.000000e+00 : f32
    %326 = vector.broadcast %cst_166 : f32 to vector<48x128xf32>
    %327 = arith.addf %326, %325 : vector<48x128xf32>
    %328 = arith.mulf %322, %327 : vector<48x128xf32>
    %c1_167 = arith.constant 1 : index
    %c0_168 = arith.constant 0 : index
    %c0_169 = arith.constant 0 : index
    %329 = vector.load %arg14[%c1_167, %c0_168, %c0_169] : memref<2x128x32xf32, #tpu.memory_space<vmem>>, vector<1x128x32xf32>
    %330 = vector.shape_cast %329 : vector<1x128x32xf32> to vector<128x32xf32>
    %cst_170 = arith.constant dense<0.000000e+00> : vector<48x32xf32>
    %331 = tpu.matmul %328, %330, %cst_170 {dimension_numbers = #tpu.dot_dimension_numbers<[1], [0], [0], [1], [0, 0, 1, 1], [], []>} : vector<48x128xf32>, vector<128x32xf32>, vector<48x32xf32> -> vector<48x32xf32>
    %c1_171 = arith.constant 1 : index
    %c0_172 = arith.constant 0 : index
    %c0_173 = arith.constant 0 : index
    %332 = vector.load %arg15[%c1_171, %c0_172, %c0_173] : memref<2x1x32xf32, #tpu.memory_space<vmem>>, vector<1x1x32xf32>
    %333 = vector.shape_cast %332 : vector<1x1x32xf32> to vector<1x32xf32>
    %334 = vector.broadcast %333 : vector<1x32xf32> to vector<48x32xf32>
    %335 = arith.addf %331, %334 : vector<48x32xf32>
    %336 = arith.addf %287, %335 : vector<48x32xf32>
    %c0_174 = arith.constant 0 : index
    %c0_175 = arith.constant 0 : index
    %337 = vector.load %arg16[%c0_174, %c0_175] : memref<32x10xf32, #tpu.memory_space<vmem>>, vector<32x10xf32>
    %cst_176 = arith.constant dense<0.000000e+00> : vector<48x10xf32>
    %338 = tpu.matmul %336, %337, %cst_176 {dimension_numbers = #tpu.dot_dimension_numbers<[1], [0], [0], [1], [0, 0, 1, 1], [], []>} : vector<48x32xf32>, vector<32x10xf32>, vector<48x10xf32> -> vector<48x10xf32>
    %c0_177 = arith.constant 0 : index
    %c0_178 = arith.constant 0 : index
    %339 = vector.load %arg17[%c0_177, %c0_178] : memref<1x10xf32, #tpu.memory_space<vmem>>, vector<1x10xf32>
    %340 = vector.broadcast %339 : vector<1x10xf32> to vector<48x10xf32>
    %341 = arith.addf %338, %340 : vector<48x10xf32>
    %cst_179 = arith.constant dense<0xFF800000> : vector<48xf32>
    %342 = vector.multi_reduction <maximumf>, %341, %cst_179 [1] : vector<48x10xf32> to vector<48xf32>
    %343 = vector.shape_cast %342 : vector<48xf32> to vector<48x1xf32>
    %344 = vector.broadcast %343 : vector<48x1xf32> to vector<48x10xf32>
    %345 = arith.subf %341, %344 : vector<48x10xf32>
    %346 = math.exp %345 : vector<48x10xf32>
    %cst_180 = arith.constant dense<0.000000e+00> : vector<48xf32>
    %347 = vector.multi_reduction <add>, %346, %cst_180 [1] : vector<48x10xf32> to vector<48xf32>
    %348 = vector.shape_cast %347 : vector<48xf32> to vector<48x1xf32>
    %349 = vector.broadcast %348 : vector<48x1xf32> to vector<48x10xf32>
    %350 = arith.divf %346, %349 : vector<48x10xf32>
    %351 = vector.extract_strided_slice %350 {offsets = [16, 0], sizes = [1, 10], strides = [1, 1]} : vector<48x10xf32> to vector<1x10xf32>
    %c0_181 = arith.constant 0 : index
    %c0_182 = arith.constant 0 : index
    %352 = vector.load %arg18[%c0_181, %c0_182] : memref<2x10xf32, #tpu.memory_space<vmem>>, vector<1x10xf32>
    tpu.vector_store %arg18[%c0_181, %c0_182], %351 {strides = array<i32>} : memref<2x10xf32, #tpu.memory_space<vmem>>, vector<1x10xf32>,
    %353 = vector.extract_strided_slice %350 {offsets = [40, 0], sizes = [1, 10], strides = [1, 1]} : vector<48x10xf32> to vector<1x10xf32>
    %c1_183 = arith.constant 1 : index
    %c0_184 = arith.constant 0 : index
    %354 = vector.load %arg18[%c1_183, %c0_184] : memref<2x10xf32, #tpu.memory_space<vmem>>, vector<1x10xf32>
    tpu.vector_store %arg18[%c1_183, %c0_184], %353 {strides = array<i32>} : memref<2x10xf32, #tpu.memory_space<vmem>>, vector<1x10xf32>,
    return
  }
  func.func @transform_0(%arg0: i32) -> (i32, i32) {
    %c0_i32 = arith.constant 0 : i32
    %c0_i32_0 = arith.constant 0 : i32
    %c0_i32_1 = arith.constant 0 : i32
    return %c0_i32, %c0_i32_0 : i32, i32
  }
  func.func @transform_1(%arg0: i32) -> (i32, i32) {
    %c0_i32 = arith.constant 0 : i32
    %c0_i32_0 = arith.constant 0 : i32
    %c0_i32_1 = arith.constant 0 : i32
    return %c0_i32, %c0_i32_0 : i32, i32
  }
  func.func @transform_2(%arg0: i32) -> (i32, i32) {
    %c0_i32 = arith.constant 0 : i32
    %c0_i32_0 = arith.constant 0 : i32
    %c0_i32_1 = arith.constant 0 : i32
    return %c0_i32, %c0_i32_0 : i32, i32
  }
  func.func @transform_3(%arg0: i32) -> (i32, i32) {
    %c0_i32 = arith.constant 0 : i32
    %c0_i32_0 = arith.constant 0 : i32
    %c0_i32_1 = arith.constant 0 : i32
    return %c0_i32, %c0_i32_0 : i32, i32
  }
  func.func @transform_4(%arg0: i32) -> (i32, i32) {
    %c0_i32 = arith.constant 0 : i32
    %c0_i32_0 = arith.constant 0 : i32
    %c0_i32_1 = arith.constant 0 : i32
    return %c0_i32, %c0_i32_0 : i32, i32
  }
  func.func @transform_5(%arg0: i32) -> (i32, i32, i32) {
    %c0_i32 = arith.constant 0 : i32
    %c0_i32_0 = arith.constant 0 : i32
    %c0_i32_1 = arith.constant 0 : i32
    %c0_i32_2 = arith.constant 0 : i32
    return %c0_i32, %c0_i32_0, %c0_i32_1 : i32, i32, i32
  }
  func.func @transform_6(%arg0: i32) -> (i32, i32, i32) {
    %c0_i32 = arith.constant 0 : i32
    %c0_i32_0 = arith.constant 0 : i32
    %c0_i32_1 = arith.constant 0 : i32
    %c0_i32_2 = arith.constant 0 : i32
    return %c0_i32, %c0_i32_0, %c0_i32_1 : i32, i32, i32
  }
  func.func @transform_7(%arg0: i32) -> (i32, i32, i32) {
    %c0_i32 = arith.constant 0 : i32
    %c0_i32_0 = arith.constant 0 : i32
    %c0_i32_1 = arith.constant 0 : i32
    %c0_i32_2 = arith.constant 0 : i32
    return %c0_i32, %c0_i32_0, %c0_i32_1 : i32, i32, i32
  }
  func.func @transform_8(%arg0: i32) -> (i32, i32, i32) {
    %c0_i32 = arith.constant 0 : i32
    %c0_i32_0 = arith.constant 0 : i32
    %c0_i32_1 = arith.constant 0 : i32
    %c0_i32_2 = arith.constant 0 : i32
    return %c0_i32, %c0_i32_0, %c0_i32_1 : i32, i32, i32
  }
  func.func @transform_9(%arg0: i32) -> (i32, i32, i32) {
    %c0_i32 = arith.constant 0 : i32
    %c0_i32_0 = arith.constant 0 : i32
    %c0_i32_1 = arith.constant 0 : i32
    %c0_i32_2 = arith.constant 0 : i32
    return %c0_i32, %c0_i32_0, %c0_i32_1 : i32, i32, i32
  }
  func.func @transform_10(%arg0: i32) -> (i32, i32, i32) {
    %c0_i32 = arith.constant 0 : i32
    %c0_i32_0 = arith.constant 0 : i32
    %c0_i32_1 = arith.constant 0 : i32
    %c0_i32_2 = arith.constant 0 : i32
    return %c0_i32, %c0_i32_0, %c0_i32_1 : i32, i32, i32
  }
  func.func @transform_11(%arg0: i32) -> (i32, i32, i32) {
    %c0_i32 = arith.constant 0 : i32
    %c0_i32_0 = arith.constant 0 : i32
    %c0_i32_1 = arith.constant 0 : i32
    %c0_i32_2 = arith.constant 0 : i32
    return %c0_i32, %c0_i32_0, %c0_i32_1 : i32, i32, i32
  }
  func.func @transform_12(%arg0: i32) -> (i32, i32, i32) {
    %c0_i32 = arith.constant 0 : i32
    %c0_i32_0 = arith.constant 0 : i32
    %c0_i32_1 = arith.constant 0 : i32
    %c0_i32_2 = arith.constant 0 : i32
    return %c0_i32, %c0_i32_0, %c0_i32_1 : i32, i32, i32
  }
  func.func @transform_13(%arg0: i32) -> (i32, i32, i32) {
    %c0_i32 = arith.constant 0 : i32
    %c0_i32_0 = arith.constant 0 : i32
    %c0_i32_1 = arith.constant 0 : i32
    %c0_i32_2 = arith.constant 0 : i32
    return %c0_i32, %c0_i32_0, %c0_i32_1 : i32, i32, i32
  }
  func.func @transform_14(%arg0: i32) -> (i32, i32, i32) {
    %c0_i32 = arith.constant 0 : i32
    %c0_i32_0 = arith.constant 0 : i32
    %c0_i32_1 = arith.constant 0 : i32
    %c0_i32_2 = arith.constant 0 : i32
    return %c0_i32, %c0_i32_0, %c0_i32_1 : i32, i32, i32
  }
  func.func @transform_15(%arg0: i32) -> (i32, i32) {
    %c0_i32 = arith.constant 0 : i32
    %c0_i32_0 = arith.constant 0 : i32
    %c0_i32_1 = arith.constant 0 : i32
    return %c0_i32, %c0_i32_0 : i32, i32
  }
  func.func @transform_16(%arg0: i32) -> (i32, i32) {
    %c0_i32 = arith.constant 0 : i32
    %c0_i32_0 = arith.constant 0 : i32
    %c0_i32_1 = arith.constant 0 : i32
    return %c0_i32, %c0_i32_0 : i32, i32
  }
  func.func @transform_17(%arg0: i32) -> (i32, i32) {
    %c0_i32 = arith.constant 0 : i32
    %c0_i32_0 = arith.constant 0 : i32
    %c0_i32_1 = arith.constant 0 : i32
    return %c0_i32, %c0_i32_0 : i32, i32
  }
}

</mosaic_0001>

<llo_original>
// kernel: tpu_custom_call.1
$region0: #{tpu_custom_call.1}
  #allocation0 [shape = 'u32[]', space=smem, size = 0x4, offset = 0x4, fixed_abs, tag = 'smem constant byte address 0x4 - core index']
  #allocation1 [shape = 'u32[72,128]{1,0:T(1,128)}', space=vmem, size = 0x9000, scoped, tag = 'internal scratch']
  #allocation2 [shape = 'f32[48,32]{1,0:T(8,128)}', space=vmem, size = 0x6000, scoped, tag = 'scratch operand']
  #allocation3 [shape = 'f32[48,32]{1,0:T(8,128)}', space=vmem, size = 0x6000, scoped, tag = 'scratch operand']
  %s0 = inlined_call_operand.vmem [shape: f32[32,64], index: 0, kind: input, shape index: {}]
  %s1 = inlined_call_operand.vmem [shape: f32[1,32], index: 1, kind: input, shape index: {}]
  %s2 = inlined_call_operand.vmem [shape: f32[48,32], index: 2, kind: input, shape index: {}]
  %s3 = inlined_call_operand.vmem [shape: f32[64,32], index: 3, kind: input, shape index: {}]
  %s4 = inlined_call_operand.vmem [shape: f32[1,32], index: 4, kind: input, shape index: {}]
  %s5 = inlined_call_operand.vmem [shape: f32[2,1,32], index: 5, kind: input, shape index: {}]
  %s6 = inlined_call_operand.vmem [shape: f32[2,1,32], index: 6, kind: input, shape index: {}]
  %s7 = inlined_call_operand.vmem [shape: f32[2,32,96], index: 7, kind: input, shape index: {}]
  %s8 = inlined_call_operand.vmem [shape: f32[2,1,96], index: 8, kind: input, shape index: {}]
  %s9 = inlined_call_operand.vmem [shape: f32[2,1,32], index: 9, kind: input, shape index: {}]
  %s10 = inlined_call_operand.vmem [shape: f32[2,1,32], index: 10, kind: input, shape index: {}]
  %s11 = inlined_call_operand.vmem [shape: f32[2,32,128], index: 11, kind: input, shape index: {}]
  %s12 = inlined_call_operand.vmem [shape: f32[2,1,128], index: 12, kind: input, shape index: {}]
  %s13 = inlined_call_operand.vmem [shape: f32[2,128,32], index: 13, kind: input, shape index: {}]
  %s14 = inlined_call_operand.vmem [shape: f32[2,1,32], index: 14, kind: input, shape index: {}]
  %s15 = inlined_call_operand.vmem [shape: f32[32,10], index: 15, kind: input, shape index: {}]
  %s16 = inlined_call_operand.vmem [shape: f32[1,10], index: 16, kind: input, shape index: {}]
  %s17 = inlined_call_operand.hbm [shape: f32[2,10], index: 17, kind: output, shape index: {}]
  %s18 = sld [smem:[#allocation0]]
  $region78: #{tpu_custom_call.1} parent=0
    _
  %s20 = ssub.s32 1, %s18
  %s21 = scalar_select 0, %s20, %s18
  $region1: #{tpu_custom_call.1} parent=0
    #allocation4 [shape = 'u8[1024]{0}', space=vmem, size = 0x400, scoped, tag = 'output window, operand 0, single buffered']
    #allocation5 [shape = 's32[1]{0}', space=sflag, size = 0x4, scoped, tag = 'scoped memory for tpu_custom_call.1']
    %22 = vsyncpa [#allocation5], 0
    // Predicated region
    $region2: #{tpu_custom_call.1} parent=1 // pred_check
      _
    $region3: #{tpu_custom_call.1} parent=1 // pred_check_branch
      %24 = sbr.rel (0) target = $region5
    $region4: #{tpu_custom_call.1} parent=1 // pred_region
      _
    $region5: #{tpu_custom_call.1} parent=1 // pred_fallthru
      _
    // Predicated region
    $region6: #{tpu_custom_call.1} parent=1 // pred_check
      _
    $region7: #{tpu_custom_call.1} parent=1 // pred_check_branch
      %26 = sbr.rel (0) target = $region9
    $region8: #{tpu_custom_call.1} parent=1 // pred_region
      _
    $region9: #{tpu_custom_call.1} parent=1 // pred_fallthru
      _
    // Predicated region
    $region10: #{tpu_custom_call.1} parent=1 // pred_check
      _
    $region11: #{tpu_custom_call.1} parent=1 // pred_check_branch
      %28 = sbr.rel (0) target = $region13
    $region12: #{tpu_custom_call.1} parent=1 // pred_region
      _
    $region13: #{tpu_custom_call.1} parent=1 // pred_fallthru
      _
    // Predicated region
    $region14: #{tpu_custom_call.1} parent=1 // pred_check
      _
    $region15: #{tpu_custom_call.1} parent=1 // pred_check_branch
      %30 = sbr.rel (0) target = $region17
    $region16: #{tpu_custom_call.1} parent=1 // pred_region
      _
    $region17: #{tpu_custom_call.1} parent=1 // pred_fallthru
      _
    // Predicated region
    $region18: #{tpu_custom_call.1} parent=1 // pred_check
      _
    $region19: #{tpu_custom_call.1} parent=1 // pred_check_branch
      %32 = sbr.rel (0) target = $region21
    $region20: #{tpu_custom_call.1} parent=1 // pred_region
      _
    $region21: #{tpu_custom_call.1} parent=1 // pred_fallthru
      _
    // Predicated region
    $region22: #{tpu_custom_call.1} parent=1 // pred_check
      _
    $region23: #{tpu_custom_call.1} parent=1 // pred_check_branch
      %34 = sbr.rel (0) target = $region25
    $region24: #{tpu_custom_call.1} parent=1 // pred_region
      _
    $region25: #{tpu_custom_call.1} parent=1 // pred_fallthru
      _
    // Predicated region
    $region26: #{tpu_custom_call.1} parent=1 // pred_check
      _
    $region27: #{tpu_custom_call.1} parent=1 // pred_check_branch
      %36 = sbr.rel (0) target = $region29
    $region28: #{tpu_custom_call.1} parent=1 // pred_region
      _
    $region29: #{tpu_custom_call.1} parent=1 // pred_fallthru
      _
    // Predicated region
    $region30: #{tpu_custom_call.1} parent=1 // pred_check
      _
    $region31: #{tpu_custom_call.1} parent=1 // pred_check_branch
      %38 = sbr.rel (0) target = $region33
    $region32: #{tpu_custom_call.1} parent=1 // pred_region
      _
    $region33: #{tpu_custom_call.1} parent=1 // pred_fallthru
      _
    // Predicated region
    $region34: #{tpu_custom_call.1} parent=1 // pred_check
      _
    $region35: #{tpu_custom_call.1} parent=1 // pred_check_branch
      %40 = sbr.rel (0) target = $region37
    $region36: #{tpu_custom_call.1} parent=1 // pred_region
      _
    $region37: #{tpu_custom_call.1} parent=1 // pred_fallthru
      _
    // Predicated region
    $region38: #{tpu_custom_call.1} parent=1 // pred_check
      _
    $region39: #{tpu_custom_call.1} parent=1 // pred_check_branch
      %42 = sbr.rel (0) target = $region41
    $region40: #{tpu_custom_call.1} parent=1 // pred_region
      _
    $region41: #{tpu_custom_call.1} parent=1 // pred_fallthru
      _
    // Predicated region
    $region42: #{tpu_custom_call.1} parent=1 // pred_check
      _
    $region43: #{tpu_custom_call.1} parent=1 // pred_check_branch
      %44 = sbr.rel (0) target = $region45
    $region44: #{tpu_custom_call.1} parent=1 // pred_region
      _
    $region45: #{tpu_custom_call.1} parent=1 // pred_fallthru
      _
    // Predicated region
    $region46: #{tpu_custom_call.1} parent=1 // pred_check
      _
    $region47: #{tpu_custom_call.1} parent=1 // pred_check_branch
      %46 = sbr.rel (0) target = $region49
    $region48: #{tpu_custom_call.1} parent=1 // pred_region
      _
    $region49: #{tpu_custom_call.1} parent=1 // pred_fallthru
      _
    // Predicated region
    $region50: #{tpu_custom_call.1} parent=1 // pred_check
      _
    $region51: #{tpu_custom_call.1} parent=1 // pred_check_branch
      %48 = sbr.rel (0) target = $region53
    $region52: #{tpu_custom_call.1} parent=1 // pred_region
      _
    $region53: #{tpu_custom_call.1} parent=1 // pred_fallthru
      _
    // Predicated region
    $region54: #{tpu_custom_call.1} parent=1 // pred_check
      _
    $region55: #{tpu_custom_call.1} parent=1 // pred_check_branch
      %50 = sbr.rel (0) target = $region57
    $region56: #{tpu_custom_call.1} parent=1 // pred_region
      _
    $region57: #{tpu_custom_call.1} parent=1 // pred_fallthru
      _
    // Predicated region
    $region58: #{tpu_custom_call.1} parent=1 // pred_check
      _
    $region59: #{tpu_custom_call.1} parent=1 // pred_check_branch
      %52 = sbr.rel (0) target = $region61
    $region60: #{tpu_custom_call.1} parent=1 // pred_region
      _
    $region61: #{tpu_custom_call.1} parent=1 // pred_fallthru
      _
    // Predicated region
    $region62: #{tpu_custom_call.1} parent=1 // pred_check
      _
    $region63: #{tpu_custom_call.1} parent=1 // pred_check_branch
      %54 = sbr.rel (0) target = $region65
    $region64: #{tpu_custom_call.1} parent=1 // pred_region
      _
    $region65: #{tpu_custom_call.1} parent=1 // pred_fallthru
      _
    // Predicated region
    $region66: #{tpu_custom_call.1} parent=1 // pred_check
      _
    $region67: #{tpu_custom_call.1} parent=1 // pred_check_branch
      %56 = sbr.rel (0) target = $region69
    $region68: #{tpu_custom_call.1} parent=1 // pred_region
      _
    $region69: #{tpu_custom_call.1} parent=1 // pred_fallthru
      _
    %v57 = vld [vmem:[%s0] sm:$0xff]
    %v58 = vld [vmem:[%s0 + $0x8] sm:$0xff]
    %v59 = vld [vmem:[%s0 + $0x10] sm:$0xff]
    %v60 = vld [vmem:[%s0 + $0x18] sm:$0xff]
    %v61 = vld [vmem:[%s3] sm:$0xff]
    %v62 = vld [vmem:[%s3 + $0x8] sm:$0xff]
    %v63 = vld [vmem:[%s3 + $0x10] sm:$0xff]
    %v64 = vld [vmem:[%s3 + $0x18] sm:$0xff]
    %v65 = vld [vmem:[%s3 + $0x20] sm:$0xff]
    %v66 = vld [vmem:[%s3 + $0x28] sm:$0xff]
    %v67 = vld [vmem:[%s3 + $0x30] sm:$0xff]
    %v68 = vld [vmem:[%s3 + $0x38] sm:$0xff]
    %v69 = vld [vmem:[%s4] sm:$0x1]
    %v71 = vperm.slane %v69, 0
    %vm73 = vcmask 523264
    %v75 = vsel %vm73, %v57, 0
    %v78 = vsel %vm73, %v58, 0
    %v81 = vsel %vm73, %v59, 0
    %v84 = vsel %vm73, %v60, 0
    %86 = vmatpush.msra.mxu0 0.0
    %87 = vmatpush.msra.mxu0 0.0
    %88 = vmatpush.msra.mxu0 0.0
    %89 = vmatpush.msra.mxu0 0.0
    %90 = vmatpush.msra.mxu0 0.0
    %91 = vmatpush.msra.mxu0 0.0
    %92 = vmatpush.msra.mxu0 0.0
    %93 = vmatpush.msra.mxu0 0.0
    %94 = vmatpush.msra.mxu0 %v68
    %95 = vmatpush.msra.mxu0 %v67
    %96 = vmatpush.msra.mxu0 %v66
    %97 = vmatpush.msra.mxu0 %v65
    %98 = vmatpush.msra.mxu0 %v64
    %99 = vmatpush.msra.mxu0 %v63
    %100 = vmatpush.msra.mxu0 %v62
    %101 = vmatpush.msra.mxu0 %v61
    %102 = vmatmul.f32.gmra.mxu0 %v75
    %v103 = vpop.f32.mrf.mxu0
    %v104 = vadd.f32 %v71, %v103
    %105 = vmatmul.f32.gmra.mxu0 %v78
    %v106 = vpop.f32.mrf.mxu0
    %v107 = vadd.f32 %v71, %v106
    %108 = vmatmul.f32.gmra.mxu0 %v81
    %v109 = vpop.f32.mrf.mxu0
    %v110 = vadd.f32 %v71, %v109
    %111 = vmatmul.f32.gmra.mxu0 %v84
    %v112 = vpop.f32.mrf.mxu0
    %v113 = vadd.f32 %v71, %v112
    %114 = vdwg.mxu0
    %vm115 = vcmask 261120
    %116 = vst.msk [vmem:[#allocation2] sm:$0xff] %vm115, 0.0
    %117 = vst.msk [vmem:[#allocation2 + $0x8] sm:$0xff] %vm115, 0.0
    %118 = vst.msk [vmem:[#allocation2 + $0x10] sm:$0xff] %vm115, 0.0
    %119 = vst.msk [vmem:[#allocation2 + $0x18] sm:$0xff] %vm115, 0.0
    %120 = vst.msk [vmem:[#allocation2 + $0x20] sm:$0xff] %vm115, 0.0
    %121 = vst.msk [vmem:[#allocation2 + $0x28] sm:$0xff] %vm115, 0.0
    %122 = vst.msk [vmem:[#allocation2] sm:$0xff] %vm115, %v104
    %123 = vst.msk [vmem:[#allocation2 + $0x8] sm:$0xff] %vm115, %v107
    %v124 = vld [vmem:[%s1] sm:$0x1]
    %vm125 = vcmask 253952
    %126 = vst.msk [vmem:[#allocation2 + $0x10] sm:$0x1] %vm125, %v124
    %127 = vst.msk [vmem:[#allocation2 + $0x18] sm:$0xff] %vm115, %v110
    %128 = vst.msk [vmem:[#allocation2 + $0x20] sm:$0xff] %vm115, %v113
    %v129 = vld [vmem:[%s1] sm:$0x1]
    %130 = vst.msk [vmem:[#allocation2 + $0x28] sm:$0x1] %vm125, %v129
    %v131 = vld [vmem:[#allocation2] sm:$0xff]
    %v132 = vld [vmem:[#allocation2 + $0x8] sm:$0xff]
    %v133 = vld [vmem:[#allocation2 + $0x10] sm:$0xff]
    %v134 = vld [vmem:[#allocation2 + $0x18] sm:$0xff]
    %v135 = vld [vmem:[#allocation2 + $0x20] sm:$0xff]
    %v136 = vld [vmem:[#allocation2 + $0x28] sm:$0xff]
    %v137 = vld [vmem:[%s2] sm:$0xff]
    %v138 = vld [vmem:[%s2 + $0x8] sm:$0xff]
    %v139 = vld [vmem:[%s2 + $0x10] sm:$0xff]
    %v140 = vld [vmem:[%s2 + $0x18] sm:$0xff]
    %v141 = vld [vmem:[%s2 + $0x20] sm:$0xff]
    %v142 = vld [vmem:[%s2 + $0x28] sm:$0xff]
    %v143 = vmul.f32 %v131, %v137
    %v144 = vmul.f32 %v132, %v138
    %v145 = vmul.f32 %v133, %v139
    %v146 = vmul.f32 %v134, %v140
    %v147 = vmul.f32 %v135, %v141
    %v148 = vmul.f32 %v136, %v142
    %v149 = vlaneseq
    %v150 = vand.u32 %v149, 127
    %vm151 = vcmp.lt.s32.totalorder %v150, 17
    %v152 = vsel %vm151, 0.0, -1e+09
    %v153 = vld [vmem:[%s5] sm:$0x1]
    %v154 = vld [vmem:[%s6] sm:$0x1]
    %v155 = vsel %vm115, %v143, 0.0
    %156 = vadd.xlane.f32.xlu0 %v155
    %v157 = vpop.xlane.xlu0 %156
    %v158 = vsel %vm115, %v144, 0.0
    %159 = vadd.xlane.f32.xlu0 %v158
    %v160 = vpop.xlane.xlu0 %159
    %v161 = vsel %vm115, %v145, 0.0
    %162 = vadd.xlane.f32.xlu0 %v161
    %v163 = vpop.xlane.xlu0 %162
    %v164 = vsel %vm115, %v146, 0.0
    %165 = vadd.xlane.f32.xlu0 %v164
    %v166 = vpop.xlane.xlu0 %165
    %v167 = vsel %vm115, %v147, 0.0
    %168 = vadd.xlane.f32.xlu0 %v167
    %v169 = vpop.xlane.xlu0 %168
    %v170 = vsel %vm115, %v148, 0.0
    %171 = vadd.xlane.f32.xlu0 %v170
    %v172 = vpop.xlane.xlu0 %171
    %v173 = vrcp.pop 32.0
    %v174 = vmul.f32 32.0, %v173
    %v175 = vsub.f32 1.0, %v174
    %v176 = vmul.f32 %v173, %v175
    %v177 = vadd.f32 %v173, %v176
    %vm178 = vweird.f32 %v173
    %v179 = vsel %vm178, %v173, %v177
    %v180 = vmul.f32 %v157, %v179
    %v181 = vmul.f32 %v160, %v179
    %v182 = vmul.f32 %v163, %v179
    %v183 = vmul.f32 %v166, %v179
    %v184 = vmul.f32 %v169, %v179
    %v185 = vmul.f32 %v172, %v179
    %v186 = vsub.f32 %v143, %v180
    %v187 = vsub.f32 %v144, %v181
    %v188 = vsub.f32 %v145, %v182
    %v189 = vsub.f32 %v146, %v183
    %v190 = vsub.f32 %v147, %v184
    %v191 = vsub.f32 %v148, %v185
    %v192 = vmul.f32 %v186, %v186
    %v193 = vmul.f32 %v187, %v187
    %v194 = vmul.f32 %v188, %v188
    %v195 = vmul.f32 %v189, %v189
    %v196 = vmul.f32 %v190, %v190
    %v197 = vmul.f32 %v191, %v191
    %v198 = vsel %vm115, %v192, 0.0
    %199 = vadd.xlane.f32.xlu0 %v198
    %v200 = vpop.xlane.xlu0 %199
    %v201 = vsel %vm115, %v193, 0.0
    %202 = vadd.xlane.f32.xlu0 %v201
    %v203 = vpop.xlane.xlu0 %202
    %v204 = vsel %vm115, %v194, 0.0
    %205 = vadd.xlane.f32.xlu0 %v204
    %v206 = vpop.xlane.xlu0 %205
    %v207 = vsel %vm115, %v195, 0.0
    %208 = vadd.xlane.f32.xlu0 %v207
    %v209 = vpop.xlane.xlu0 %208
    %v210 = vsel %vm115, %v196, 0.0
    %211 = vadd.xlane.f32.xlu0 %v210
    %v212 = vpop.xlane.xlu0 %211
    %v213 = vsel %vm115, %v197, 0.0
    %214 = vadd.xlane.f32.xlu0 %v213
    %v215 = vpop.xlane.xlu0 %214
    %v216 = vmul.f32 %v200, %v179
    %v217 = vmul.f32 %v203, %v179
    %v218 = vmul.f32 %v206, %v179
    %v219 = vmul.f32 %v209, %v179
    %v220 = vmul.f32 %v212, %v179
    %v221 = vmul.f32 %v215, %v179
    %v222 = vadd.f32 %v216, 1e-05
    %v223 = vadd.f32 %v217, 1e-05
    %v224 = vadd.f32 %v218, 1e-05
    %v225 = vadd.f32 %v219, 1e-05
    %v226 = vadd.f32 %v220, 1e-05
    %v227 = vadd.f32 %v221, 1e-05
    %v228 = vrsqrt.pop %v222
    %v229 = vmul.f32 %v228, %v222
    %v230 = vmul.f32 %v229, %v228
    %v231 = vmul.f32 0.5, %v230
    %v232 = vsub.f32 1.5, %v231
    %v233 = vmul.f32 %v228, %v232
    %vm234 = vweird.f32 %v222
    %vm235 = vweird.f32 %v228
    %vm236 = vmor %vm234, %vm235
    %v237 = vsel %vm236, %v228, %v233
    %v238 = vrsqrt.pop %v223
    %v239 = vmul.f32 %v238, %v223
    %v240 = vmul.f32 %v239, %v238
    %v241 = vmul.f32 0.5, %v240
    %v242 = vsub.f32 1.5, %v241
    %v243 = vmul.f32 %v238, %v242
    %vm244 = vweird.f32 %v223
    %vm245 = vweird.f32 %v238
    %vm246 = vmor %vm244, %vm245
    %v247 = vsel %vm246, %v238, %v243
    %v248 = vrsqrt.pop %v224
    %v249 = vmul.f32 %v248, %v224
    %v250 = vmul.f32 %v249, %v248
    %v251 = vmul.f32 0.5, %v250
    %v252 = vsub.f32 1.5, %v251
    %v253 = vmul.f32 %v248, %v252
    %vm254 = vweird.f32 %v224
    %vm255 = vweird.f32 %v248
    %vm256 = vmor %vm254, %vm255
    %v257 = vsel %vm256, %v248, %v253
    %v258 = vrsqrt.pop %v225
    %v259 = vmul.f32 %v258, %v225
    %v260 = vmul.f32 %v259, %v258
    %v261 = vmul.f32 0.5, %v260
    %v262 = vsub.f32 1.5, %v261
    %v263 = vmul.f32 %v258, %v262
    %vm264 = vweird.f32 %v225
    %vm265 = vweird.f32 %v258
    %vm266 = vmor %vm264, %vm265
    %v267 = vsel %vm266, %v258, %v263
    %v268 = vrsqrt.pop %v226
    %v269 = vmul.f32 %v268, %v226
    %v270 = vmul.f32 %v269, %v268
    %v271 = vmul.f32 0.5, %v270
    %v272 = vsub.f32 1.5, %v271
    %v273 = vmul.f32 %v268, %v272
    %vm274 = vweird.f32 %v226
    %vm275 = vweird.f32 %v268
    %vm276 = vmor %vm274, %vm275
    %v277 = vsel %vm276, %v268, %v273
    %v278 = vrsqrt.pop %v227
    %v279 = vmul.f32 %v278, %v227
    %v280 = vmul.f32 %v279, %v278
    %v281 = vmul.f32 0.5, %v280
    %v282 = vsub.f32 1.5, %v281
    %v283 = vmul.f32 %v278, %v282
    %vm284 = vweird.f32 %v227
    %vm285 = vweird.f32 %v278
    %vm286 = vmor %vm284, %vm285
    %v287 = vsel %vm286, %v278, %v283
    %v288 = vmul.f32 %v186, %v237
    %v289 = vmul.f32 %v187, %v247
    %v290 = vmul.f32 %v188, %v257
    %v291 = vmul.f32 %v189, %v267
    %v292 = vmul.f32 %v190, %v277
    %v293 = vmul.f32 %v191, %v287
    %v295 = vperm.slane %v153, 0
    %v297 = vmul.f32 %v288, %v295
    %v298 = vmul.f32 %v289, %v295
    %v299 = vmul.f32 %v290, %v295
    %v300 = vmul.f32 %v291, %v295
    %v301 = vmul.f32 %v292, %v295
    %v302 = vmul.f32 %v293, %v295
    %v304 = vperm.slane %v154, 0
    %v306 = vadd.f32 %v297, %v304
    %v307 = vadd.f32 %v298, %v304
    %v308 = vadd.f32 %v299, %v304
    %v309 = vadd.f32 %v300, %v304
    %v310 = vadd.f32 %v301, %v304
    %v311 = vadd.f32 %v302, %v304
    %v312 = vld [vmem:[%s7] sm:$0xff]
    %v313 = vld [vmem:[%s7 + $0x8] sm:$0xff]
    %v314 = vld [vmem:[%s7 + $0x10] sm:$0xff]
    %v315 = vld [vmem:[%s7 + $0x18] sm:$0xff]
    %v316 = vld [vmem:[%s8] sm:$0x1]
    %v318 = vperm.slane %v316, 0
    %v321 = vsel %vm115, %v306, 0
    %v324 = vsel %vm115, %v307, 0
    %v327 = vsel %vm115, %v308, 0
    %v330 = vsel %vm115, %v309, 0
    %v333 = vsel %vm115, %v310, 0
    %v336 = vsel %vm115, %v311, 0
    %338 = vmatpush.msra.mxu0 0.0
    %339 = vmatpush.msra.mxu0 0.0
    %340 = vmatpush.msra.mxu0 0.0
    %341 = vmatpush.msra.mxu0 0.0
    %342 = vmatpush.msra.mxu0 0.0
    %343 = vmatpush.msra.mxu0 0.0
    %344 = vmatpush.msra.mxu0 0.0
    %345 = vmatpush.msra.mxu0 0.0
    %346 = vmatpush.msra.mxu0 0.0
    %347 = vmatpush.msra.mxu0 0.0
    %348 = vmatpush.msra.mxu0 0.0
    %349 = vmatpush.msra.mxu0 0.0
    %350 = vmatpush.msra.mxu0 %v315
    %351 = vmatpush.msra.mxu0 %v314
    %352 = vmatpush.msra.mxu0 %v313
    %353 = vmatpush.msra.mxu0 %v312
    %354 = vmatmul.f32.gmra.mxu0 %v321
    %v355 = vpop.f32.mrf.mxu0
    %v356 = vadd.f32 %v318, %v355
    %357 = vmatmul.f32.gmra.mxu0 %v324
    %v358 = vpop.f32.mrf.mxu0
    %v359 = vadd.f32 %v318, %v358
    %360 = vmatmul.f32.gmra.mxu0 %v327
    %v361 = vpop.f32.mrf.mxu0
    %v362 = vadd.f32 %v318, %v361
    %363 = vmatmul.f32.gmra.mxu0 %v330
    %v364 = vpop.f32.mrf.mxu0
    %v365 = vadd.f32 %v318, %v364
    %366 = vmatmul.f32.gmra.mxu0 %v333
    %v367 = vpop.f32.mrf.mxu0
    %v368 = vadd.f32 %v318, %v367
    %369 = vmatmul.f32.gmra.mxu0 %v336
    %v370 = vpop.f32.mrf.mxu0
    %v371 = vadd.f32 %v318, %v370
    %372 = vdwg.mxu0
    %376 = vrot.lane.b32.xlu0 %v356, 96
    %v377 = vpop.permute.xlu0 %376
    %378 = vrot.lane.b32.xlu0 %v359, 96
    %v379 = vpop.permute.xlu0 %378
    %380 = vrot.lane.b32.xlu0 %v362, 96
    %v381 = vpop.permute.xlu0 %380
    %vm382 = vcmask 130048
    %v383 = vsel %vm382, %v356, 0
    %v385 = vsel %vm382, %v359, 0
    %v387 = vsel %vm382, %v362, 0
    %v389 = vsel %vm382, %v377, 0
    %v391 = vsel %vm382, %v379, 0
    %v393 = vsel %vm382, %v381, 0
    %395 = vmatpush.xpose.msra.mxu0 0.0
    %396 = vmatpush.xpose.msra.mxu0 0.0
    %397 = vmatpush.xpose.msra.mxu0 0.0
    %398 = vmatpush.xpose.msra.mxu0 0.0
    %399 = vmatpush.xpose.msra.mxu0 0.0
    %400 = vmatpush.xpose.msra.mxu0 0.0
    %401 = vmatpush.xpose.msra.mxu0 0.0
    %402 = vmatpush.xpose.msra.mxu0 0.0
    %403 = vmatpush.xpose.msra.mxu0 0.0
    %404 = vmatpush.xpose.msra.mxu0 0.0
    %405 = vmatpush.xpose.msra.mxu0 0.0
    %406 = vmatpush.xpose.msra.mxu0 0.0
    %407 = vmatpush.xpose.msra.mxu0 0.0
    %408 = vmatpush.xpose.msra.mxu0 %v393
    %409 = vmatpush.xpose.msra.mxu0 %v391
    %410 = vmatpush.xpose.msra.mxu0 %v389
    %411 = vmatmul.f32.gmra.mxu0 %v383
    %v412 = vpop.f32.mrf.mxu0
    %v413 = vadd.f32 0.0, %v412
    %414 = vmatmul.f32.gmra.mxu0 %v385
    %v415 = vpop.f32.mrf.mxu0
    %v416 = vadd.f32 0.0, %v415
    %417 = vmatmul.f32.gmra.mxu0 %v387
    %v418 = vpop.f32.mrf.mxu0
    %v419 = vadd.f32 0.0, %v418
    %420 = vdwg.mxu0
    %v421 = vmul.f32 %v413, 0.25
    %v422 = vmul.f32 %v416, 0.25
    %v423 = vmul.f32 %v419, 0.25
    %v424 = vadd.f32 %v421, %v152
    %v425 = vadd.f32 %v422, %v152
    %v426 = vadd.f32 %v423, %v152
    %vm427 = vcmask 195584
    %v428 = vsel %vm427, %v424, -inf
    %429 = vmax.xlane.f32.xlu0 %v428
    %v430 = vpop.xlane.xlu0 %429
    %v431 = vsel %vm427, %v425, -inf
    %432 = vmax.xlane.f32.xlu0 %v431
    %v433 = vpop.xlane.xlu0 %432
    %v434 = vsel %vm427, %v426, -inf
    %435 = vmax.xlane.f32.xlu0 %v434
    %v436 = vpop.xlane.xlu0 %435
    %v437 = vsub.f32 %v424, %v430
    %v438 = vsub.f32 %v425, %v433
    %v439 = vsub.f32 %v426, %v436
    %v440 = vmul.f32 %v437, 1.442695
    %v441 = vpow.pop %v440
    %v442 = vmul.f32 %v438, 1.442695
    %v443 = vpow.pop %v442
    %v444 = vmul.f32 %v439, 1.442695
    %v445 = vpow.pop %v444
    %v446 = vsel %vm427, %v441, 0.0
    %447 = vadd.xlane.f32.xlu0 %v446
    %v448 = vpop.xlane.xlu0 %447
    %v449 = vsel %vm427, %v443, 0.0
    %450 = vadd.xlane.f32.xlu0 %v449
    %v451 = vpop.xlane.xlu0 %450
    %v452 = vsel %vm427, %v445, 0.0
    %453 = vadd.xlane.f32.xlu0 %v452
    %v454 = vpop.xlane.xlu0 %453
    %v455 = vrcp.pop %v448
    %v456 = vmul.f32 %v448, %v455
    %v457 = vsub.f32 1.0, %v456
    %v458 = vmul.f32 %v455, %v457
    %v459 = vadd.f32 %v455, %v458
    %vm460 = vweird.f32 %v448
    %vm461 = vweird.f32 %v455
    %vm462 = vmor %vm460, %vm461
    %v463 = vsel %vm462, %v455, %v459
    %v464 = vand.u32 2147483647, %v448
    %vm465 = vcmp.eq.f32.partialorder %v464, 8.507059e+37
    %v466 = vand.u32 %v448, 2147483648
    %v467 = vor.u32 1.1754944e-38, %v466
    %v468 = vsel %vm465, %v467, %v463
    %v469 = vmul.f32 %v441, %v468
    %v470 = vrcp.pop %v451
    %v471 = vmul.f32 %v451, %v470
    %v472 = vsub.f32 1.0, %v471
    %v473 = vmul.f32 %v470, %v472
    %v474 = vadd.f32 %v470, %v473
    %vm475 = vweird.f32 %v451
    %vm476 = vweird.f32 %v470
    %vm477 = vmor %vm475, %vm476
    %v478 = vsel %vm477, %v470, %v474
    %v479 = vand.u32 2147483647, %v451
    %vm480 = vcmp.eq.f32.partialorder %v479, 8.507059e+37
    %v481 = vand.u32 %v451, 2147483648
    %v482 = vor.u32 1.1754944e-38, %v481
    %v483 = vsel %vm480, %v482, %v478
    %v484 = vmul.f32 %v443, %v483
    %v485 = vrcp.pop %v454
    %v486 = vmul.f32 %v454, %v485
    %v487 = vsub.f32 1.0, %v486
    %v488 = vmul.f32 %v485, %v487
    %v489 = vadd.f32 %v485, %v488
    %vm490 = vweird.f32 %v454
    %vm491 = vweird.f32 %v485
    %vm492 = vmor %vm490, %vm491
    %v493 = vsel %vm492, %v485, %v489
    %v494 = vand.u32 2147483647, %v454
    %vm495 = vcmp.eq.f32.partialorder %v494, 8.507059e+37
    %v496 = vand.u32 %v454, 2147483648
    %v497 = vor.u32 1.1754944e-38, %v496
    %v498 = vsel %vm495, %v497, %v493
    %v499 = vmul.f32 %v445, %v498
    %500 = vrot.lane.b32.xlu0 %v356, 64
    %v501 = vpop.permute.xlu0 %500
    %502 = vrot.lane.b32.xlu0 %v359, 64
    %v503 = vpop.permute.xlu0 %502
    %504 = vrot.lane.b32.xlu0 %v362, 64
    %v505 = vpop.permute.xlu0 %504
    %v510 = vsel %vm427, %v469, 0
    %v513 = vsel %vm427, %v484, 0
    %v516 = vsel %vm427, %v499, 0
    %518 = vmatpush.msra.mxu0 0.0
    %519 = vmatpush.msra.mxu0 0.0
    %520 = vmatpush.msra.mxu0 0.0
    %521 = vmatpush.msra.mxu0 0.0
    %522 = vmatpush.msra.mxu0 0.0
    %523 = vmatpush.msra.mxu0 0.0
    %524 = vmatpush.msra.mxu0 0.0
    %525 = vmatpush.msra.mxu0 0.0
    %526 = vmatpush.msra.mxu0 0.0
    %527 = vmatpush.msra.mxu0 0.0
    %528 = vmatpush.msra.mxu0 0.0
    %529 = vmatpush.msra.mxu0 0.0
    %530 = vmatpush.msra.mxu0 0.0
    %531 = vmatpush.msra.mxu0 %v505
    %532 = vmatpush.msra.mxu0 %v503
    %533 = vmatpush.msra.mxu0 %v501
    %534 = vmatmul.f32.gmra.mxu0 %v510
    %v535 = vpop.f32.mrf.mxu0
    %v536 = vadd.f32 0.0, %v535
    %537 = vmatmul.f32.gmra.mxu0 %v513
    %v538 = vpop.f32.mrf.mxu0
    %v539 = vadd.f32 0.0, %v538
    %540 = vmatmul.f32.gmra.mxu0 %v516
    %v541 = vpop.f32.mrf.mxu0
    %v542 = vadd.f32 0.0, %v541
    %543 = vdwg.mxu0
    %544 = vst.msk [vmem:[#allocation3] sm:$0xff] %vm382, %v536
    %545 = vst.msk [vmem:[#allocation3 + $0x8] sm:$0xff] %vm382, %v539
    %546 = vst.msk [vmem:[#allocation3 + $0x10] sm:$0xff] %vm382, %v542
    %547 = vrot.lane.b32.xlu0 %v356, 112
    %v548 = vpop.permute.xlu0 %547
    %549 = vrot.lane.b32.xlu0 %v359, 112
    %v550 = vpop.permute.xlu0 %549
    %551 = vrot.lane.b32.xlu0 %v362, 112
    %v552 = vpop.permute.xlu0 %551
    %553 = vrot.lane.b32.xlu0 %v356, 80
    %v554 = vpop.permute.xlu0 %553
    %555 = vrot.lane.b32.xlu0 %v359, 80
    %v556 = vpop.permute.xlu0 %555
    %557 = vrot.lane.b32.xlu0 %v362, 80
    %v558 = vpop.permute.xlu0 %557
    %v559 = vsel %vm382, %v548, 0
    %v561 = vsel %vm382, %v550, 0
    %v563 = vsel %vm382, %v552, 0
    %v565 = vsel %vm382, %v554, 0
    %v567 = vsel %vm382, %v556, 0
    %v569 = vsel %vm382, %v558, 0
    %571 = vmatpush.xpose.msra.mxu0 0.0
    %572 = vmatpush.xpose.msra.mxu0 0.0
    %573 = vmatpush.xpose.msra.mxu0 0.0
    %574 = vmatpush.xpose.msra.mxu0 0.0
    %575 = vmatpush.xpose.msra.mxu0 0.0
    %576 = vmatpush.xpose.msra.mxu0 0.0
    %577 = vmatpush.xpose.msra.mxu0 0.0
    %578 = vmatpush.xpose.msra.mxu0 0.0
    %579 = vmatpush.xpose.msra.mxu0 0.0
    %580 = vmatpush.xpose.msra.mxu0 0.0
    %581 = vmatpush.xpose.msra.mxu0 0.0
    %582 = vmatpush.xpose.msra.mxu0 0.0
    %583 = vmatpush.xpose.msra.mxu0 0.0
    %584 = vmatpush.xpose.msra.mxu0 %v569
    %585 = vmatpush.xpose.msra.mxu0 %v567
    %586 = vmatpush.xpose.msra.mxu0 %v565
    %587 = vmatmul.f32.gmra.mxu0 %v559
    %v588 = vpop.f32.mrf.mxu0
    %v589 = vadd.f32 0.0, %v588
    %590 = vmatmul.f32.gmra.mxu0 %v561
    %v591 = vpop.f32.mrf.mxu0
    %v592 = vadd.f32 0.0, %v591
    %593 = vmatmul.f32.gmra.mxu0 %v563
    %v594 = vpop.f32.mrf.mxu0
    %v595 = vadd.f32 0.0, %v594
    %596 = vdwg.mxu0
    %v597 = vmul.f32 %v589, 0.25
    %v598 = vmul.f32 %v592, 0.25
    %v599 = vmul.f32 %v595, 0.25
    %v600 = vadd.f32 %v597, %v152
    %v601 = vadd.f32 %v598, %v152
    %v602 = vadd.f32 %v599, %v152
    %v603 = vsel %vm427, %v600, -inf
    %604 = vmax.xlane.f32.xlu0 %v603
    %v605 = vpop.xlane.xlu0 %604
    %v606 = vsel %vm427, %v601, -inf
    %607 = vmax.xlane.f32.xlu0 %v606
    %v608 = vpop.xlane.xlu0 %607
    %v609 = vsel %vm427, %v602, -inf
    %610 = vmax.xlane.f32.xlu0 %v609
    %v611 = vpop.xlane.xlu0 %610
    %v612 = vsub.f32 %v600, %v605
    %v613 = vsub.f32 %v601, %v608
    %v614 = vsub.f32 %v602, %v611
    %v615 = vmul.f32 %v612, 1.442695
    %v616 = vpow.pop %v615
    %v617 = vmul.f32 %v613, 1.442695
    %v618 = vpow.pop %v617
    %v619 = vmul.f32 %v614, 1.442695
    %v620 = vpow.pop %v619
    %v621 = vsel %vm427, %v616, 0.0
    %622 = vadd.xlane.f32.xlu0 %v621
    %v623 = vpop.xlane.xlu0 %622
    %v624 = vsel %vm427, %v618, 0.0
    %625 = vadd.xlane.f32.xlu0 %v624
    %v626 = vpop.xlane.xlu0 %625
    %v627 = vsel %vm427, %v620, 0.0
    %628 = vadd.xlane.f32.xlu0 %v627
    %v629 = vpop.xlane.xlu0 %628
    %v630 = vrcp.pop %v623
    %v631 = vmul.f32 %v623, %v630
    %v632 = vsub.f32 1.0, %v631
    %v633 = vmul.f32 %v630, %v632
    %v634 = vadd.f32 %v630, %v633
    %vm635 = vweird.f32 %v623
    %vm636 = vweird.f32 %v630
    %vm637 = vmor %vm635, %vm636
    %v638 = vsel %vm637, %v630, %v634
    %v639 = vand.u32 2147483647, %v623
    %vm640 = vcmp.eq.f32.partialorder %v639, 8.507059e+37
    %v641 = vand.u32 %v623, 2147483648
    %v642 = vor.u32 1.1754944e-38, %v641
    %v643 = vsel %vm640, %v642, %v638
    %v644 = vmul.f32 %v616, %v643
    %v645 = vrcp.pop %v626
    %v646 = vmul.f32 %v626, %v645
    %v647 = vsub.f32 1.0, %v646
    %v648 = vmul.f32 %v645, %v647
    %v649 = vadd.f32 %v645, %v648
    %vm650 = vweird.f32 %v626
    %vm651 = vweird.f32 %v645
    %vm652 = vmor %vm650, %vm651
    %v653 = vsel %vm652, %v645, %v649
    %v654 = vand.u32 2147483647, %v626
    %vm655 = vcmp.eq.f32.partialorder %v654, 8.507059e+37
    %v656 = vand.u32 %v626, 2147483648
    %v657 = vor.u32 1.1754944e-38, %v656
    %v658 = vsel %vm655, %v657, %v653
    %v659 = vmul.f32 %v618, %v658
    %v660 = vrcp.pop %v629
    %v661 = vmul.f32 %v629, %v660
    %v662 = vsub.f32 1.0, %v661
    %v663 = vmul.f32 %v660, %v662
    %v664 = vadd.f32 %v660, %v663
    %vm665 = vweird.f32 %v629
    %vm666 = vweird.f32 %v660
    %vm667 = vmor %vm665, %vm666
    %v668 = vsel %vm667, %v660, %v664
    %v669 = vand.u32 2147483647, %v629
    %vm670 = vcmp.eq.f32.partialorder %v669, 8.507059e+37
    %v671 = vand.u32 %v629, 2147483648
    %v672 = vor.u32 1.1754944e-38, %v671
    %v673 = vsel %vm670, %v672, %v668
    %v674 = vmul.f32 %v620, %v673
    %675 = vrot.lane.b32.xlu0 %v356, 48
    %v676 = vpop.permute.xlu0 %675
    %677 = vrot.lane.b32.xlu0 %v359, 48
    %v678 = vpop.permute.xlu0 %677
    %679 = vrot.lane.b32.xlu0 %v362, 48
    %v680 = vpop.permute.xlu0 %679
    %v685 = vsel %vm427, %v644, 0
    %v688 = vsel %vm427, %v659, 0
    %v691 = vsel %vm427, %v674, 0
    %693 = vmatpush.msra.mxu0 0.0
    %694 = vmatpush.msra.mxu0 0.0
    %695 = vmatpush.msra.mxu0 0.0
    %696 = vmatpush.msra.mxu0 0.0
    %697 = vmatpush.msra.mxu0 0.0
    %698 = vmatpush.msra.mxu0 0.0
    %699 = vmatpush.msra.mxu0 0.0
    %700 = vmatpush.msra.mxu0 0.0
    %701 = vmatpush.msra.mxu0 0.0
    %702 = vmatpush.msra.mxu0 0.0
    %703 = vmatpush.msra.mxu0 0.0
    %704 = vmatpush.msra.mxu0 0.0
    %705 = vmatpush.msra.mxu0 0.0
    %706 = vmatpush.msra.mxu0 %v680
    %707 = vmatpush.msra.mxu0 %v678
    %708 = vmatpush.msra.mxu0 %v676
    %709 = vmatmul.f32.gmra.mxu0 %v685
    %v710 = vpop.f32.mrf.mxu0
    %v711 = vadd.f32 0.0, %v710
    %712 = vmatmul.f32.gmra.mxu0 %v688
    %v713 = vpop.f32.mrf.mxu0
    %v714 = vadd.f32 0.0, %v713
    %715 = vmatmul.f32.gmra.mxu0 %v691
    %v716 = vpop.f32.mrf.mxu0
    %v717 = vadd.f32 0.0, %v716
    %718 = vdwg.mxu0
    %722 = vrot.lane.b32.xlu0 %v711, 16
    %v723 = vpop.permute.xlu0 %722
    %724 = vrot.lane.b32.xlu0 %v714, 16
    %v725 = vpop.permute.xlu0 %724
    %726 = vrot.lane.b32.xlu0 %v717, 16
    %v727 = vpop.permute.xlu0 %726
    %vm731 = vcmask 261248
    %732 = vst.msk [vmem:[#allocation3] sm:$0xff] %vm731, %v723
    %733 = vst.msk [vmem:[#allocation3 + $0x8] sm:$0xff] %vm731, %v725
    %734 = vst.msk [vmem:[#allocation3 + $0x10] sm:$0xff] %vm731, %v727
    %738 = vrot.lane.b32.xlu0 %v365, 96
    %v739 = vpop.permute.xlu0 %738
    %740 = vrot.lane.b32.xlu0 %v368, 96
    %v741 = vpop.permute.xlu0 %740
    %742 = vrot.lane.b32.xlu0 %v371, 96
    %v743 = vpop.permute.xlu0 %742
    %v744 = vsel %vm382, %v365, 0
    %v746 = vsel %vm382, %v368, 0
    %v748 = vsel %vm382, %v371, 0
    %v750 = vsel %vm382, %v739, 0
    %v752 = vsel %vm382, %v741, 0
    %v754 = vsel %vm382, %v743, 0
    %756 = vmatpush.xpose.msra.mxu0 0.0
    %757 = vmatpush.xpose.msra.mxu0 0.0
    %758 = vmatpush.xpose.msra.mxu0 0.0
    %759 = vmatpush.xpose.msra.mxu0 0.0
    %760 = vmatpush.xpose.msra.mxu0 0.0
    %761 = vmatpush.xpose.msra.mxu0 0.0
    %762 = vmatpush.xpose.msra.mxu0 0.0
    %763 = vmatpush.xpose.msra.mxu0 0.0
    %764 = vmatpush.xpose.msra.mxu0 0.0
    %765 = vmatpush.xpose.msra.mxu0 0.0
    %766 = vmatpush.xpose.msra.mxu0 0.0
    %767 = vmatpush.xpose.msra.mxu0 0.0
    %768 = vmatpush.xpose.msra.mxu0 0.0
    %769 = vmatpush.xpose.msra.mxu0 %v754
    %770 = vmatpush.xpose.msra.mxu0 %v752
    %771 = vmatpush.xpose.msra.mxu0 %v750
    %772 = vmatmul.f32.gmra.mxu0 %v744
    %v773 = vpop.f32.mrf.mxu0
    %v774 = vadd.f32 0.0, %v773
    %775 = vmatmul.f32.gmra.mxu0 %v746
    %v776 = vpop.f32.mrf.mxu0
    %v777 = vadd.f32 0.0, %v776
    %778 = vmatmul.f32.gmra.mxu0 %v748
    %v779 = vpop.f32.mrf.mxu0
    %v780 = vadd.f32 0.0, %v779
    %781 = vdwg.mxu0
    %v782 = vmul.f32 %v774, 0.25
    %v783 = vmul.f32 %v777, 0.25
    %v784 = vmul.f32 %v780, 0.25
    %v785 = vadd.f32 %v782, %v152
    %v786 = vadd.f32 %v783, %v152
    %v787 = vadd.f32 %v784, %v152
    %v788 = vsel %vm427, %v785, -inf
    %789 = vmax.xlane.f32.xlu0 %v788
    %v790 = vpop.xlane.xlu0 %789
    %v791 = vsel %vm427, %v786, -inf
    %792 = vmax.xlane.f32.xlu0 %v791
    %v793 = vpop.xlane.xlu0 %792
    %v794 = vsel %vm427, %v787, -inf
    %795 = vmax.xlane.f32.xlu0 %v794
    %v796 = vpop.xlane.xlu0 %795
    %v797 = vsub.f32 %v785, %v790
    %v798 = vsub.f32 %v786, %v793
    %v799 = vsub.f32 %v787, %v796
    %v800 = vmul.f32 %v797, 1.442695
    %v801 = vpow.pop %v800
    %v802 = vmul.f32 %v798, 1.442695
    %v803 = vpow.pop %v802
    %v804 = vmul.f32 %v799, 1.442695
    %v805 = vpow.pop %v804
    %v806 = vsel %vm427, %v801, 0.0
    %807 = vadd.xlane.f32.xlu0 %v806
    %v808 = vpop.xlane.xlu0 %807
    %v809 = vsel %vm427, %v803, 0.0
    %810 = vadd.xlane.f32.xlu0 %v809
    %v811 = vpop.xlane.xlu0 %810
    %v812 = vsel %vm427, %v805, 0.0
    %813 = vadd.xlane.f32.xlu0 %v812
    %v814 = vpop.xlane.xlu0 %813
    %v815 = vrcp.pop %v808
    %v816 = vmul.f32 %v808, %v815
    %v817 = vsub.f32 1.0, %v816
    %v818 = vmul.f32 %v815, %v817
    %v819 = vadd.f32 %v815, %v818
    %vm820 = vweird.f32 %v808
    %vm821 = vweird.f32 %v815
    %vm822 = vmor %vm820, %vm821
    %v823 = vsel %vm822, %v815, %v819
    %v824 = vand.u32 2147483647, %v808
    %vm825 = vcmp.eq.f32.partialorder %v824, 8.507059e+37
    %v826 = vand.u32 %v808, 2147483648
    %v827 = vor.u32 1.1754944e-38, %v826
    %v828 = vsel %vm825, %v827, %v823
    %v829 = vmul.f32 %v801, %v828
    %v830 = vrcp.pop %v811
    %v831 = vmul.f32 %v811, %v830
    %v832 = vsub.f32 1.0, %v831
    %v833 = vmul.f32 %v830, %v832
    %v834 = vadd.f32 %v830, %v833
    %vm835 = vweird.f32 %v811
    %vm836 = vweird.f32 %v830
    %vm837 = vmor %vm835, %vm836
    %v838 = vsel %vm837, %v830, %v834
    %v839 = vand.u32 2147483647, %v811
    %vm840 = vcmp.eq.f32.partialorder %v839, 8.507059e+37
    %v841 = vand.u32 %v811, 2147483648
    %v842 = vor.u32 1.1754944e-38, %v841
    %v843 = vsel %vm840, %v842, %v838
    %v844 = vmul.f32 %v803, %v843
    %v845 = vrcp.pop %v814
    %v846 = vmul.f32 %v814, %v845
    %v847 = vsub.f32 1.0, %v846
    %v848 = vmul.f32 %v845, %v847
    %v849 = vadd.f32 %v845, %v848
    %vm850 = vweird.f32 %v814
    %vm851 = vweird.f32 %v845
    %vm852 = vmor %vm850, %vm851
    %v853 = vsel %vm852, %v845, %v849
    %v854 = vand.u32 2147483647, %v814
    %vm855 = vcmp.eq.f32.partialorder %v854, 8.507059e+37
    %v856 = vand.u32 %v814, 2147483648
    %v857 = vor.u32 1.1754944e-38, %v856
    %v858 = vsel %vm855, %v857, %v853
    %v859 = vmul.f32 %v805, %v858
    %860 = vrot.lane.b32.xlu0 %v365, 64
    %v861 = vpop.permute.xlu0 %860
    %862 = vrot.lane.b32.xlu0 %v368, 64
    %v863 = vpop.permute.xlu0 %862
    %864 = vrot.lane.b32.xlu0 %v371, 64
    %v865 = vpop.permute.xlu0 %864
    %v870 = vsel %vm427, %v829, 0
    %v873 = vsel %vm427, %v844, 0
    %v876 = vsel %vm427, %v859, 0
    %878 = vmatpush.msra.mxu0 0.0
    %879 = vmatpush.msra.mxu0 0.0
    %880 = vmatpush.msra.mxu0 0.0
    %881 = vmatpush.msra.mxu0 0.0
    %882 = vmatpush.msra.mxu0 0.0
    %883 = vmatpush.msra.mxu0 0.0
    %884 = vmatpush.msra.mxu0 0.0
    %885 = vmatpush.msra.mxu0 0.0
    %886 = vmatpush.msra.mxu0 0.0
    %887 = vmatpush.msra.mxu0 0.0
    %888 = vmatpush.msra.mxu0 0.0
    %889 = vmatpush.msra.mxu0 0.0
    %890 = vmatpush.msra.mxu0 0.0
    %891 = vmatpush.msra.mxu0 %v865
    %892 = vmatpush.msra.mxu0 %v863
    %893 = vmatpush.msra.mxu0 %v861
    %894 = vmatmul.f32.gmra.mxu0 %v870
    %v895 = vpop.f32.mrf.mxu0
    %v896 = vadd.f32 0.0, %v895
    %897 = vmatmul.f32.gmra.mxu0 %v873
    %v898 = vpop.f32.mrf.mxu0
    %v899 = vadd.f32 0.0, %v898
    %900 = vmatmul.f32.gmra.mxu0 %v876
    %v901 = vpop.f32.mrf.mxu0
    %v902 = vadd.f32 0.0, %v901
    %903 = vdwg.mxu0
    %904 = vst.msk [vmem:[#allocation3 + $0x18] sm:$0xff] %vm382, %v896
    %905 = vst.msk [vmem:[#allocation3 + $0x20] sm:$0xff] %vm382, %v899
    %906 = vst.msk [vmem:[#allocation3 + $0x28] sm:$0xff] %vm382, %v902
    %907 = vrot.lane.b32.xlu0 %v365, 112
    %v908 = vpop.permute.xlu0 %907
    %909 = vrot.lane.b32.xlu0 %v368, 112
    %v910 = vpop.permute.xlu0 %909
    %911 = vrot.lane.b32.xlu0 %v371, 112
    %v912 = vpop.permute.xlu0 %911
    %913 = vrot.lane.b32.xlu0 %v365, 80
    %v914 = vpop.permute.xlu0 %913
    %915 = vrot.lane.b32.xlu0 %v368, 80
    %v916 = vpop.permute.xlu0 %915
    %917 = vrot.lane.b32.xlu0 %v371, 80
    %v918 = vpop.permute.xlu0 %917
    %v919 = vsel %vm382, %v908, 0
    %v921 = vsel %vm382, %v910, 0
    %v923 = vsel %vm382, %v912, 0
    %v925 = vsel %vm382, %v914, 0
    %v927 = vsel %vm382, %v916, 0
    %v929 = vsel %vm382, %v918, 0
    %931 = vmatpush.xpose.msra.mxu0 0.0
    %932 = vmatpush.xpose.msra.mxu0 0.0
    %933 = vmatpush.xpose.msra.mxu0 0.0
    %934 = vmatpush.xpose.msra.mxu0 0.0
    %935 = vmatpush.xpose.msra.mxu0 0.0
    %936 = vmatpush.xpose.msra.mxu0 0.0
    %937 = vmatpush.xpose.msra.mxu0 0.0
    %938 = vmatpush.xpose.msra.mxu0 0.0
    %939 = vmatpush.xpose.msra.mxu0 0.0
    %940 = vmatpush.xpose.msra.mxu0 0.0
    %941 = vmatpush.xpose.msra.mxu0 0.0
    %942 = vmatpush.xpose.msra.mxu0 0.0
    %943 = vmatpush.xpose.msra.mxu0 0.0
    %944 = vmatpush.xpose.msra.mxu0 %v929
    %945 = vmatpush.xpose.msra.mxu0 %v927
    %946 = vmatpush.xpose.msra.mxu0 %v925
    %947 = vmatmul.f32.gmra.mxu0 %v919
    %v948 = vpop.f32.mrf.mxu0
    %v949 = vadd.f32 0.0, %v948
    %950 = vmatmul.f32.gmra.mxu0 %v921
    %v951 = vpop.f32.mrf.mxu0
    %v952 = vadd.f32 0.0, %v951
    %953 = vmatmul.f32.gmra.mxu0 %v923
    %v954 = vpop.f32.mrf.mxu0
    %v955 = vadd.f32 0.0, %v954
    %956 = vdwg.mxu0
    %v957 = vmul.f32 %v949, 0.25
    %v958 = vmul.f32 %v952, 0.25
    %v959 = vmul.f32 %v955, 0.25
    %v960 = vadd.f32 %v957, %v152
    %v961 = vadd.f32 %v958, %v152
    %v962 = vadd.f32 %v959, %v152
    %v963 = vsel %vm427, %v960, -inf
    %964 = vmax.xlane.f32.xlu0 %v963
    %v965 = vpop.xlane.xlu0 %964
    %v966 = vsel %vm427, %v961, -inf
    %967 = vmax.xlane.f32.xlu0 %v966
    %v968 = vpop.xlane.xlu0 %967
    %v969 = vsel %vm427, %v962, -inf
    %970 = vmax.xlane.f32.xlu0 %v969
    %v971 = vpop.xlane.xlu0 %970
    %v972 = vsub.f32 %v960, %v965
    %v973 = vsub.f32 %v961, %v968
    %v974 = vsub.f32 %v962, %v971
    %v975 = vmul.f32 %v972, 1.442695
    %v976 = vpow.pop %v975
    %v977 = vmul.f32 %v973, 1.442695
    %v978 = vpow.pop %v977
    %v979 = vmul.f32 %v974, 1.442695
    %v980 = vpow.pop %v979
    %v981 = vsel %vm427, %v976, 0.0
    %982 = vadd.xlane.f32.xlu0 %v981
    %v983 = vpop.xlane.xlu0 %982
    %v984 = vsel %vm427, %v978, 0.0
    %985 = vadd.xlane.f32.xlu0 %v984
    %v986 = vpop.xlane.xlu0 %985
    %v987 = vsel %vm427, %v980, 0.0
    %988 = vadd.xlane.f32.xlu0 %v987
    %v989 = vpop.xlane.xlu0 %988
    %v990 = vrcp.pop %v983
    %v991 = vmul.f32 %v983, %v990
    %v992 = vsub.f32 1.0, %v991
    %v993 = vmul.f32 %v990, %v992
    %v994 = vadd.f32 %v990, %v993
    %vm995 = vweird.f32 %v983
    %vm996 = vweird.f32 %v990
    %vm997 = vmor %vm995, %vm996
    %v998 = vsel %vm997, %v990, %v994
    %v999 = vand.u32 2147483647, %v983
    %vm1000 = vcmp.eq.f32.partialorder %v999, 8.507059e+37
    %v1001 = vand.u32 %v983, 2147483648
    %v1002 = vor.u32 1.1754944e-38, %v1001
    %v1003 = vsel %vm1000, %v1002, %v998
    %v1004 = vmul.f32 %v976, %v1003
    %v1005 = vrcp.pop %v986
    %v1006 = vmul.f32 %v986, %v1005
    %v1007 = vsub.f32 1.0, %v1006
    %v1008 = vmul.f32 %v1005, %v1007
    %v1009 = vadd.f32 %v1005, %v1008
    %vm1010 = vweird.f32 %v986
    %vm1011 = vweird.f32 %v1005
    %vm1012 = vmor %vm1010, %vm1011
    %v1013 = vsel %vm1012, %v1005, %v1009
    %v1014 = vand.u32 2147483647, %v986
    %vm1015 = vcmp.eq.f32.partialorder %v1014, 8.507059e+37
    %v1016 = vand.u32 %v986, 2147483648
    %v1017 = vor.u32 1.1754944e-38, %v1016
    %v1018 = vsel %vm1015, %v1017, %v1013
    %v1019 = vmul.f32 %v978, %v1018
    %v1020 = vrcp.pop %v989
    %v1021 = vmul.f32 %v989, %v1020
    %v1022 = vsub.f32 1.0, %v1021
    %v1023 = vmul.f32 %v1020, %v1022
    %v1024 = vadd.f32 %v1020, %v1023
    %vm1025 = vweird.f32 %v989
    %vm1026 = vweird.f32 %v1020
    %vm1027 = vmor %vm1025, %vm1026
    %v1028 = vsel %vm1027, %v1020, %v1024
    %v1029 = vand.u32 2147483647, %v989
    %vm1030 = vcmp.eq.f32.partialorder %v1029, 8.507059e+37
    %v1031 = vand.u32 %v989, 2147483648
    %v1032 = vor.u32 1.1754944e-38, %v1031
    %v1033 = vsel %vm1030, %v1032, %v1028
    %v1034 = vmul.f32 %v980, %v1033
    %1035 = vrot.lane.b32.xlu0 %v365, 48
    %v1036 = vpop.permute.xlu0 %1035
    %1037 = vrot.lane.b32.xlu0 %v368, 48
    %v1038 = vpop.permute.xlu0 %1037
    %1039 = vrot.lane.b32.xlu0 %v371, 48
    %v1040 = vpop.permute.xlu0 %1039
    %v1045 = vsel %vm427, %v1004, 0
    %v1048 = vsel %vm427, %v1019, 0
    %v1051 = vsel %vm427, %v1034, 0
    %1053 = vmatpush.msra.mxu0 0.0
    %1054 = vmatpush.msra.mxu0 0.0
    %1055 = vmatpush.msra.mxu0 0.0
    %1056 = vmatpush.msra.mxu0 0.0
    %1057 = vmatpush.msra.mxu0 0.0
    %1058 = vmatpush.msra.mxu0 0.0
    %1059 = vmatpush.msra.mxu0 0.0
    %1060 = vmatpush.msra.mxu0 0.0
    %1061 = vmatpush.msra.mxu0 0.0
    %1062 = vmatpush.msra.mxu0 0.0
    %1063 = vmatpush.msra.mxu0 0.0
    %1064 = vmatpush.msra.mxu0 0.0
    %1065 = vmatpush.msra.mxu0 0.0
    %1066 = vmatpush.msra.mxu0 %v1040
    %1067 = vmatpush.msra.mxu0 %v1038
    %1068 = vmatpush.msra.mxu0 %v1036
    %1069 = vmatmul.f32.gmra.mxu0 %v1045
    %v1070 = vpop.f32.mrf.mxu0
    %v1071 = vadd.f32 0.0, %v1070
    %1072 = vmatmul.f32.gmra.mxu0 %v1048
    %v1073 = vpop.f32.mrf.mxu0
    %v1074 = vadd.f32 0.0, %v1073
    %1075 = vmatmul.f32.gmra.mxu0 %v1051
    %v1076 = vpop.f32.mrf.mxu0
    %v1077 = vadd.f32 0.0, %v1076
    %1078 = vdwg.mxu0
    %1082 = vrot.lane.b32.xlu0 %v1071, 16
    %v1083 = vpop.permute.xlu0 %1082
    %1084 = vrot.lane.b32.xlu0 %v1074, 16
    %v1085 = vpop.permute.xlu0 %1084
    %1086 = vrot.lane.b32.xlu0 %v1077, 16
    %v1087 = vpop.permute.xlu0 %1086
    %1091 = vst.msk [vmem:[#allocation3 + $0x18] sm:$0xff] %vm731, %v1083
    %1092 = vst.msk [vmem:[#allocation3 + $0x20] sm:$0xff] %vm731, %v1085
    %1093 = vst.msk [vmem:[#allocation3 + $0x28] sm:$0xff] %vm731, %v1087
    %v1094 = vld [vmem:[#allocation3] sm:$0xff]
    %v1095 = vld [vmem:[#allocation3 + $0x8] sm:$0xff]
    %v1096 = vld [vmem:[#allocation3 + $0x10] sm:$0xff]
    %v1097 = vld [vmem:[#allocation3 + $0x18] sm:$0xff]
    %v1098 = vld [vmem:[#allocation3 + $0x20] sm:$0xff]
    %v1099 = vld [vmem:[#allocation3 + $0x28] sm:$0xff]
    %v1100 = vadd.f32 %v143, %v1094
    %v1101 = vadd.f32 %v144, %v1095
    %v1102 = vadd.f32 %v145, %v1096
    %v1103 = vadd.f32 %v146, %v1097
    %v1104 = vadd.f32 %v147, %v1098
    %v1105 = vadd.f32 %v148, %v1099
    %v1106 = vld [vmem:[%s9] sm:$0x1]
    %v1107 = vld [vmem:[%s10] sm:$0x1]
    %v1108 = vsel %vm115, %v1100, 0.0
    %1109 = vadd.xlane.f32.xlu0 %v1108
    %v1110 = vpop.xlane.xlu0 %1109
    %v1111 = vsel %vm115, %v1101, 0.0
    %1112 = vadd.xlane.f32.xlu0 %v1111
    %v1113 = vpop.xlane.xlu0 %1112
    %v1114 = vsel %vm115, %v1102, 0.0
    %1115 = vadd.xlane.f32.xlu0 %v1114
    %v1116 = vpop.xlane.xlu0 %1115
    %v1117 = vsel %vm115, %v1103, 0.0
    %1118 = vadd.xlane.f32.xlu0 %v1117
    %v1119 = vpop.xlane.xlu0 %1118
    %v1120 = vsel %vm115, %v1104, 0.0
    %1121 = vadd.xlane.f32.xlu0 %v1120
    %v1122 = vpop.xlane.xlu0 %1121
    %v1123 = vsel %vm115, %v1105, 0.0
    %1124 = vadd.xlane.f32.xlu0 %v1123
    %v1125 = vpop.xlane.xlu0 %1124
    %v1126 = vmul.f32 %v1110, %v179
    %v1127 = vmul.f32 %v1113, %v179
    %v1128 = vmul.f32 %v1116, %v179
    %v1129 = vmul.f32 %v1119, %v179
    %v1130 = vmul.f32 %v1122, %v179
    %v1131 = vmul.f32 %v1125, %v179
    %v1132 = vsub.f32 %v1100, %v1126
    %v1133 = vsub.f32 %v1101, %v1127
    %v1134 = vsub.f32 %v1102, %v1128
    %v1135 = vsub.f32 %v1103, %v1129
    %v1136 = vsub.f32 %v1104, %v1130
    %v1137 = vsub.f32 %v1105, %v1131
    %v1138 = vmul.f32 %v1132, %v1132
    %v1139 = vmul.f32 %v1133, %v1133
    %v1140 = vmul.f32 %v1134, %v1134
    %v1141 = vmul.f32 %v1135, %v1135
    %v1142 = vmul.f32 %v1136, %v1136
    %v1143 = vmul.f32 %v1137, %v1137
    %v1144 = vsel %vm115, %v1138, 0.0
    %1145 = vadd.xlane.f32.xlu0 %v1144
    %v1146 = vpop.xlane.xlu0 %1145
    %v1147 = vsel %vm115, %v1139, 0.0
    %1148 = vadd.xlane.f32.xlu0 %v1147
    %v1149 = vpop.xlane.xlu0 %1148
    %v1150 = vsel %vm115, %v1140, 0.0
    %1151 = vadd.xlane.f32.xlu0 %v1150
    %v1152 = vpop.xlane.xlu0 %1151
    %v1153 = vsel %vm115, %v1141, 0.0
    %1154 = vadd.xlane.f32.xlu0 %v1153
    %v1155 = vpop.xlane.xlu0 %1154
    %v1156 = vsel %vm115, %v1142, 0.0
    %1157 = vadd.xlane.f32.xlu0 %v1156
    %v1158 = vpop.xlane.xlu0 %1157
    %v1159 = vsel %vm115, %v1143, 0.0
    %1160 = vadd.xlane.f32.xlu0 %v1159
    %v1161 = vpop.xlane.xlu0 %1160
    %v1162 = vmul.f32 %v1146, %v179
    %v1163 = vmul.f32 %v1149, %v179
    %v1164 = vmul.f32 %v1152, %v179
    %v1165 = vmul.f32 %v1155, %v179
    %v1166 = vmul.f32 %v1158, %v179
    %v1167 = vmul.f32 %v1161, %v179
    %v1168 = vadd.f32 %v1162, 1e-05
    %v1169 = vadd.f32 %v1163, 1e-05
    %v1170 = vadd.f32 %v1164, 1e-05
    %v1171 = vadd.f32 %v1165, 1e-05
    %v1172 = vadd.f32 %v1166, 1e-05
    %v1173 = vadd.f32 %v1167, 1e-05
    %v1174 = vrsqrt.pop %v1168
    %v1175 = vmul.f32 %v1174, %v1168
    %v1176 = vmul.f32 %v1175, %v1174
    %v1177 = vmul.f32 0.5, %v1176
    %v1178 = vsub.f32 1.5, %v1177
    %v1179 = vmul.f32 %v1174, %v1178
    %vm1180 = vweird.f32 %v1168
    %vm1181 = vweird.f32 %v1174
    %vm1182 = vmor %vm1180, %vm1181
    %v1183 = vsel %vm1182, %v1174, %v1179
    %v1184 = vrsqrt.pop %v1169
    %v1185 = vmul.f32 %v1184, %v1169
    %v1186 = vmul.f32 %v1185, %v1184
    %v1187 = vmul.f32 0.5, %v1186
    %v1188 = vsub.f32 1.5, %v1187
    %v1189 = vmul.f32 %v1184, %v1188
    %vm1190 = vweird.f32 %v1169
    %vm1191 = vweird.f32 %v1184
    %vm1192 = vmor %vm1190, %vm1191
    %v1193 = vsel %vm1192, %v1184, %v1189
    %v1194 = vrsqrt.pop %v1170
    %v1195 = vmul.f32 %v1194, %v1170
    %v1196 = vmul.f32 %v1195, %v1194
    %v1197 = vmul.f32 0.5, %v1196
    %v1198 = vsub.f32 1.5, %v1197
    %v1199 = vmul.f32 %v1194, %v1198
    %vm1200 = vweird.f32 %v1170
    %vm1201 = vweird.f32 %v1194
    %vm1202 = vmor %vm1200, %vm1201
    %v1203 = vsel %vm1202, %v1194, %v1199
    %v1204 = vrsqrt.pop %v1171
    %v1205 = vmul.f32 %v1204, %v1171
    %v1206 = vmul.f32 %v1205, %v1204
    %v1207 = vmul.f32 0.5, %v1206
    %v1208 = vsub.f32 1.5, %v1207
    %v1209 = vmul.f32 %v1204, %v1208
    %vm1210 = vweird.f32 %v1171
    %vm1211 = vweird.f32 %v1204
    %vm1212 = vmor %vm1210, %vm1211
    %v1213 = vsel %vm1212, %v1204, %v1209
    %v1214 = vrsqrt.pop %v1172
    %v1215 = vmul.f32 %v1214, %v1172
    %v1216 = vmul.f32 %v1215, %v1214
    %v1217 = vmul.f32 0.5, %v1216
    %v1218 = vsub.f32 1.5, %v1217
    %v1219 = vmul.f32 %v1214, %v1218
    %vm1220 = vweird.f32 %v1172
    %vm1221 = vweird.f32 %v1214
    %vm1222 = vmor %vm1220, %vm1221
    %v1223 = vsel %vm1222, %v1214, %v1219
    %v1224 = vrsqrt.pop %v1173
    %v1225 = vmul.f32 %v1224, %v1173
    %v1226 = vmul.f32 %v1225, %v1224
    %v1227 = vmul.f32 0.5, %v1226
    %v1228 = vsub.f32 1.5, %v1227
    %v1229 = vmul.f32 %v1224, %v1228
    %vm1230 = vweird.f32 %v1173
    %vm1231 = vweird.f32 %v1224
    %vm1232 = vmor %vm1230, %vm1231
    %v1233 = vsel %vm1232, %v1224, %v1229
    %v1234 = vmul.f32 %v1132, %v1183
    %v1235 = vmul.f32 %v1133, %v1193
    %v1236 = vmul.f32 %v1134, %v1203
    %v1237 = vmul.f32 %v1135, %v1213
    %v1238 = vmul.f32 %v1136, %v1223
    %v1239 = vmul.f32 %v1137, %v1233
    %v1241 = vperm.slane %v1106, 0
    %v1243 = vmul.f32 %v1234, %v1241
    %v1244 = vmul.f32 %v1235, %v1241
    %v1245 = vmul.f32 %v1236, %v1241
    %v1246 = vmul.f32 %v1237, %v1241
    %v1247 = vmul.f32 %v1238, %v1241
    %v1248 = vmul.f32 %v1239, %v1241
    %v1250 = vperm.slane %v1107, 0
    %v1252 = vadd.f32 %v1243, %v1250
    %v1253 = vadd.f32 %v1244, %v1250
    %v1254 = vadd.f32 %v1245, %v1250
    %v1255 = vadd.f32 %v1246, %v1250
    %v1256 = vadd.f32 %v1247, %v1250
    %v1257 = vadd.f32 %v1248, %v1250
    %v1258 = vld [vmem:[%s11] sm:$0xff]
    %v1259 = vld [vmem:[%s11 + $0x8] sm:$0xff]
    %v1260 = vld [vmem:[%s11 + $0x10] sm:$0xff]
    %v1261 = vld [vmem:[%s11 + $0x18] sm:$0xff]
    %v1262 = vld [vmem:[%s12] sm:$0x1]
    %v1264 = vperm.slane %v1262, 0
    %v1267 = vsel %vm115, %v1252, 0
    %v1270 = vsel %vm115, %v1253, 0
    %v1273 = vsel %vm115, %v1254, 0
    %v1276 = vsel %vm115, %v1255, 0
    %v1279 = vsel %vm115, %v1256, 0
    %v1282 = vsel %vm115, %v1257, 0
    %1284 = vmatpush.msra.mxu0 0.0
    %1285 = vmatpush.msra.mxu0 0.0
    %1286 = vmatpush.msra.mxu0 0.0
    %1287 = vmatpush.msra.mxu0 0.0
    %1288 = vmatpush.msra.mxu0 0.0
    %1289 = vmatpush.msra.mxu0 0.0
    %1290 = vmatpush.msra.mxu0 0.0
    %1291 = vmatpush.msra.mxu0 0.0
    %1292 = vmatpush.msra.mxu0 0.0
    %1293 = vmatpush.msra.mxu0 0.0
    %1294 = vmatpush.msra.mxu0 0.0
    %1295 = vmatpush.msra.mxu0 0.0
    %1296 = vmatpush.msra.mxu0 %v1261
    %1297 = vmatpush.msra.mxu0 %v1260
    %1298 = vmatpush.msra.mxu0 %v1259
    %1299 = vmatpush.msra.mxu0 %v1258
    %1300 = vmatmul.f32.gmra.mxu0 %v1267
    %v1301 = vpop.f32.mrf.mxu0
    %v1302 = vadd.f32 %v1264, %v1301
    %1303 = vmatmul.f32.gmra.mxu0 %v1270
    %v1304 = vpop.f32.mrf.mxu0
    %v1305 = vadd.f32 %v1264, %v1304
    %1306 = vmatmul.f32.gmra.mxu0 %v1273
    %v1307 = vpop.f32.mrf.mxu0
    %v1308 = vadd.f32 %v1264, %v1307
    %1309 = vmatmul.f32.gmra.mxu0 %v1276
    %v1310 = vpop.f32.mrf.mxu0
    %v1311 = vadd.f32 %v1264, %v1310
    %1312 = vmatmul.f32.gmra.mxu0 %v1279
    %v1313 = vpop.f32.mrf.mxu0
    %v1314 = vadd.f32 %v1264, %v1313
    %1315 = vmatmul.f32.gmra.mxu0 %v1282
    %v1316 = vpop.f32.mrf.mxu0
    %v1317 = vadd.f32 %v1264, %v1316
    %1318 = vdwg.mxu0
    %v1319 = vmul.f32 %v1302, 0.5
    %v1320 = vmul.f32 %v1305, 0.5
    %v1321 = vmul.f32 %v1308, 0.5
    %v1322 = vmul.f32 %v1311, 0.5
    %v1323 = vmul.f32 %v1314, 0.5
    %v1324 = vmul.f32 %v1317, 0.5
    %v1325 = vrcp.pop 1.4142135
    %v1326 = vmul.f32 1.4142135, %v1325
    %v1327 = vsub.f32 1.0, %v1326
    %v1328 = vmul.f32 %v1325, %v1327
    %v1329 = vadd.f32 %v1325, %v1328
    %vm1330 = vweird.f32 %v1325
    %v1331 = vsel %vm1330, %v1325, %v1329
    %v1332 = vmul.f32 %v1302, %v1331
    %v1333 = vmul.f32 %v1305, %v1331
    %v1334 = vmul.f32 %v1308, %v1331
    %v1335 = vmul.f32 %v1311, %v1331
    %v1336 = vmul.f32 %v1314, %v1331
    %v1337 = vmul.f32 %v1317, %v1331
    %v1338 = vmul.f32 %v1332, %v1332
    %v1339 = vmin.f32 16.0, %v1338
    %v1340 = vmul.f32 %v1339, 2.1237322e-06
    %v1341 = vadd.f32 %v1340, 0.00028619796
    %v1342 = vmul.f32 %v1339, %v1341
    %v1343 = vadd.f32 %v1342, 0.0036580483
    %v1344 = vmul.f32 %v1339, %v1343
    %v1345 = vadd.f32 %v1344, 0.05243302
    %v1346 = vmul.f32 %v1339, %v1345
    %v1347 = vadd.f32 %v1346, 0.18741608
    %v1348 = vmul.f32 %v1339, %v1347
    %v1349 = vadd.f32 %v1348, 1.1283791
    %v1350 = vmul.f32 %v1332, %v1349
    %v1351 = vmul.f32 %v1339, 3.8918573e-05
    %v1352 = vadd.f32 %v1351, 0.001143296
    %v1353 = vmul.f32 %v1339, %v1352
    %v1354 = vadd.f32 %v1353, 0.014752088
    %v1355 = vmul.f32 %v1339, %v1354
    %v1356 = vadd.f32 %v1355, 0.112945676
    %v1357 = vmul.f32 %v1339, %v1356
    %v1358 = vadd.f32 %v1357, 0.4994258
    %v1359 = vmul.f32 %v1339, %v1358
    %v1360 = vadd.f32 %v1359, 1.0
    %v1361 = vrcp.pop %v1360
    %v1362 = vmul.f32 %v1360, %v1361
    %v1363 = vsub.f32 1.0, %v1362
    %v1364 = vmul.f32 %v1361, %v1363
    %v1365 = vadd.f32 %v1361, %v1364
    %vm1366 = vweird.f32 %v1360
    %vm1367 = vweird.f32 %v1361
    %vm1368 = vmor %vm1366, %vm1367
    %v1369 = vsel %vm1368, %v1361, %v1365
    %v1370 = vand.u32 2147483647, %v1360
    %vm1371 = vcmp.eq.f32.partialorder %v1370, 8.507059e+37
    %v1372 = vand.u32 %v1360, 2147483648
    %v1373 = vor.u32 1.1754944e-38, %v1372
    %v1374 = vsel %vm1371, %v1373, %v1369
    %v1375 = vmul.f32 %v1350, %v1374
    %v1376 = vmin.f32 %v1375, 1.0
    %v1377 = vmax.f32 %v1376, -1.0
    %v1378 = vmul.f32 %v1333, %v1333
    %v1379 = vmin.f32 16.0, %v1378
    %v1380 = vmul.f32 %v1379, 2.1237322e-06
    %v1381 = vadd.f32 %v1380, 0.00028619796
    %v1382 = vmul.f32 %v1379, %v1381
    %v1383 = vadd.f32 %v1382, 0.0036580483
    %v1384 = vmul.f32 %v1379, %v1383
    %v1385 = vadd.f32 %v1384, 0.05243302
    %v1386 = vmul.f32 %v1379, %v1385
    %v1387 = vadd.f32 %v1386, 0.18741608
    %v1388 = vmul.f32 %v1379, %v1387
    %v1389 = vadd.f32 %v1388, 1.1283791
    %v1390 = vmul.f32 %v1333, %v1389
    %v1391 = vmul.f32 %v1379, 3.8918573e-05
    %v1392 = vadd.f32 %v1391, 0.001143296
    %v1393 = vmul.f32 %v1379, %v1392
    %v1394 = vadd.f32 %v1393, 0.014752088
    %v1395 = vmul.f32 %v1379, %v1394
    %v1396 = vadd.f32 %v1395, 0.112945676
    %v1397 = vmul.f32 %v1379, %v1396
    %v1398 = vadd.f32 %v1397, 0.4994258
    %v1399 = vmul.f32 %v1379, %v1398
    %v1400 = vadd.f32 %v1399, 1.0
    %v1401 = vrcp.pop %v1400
    %v1402 = vmul.f32 %v1400, %v1401
    %v1403 = vsub.f32 1.0, %v1402
    %v1404 = vmul.f32 %v1401, %v1403
    %v1405 = vadd.f32 %v1401, %v1404
    %vm1406 = vweird.f32 %v1400
    %vm1407 = vweird.f32 %v1401
    %vm1408 = vmor %vm1406, %vm1407
    %v1409 = vsel %vm1408, %v1401, %v1405
    %v1410 = vand.u32 2147483647, %v1400
    %vm1411 = vcmp.eq.f32.partialorder %v1410, 8.507059e+37
    %v1412 = vand.u32 %v1400, 2147483648
    %v1413 = vor.u32 1.1754944e-38, %v1412
    %v1414 = vsel %vm1411, %v1413, %v1409
    %v1415 = vmul.f32 %v1390, %v1414
    %v1416 = vmin.f32 %v1415, 1.0
    %v1417 = vmax.f32 %v1416, -1.0
    %v1418 = vmul.f32 %v1334, %v1334
    %v1419 = vmin.f32 16.0, %v1418
    %v1420 = vmul.f32 %v1419, 2.1237322e-06
    %v1421 = vadd.f32 %v1420, 0.00028619796
    %v1422 = vmul.f32 %v1419, %v1421
    %v1423 = vadd.f32 %v1422, 0.0036580483
    %v1424 = vmul.f32 %v1419, %v1423
    %v1425 = vadd.f32 %v1424, 0.05243302
    %v1426 = vmul.f32 %v1419, %v1425
    %v1427 = vadd.f32 %v1426, 0.18741608
    %v1428 = vmul.f32 %v1419, %v1427
    %v1429 = vadd.f32 %v1428, 1.1283791
    %v1430 = vmul.f32 %v1334, %v1429
    %v1431 = vmul.f32 %v1419, 3.8918573e-05
    %v1432 = vadd.f32 %v1431, 0.001143296
    %v1433 = vmul.f32 %v1419, %v1432
    %v1434 = vadd.f32 %v1433, 0.014752088
    %v1435 = vmul.f32 %v1419, %v1434
    %v1436 = vadd.f32 %v1435, 0.112945676
    %v1437 = vmul.f32 %v1419, %v1436
    %v1438 = vadd.f32 %v1437, 0.4994258
    %v1439 = vmul.f32 %v1419, %v1438
    %v1440 = vadd.f32 %v1439, 1.0
    %v1441 = vrcp.pop %v1440
    %v1442 = vmul.f32 %v1440, %v1441
    %v1443 = vsub.f32 1.0, %v1442
    %v1444 = vmul.f32 %v1441, %v1443
    %v1445 = vadd.f32 %v1441, %v1444
    %vm1446 = vweird.f32 %v1440
    %vm1447 = vweird.f32 %v1441
    %vm1448 = vmor %vm1446, %vm1447
    %v1449 = vsel %vm1448, %v1441, %v1445
    %v1450 = vand.u32 2147483647, %v1440
    %vm1451 = vcmp.eq.f32.partialorder %v1450, 8.507059e+37
    %v1452 = vand.u32 %v1440, 2147483648
    %v1453 = vor.u32 1.1754944e-38, %v1452
    %v1454 = vsel %vm1451, %v1453, %v1449
    %v1455 = vmul.f32 %v1430, %v1454
    %v1456 = vmin.f32 %v1455, 1.0
    %v1457 = vmax.f32 %v1456, -1.0
    %v1458 = vmul.f32 %v1335, %v1335
    %v1459 = vmin.f32 16.0, %v1458
    %v1460 = vmul.f32 %v1459, 2.1237322e-06
    %v1461 = vadd.f32 %v1460, 0.00028619796
    %v1462 = vmul.f32 %v1459, %v1461
    %v1463 = vadd.f32 %v1462, 0.0036580483
    %v1464 = vmul.f32 %v1459, %v1463
    %v1465 = vadd.f32 %v1464, 0.05243302
    %v1466 = vmul.f32 %v1459, %v1465
    %v1467 = vadd.f32 %v1466, 0.18741608
    %v1468 = vmul.f32 %v1459, %v1467
    %v1469 = vadd.f32 %v1468, 1.1283791
    %v1470 = vmul.f32 %v1335, %v1469
    %v1471 = vmul.f32 %v1459, 3.8918573e-05
    %v1472 = vadd.f32 %v1471, 0.001143296
    %v1473 = vmul.f32 %v1459, %v1472
    %v1474 = vadd.f32 %v1473, 0.014752088
    %v1475 = vmul.f32 %v1459, %v1474
    %v1476 = vadd.f32 %v1475, 0.112945676
    %v1477 = vmul.f32 %v1459, %v1476
    %v1478 = vadd.f32 %v1477, 0.4994258
    %v1479 = vmul.f32 %v1459, %v1478
    %v1480 = vadd.f32 %v1479, 1.0
    %v1481 = vrcp.pop %v1480
    %v1482 = vmul.f32 %v1480, %v1481
    %v1483 = vsub.f32 1.0, %v1482
    %v1484 = vmul.f32 %v1481, %v1483
    %v1485 = vadd.f32 %v1481, %v1484
    %vm1486 = vweird.f32 %v1480
    %vm1487 = vweird.f32 %v1481
    %vm1488 = vmor %vm1486, %vm1487
    %v1489 = vsel %vm1488, %v1481, %v1485
    %v1490 = vand.u32 2147483647, %v1480
    %vm1491 = vcmp.eq.f32.partialorder %v1490, 8.507059e+37
    %v1492 = vand.u32 %v1480, 2147483648
    %v1493 = vor.u32 1.1754944e-38, %v1492
    %v1494 = vsel %vm1491, %v1493, %v1489
    %v1495 = vmul.f32 %v1470, %v1494
    %v1496 = vmin.f32 %v1495, 1.0
    %v1497 = vmax.f32 %v1496, -1.0
    %v1498 = vmul.f32 %v1336, %v1336
    %v1499 = vmin.f32 16.0, %v1498
    %v1500 = vmul.f32 %v1499, 2.1237322e-06
    %v1501 = vadd.f32 %v1500, 0.00028619796
    %v1502 = vmul.f32 %v1499, %v1501
    %v1503 = vadd.f32 %v1502, 0.0036580483
    %v1504 = vmul.f32 %v1499, %v1503
    %v1505 = vadd.f32 %v1504, 0.05243302
    %v1506 = vmul.f32 %v1499, %v1505
    %v1507 = vadd.f32 %v1506, 0.18741608
    %v1508 = vmul.f32 %v1499, %v1507
    %v1509 = vadd.f32 %v1508, 1.1283791
    %v1510 = vmul.f32 %v1336, %v1509
    %v1511 = vmul.f32 %v1499, 3.8918573e-05
    %v1512 = vadd.f32 %v1511, 0.001143296
    %v1513 = vmul.f32 %v1499, %v1512
    %v1514 = vadd.f32 %v1513, 0.014752088
    %v1515 = vmul.f32 %v1499, %v1514
    %v1516 = vadd.f32 %v1515, 0.112945676
    %v1517 = vmul.f32 %v1499, %v1516
    %v1518 = vadd.f32 %v1517, 0.4994258
    %v1519 = vmul.f32 %v1499, %v1518
    %v1520 = vadd.f32 %v1519, 1.0
    %v1521 = vrcp.pop %v1520
    %v1522 = vmul.f32 %v1520, %v1521
    %v1523 = vsub.f32 1.0, %v1522
    %v1524 = vmul.f32 %v1521, %v1523
    %v1525 = vadd.f32 %v1521, %v1524
    %vm1526 = vweird.f32 %v1520
    %vm1527 = vweird.f32 %v1521
    %vm1528 = vmor %vm1526, %vm1527
    %v1529 = vsel %vm1528, %v1521, %v1525
    %v1530 = vand.u32 2147483647, %v1520
    %vm1531 = vcmp.eq.f32.partialorder %v1530, 8.507059e+37
    %v1532 = vand.u32 %v1520, 2147483648
    %v1533 = vor.u32 1.1754944e-38, %v1532
    %v1534 = vsel %vm1531, %v1533, %v1529
    %v1535 = vmul.f32 %v1510, %v1534
    %v1536 = vmin.f32 %v1535, 1.0
    %v1537 = vmax.f32 %v1536, -1.0
    %v1538 = vmul.f32 %v1337, %v1337
    %v1539 = vmin.f32 16.0, %v1538
    %v1540 = vmul.f32 %v1539, 2.1237322e-06
    %v1541 = vadd.f32 %v1540, 0.00028619796
    %v1542 = vmul.f32 %v1539, %v1541
    %v1543 = vadd.f32 %v1542, 0.0036580483
    %v1544 = vmul.f32 %v1539, %v1543
    %v1545 = vadd.f32 %v1544, 0.05243302
    %v1546 = vmul.f32 %v1539, %v1545
    %v1547 = vadd.f32 %v1546, 0.18741608
    %v1548 = vmul.f32 %v1539, %v1547
    %v1549 = vadd.f32 %v1548, 1.1283791
    %v1550 = vmul.f32 %v1337, %v1549
    %v1551 = vmul.f32 %v1539, 3.8918573e-05
    %v1552 = vadd.f32 %v1551, 0.001143296
    %v1553 = vmul.f32 %v1539, %v1552
    %v1554 = vadd.f32 %v1553, 0.014752088
    %v1555 = vmul.f32 %v1539, %v1554
    %v1556 = vadd.f32 %v1555, 0.112945676
    %v1557 = vmul.f32 %v1539, %v1556
    %v1558 = vadd.f32 %v1557, 0.4994258
    %v1559 = vmul.f32 %v1539, %v1558
    %v1560 = vadd.f32 %v1559, 1.0
    %v1561 = vrcp.pop %v1560
    %v1562 = vmul.f32 %v1560, %v1561
    %v1563 = vsub.f32 1.0, %v1562
    %v1564 = vmul.f32 %v1561, %v1563
    %v1565 = vadd.f32 %v1561, %v1564
    %vm1566 = vweird.f32 %v1560
    %vm1567 = vweird.f32 %v1561
    %vm1568 = vmor %vm1566, %vm1567
    %v1569 = vsel %vm1568, %v1561, %v1565
    %v1570 = vand.u32 2147483647, %v1560
    %vm1571 = vcmp.eq.f32.partialorder %v1570, 8.507059e+37
    %v1572 = vand.u32 %v1560, 2147483648
    %v1573 = vor.u32 1.1754944e-38, %v1572
    %v1574 = vsel %vm1571, %v1573, %v1569
    %v1575 = vmul.f32 %v1550, %v1574
    %v1576 = vmin.f32 %v1575, 1.0
    %v1577 = vmax.f32 %v1576, -1.0
    %v1578 = vadd.f32 %v1377, 1.0
    %v1579 = vadd.f32 %v1417, 1.0
    %v1580 = vadd.f32 %v1457, 1.0
    %v1581 = vadd.f32 %v1497, 1.0
    %v1582 = vadd.f32 %v1537, 1.0
    %v1583 = vadd.f32 %v1577, 1.0
    %v1584 = vmul.f32 %v1319, %v1578
    %v1585 = vmul.f32 %v1320, %v1579
    %v1586 = vmul.f32 %v1321, %v1580
    %v1587 = vmul.f32 %v1322, %v1581
    %v1588 = vmul.f32 %v1323, %v1582
    %v1589 = vmul.f32 %v1324, %v1583
    %v1590 = vld [vmem:[%s13] sm:$0xff]
    %v1591 = vld [vmem:[%s13 + $0x8] sm:$0xff]
    %v1592 = vld [vmem:[%s13 + $0x10] sm:$0xff]
    %v1593 = vld [vmem:[%s13 + $0x18] sm:$0xff]
    %v1594 = vld [vmem:[%s13 + $0x20] sm:$0xff]
    %v1595 = vld [vmem:[%s13 + $0x28] sm:$0xff]
    %v1596 = vld [vmem:[%s13 + $0x30] sm:$0xff]
    %v1597 = vld [vmem:[%s13 + $0x38] sm:$0xff]
    %v1598 = vld [vmem:[%s13 + $0x40] sm:$0xff]
    %v1599 = vld [vmem:[%s13 + $0x48] sm:$0xff]
    %v1600 = vld [vmem:[%s13 + $0x50] sm:$0xff]
    %v1601 = vld [vmem:[%s13 + $0x58] sm:$0xff]
    %v1602 = vld [vmem:[%s13 + $0x60] sm:$0xff]
    %v1603 = vld [vmem:[%s13 + $0x68] sm:$0xff]
    %v1604 = vld [vmem:[%s13 + $0x70] sm:$0xff]
    %v1605 = vld [vmem:[%s13 + $0x78] sm:$0xff]
    %v1606 = vld [vmem:[%s14] sm:$0x1]
    %v1608 = vperm.slane %v1606, 0
    %1610 = vmatpush.msra.mxu0 %v1605
    %1611 = vmatpush.msra.mxu0 %v1604
    %1612 = vmatpush.msra.mxu0 %v1603
    %1613 = vmatpush.msra.mxu0 %v1602
    %1614 = vmatpush.msra.mxu0 %v1601
    %1615 = vmatpush.msra.mxu0 %v1600
    %1616 = vmatpush.msra.mxu0 %v1599
    %1617 = vmatpush.msra.mxu0 %v1598
    %1618 = vmatpush.msra.mxu0 %v1597
    %1619 = vmatpush.msra.mxu0 %v1596
    %1620 = vmatpush.msra.mxu0 %v1595
    %1621 = vmatpush.msra.mxu0 %v1594
    %1622 = vmatpush.msra.mxu0 %v1593
    %1623 = vmatpush.msra.mxu0 %v1592
    %1624 = vmatpush.msra.mxu0 %v1591
    %1625 = vmatpush.msra.mxu0 %v1590
    %1626 = vmatmul.f32.gmra.mxu0 %v1584
    %v1627 = vpop.f32.mrf.mxu0
    %v1628 = vadd.f32 %v1608, %v1627
    %1629 = vmatmul.f32.gmra.mxu0 %v1585
    %v1630 = vpop.f32.mrf.mxu0
    %v1631 = vadd.f32 %v1608, %v1630
    %1632 = vmatmul.f32.gmra.mxu0 %v1586
    %v1633 = vpop.f32.mrf.mxu0
    %v1634 = vadd.f32 %v1608, %v1633
    %1635 = vmatmul.f32.gmra.mxu0 %v1587
    %v1636 = vpop.f32.mrf.mxu0
    %v1637 = vadd.f32 %v1608, %v1636
    %1638 = vmatmul.f32.gmra.mxu0 %v1588
    %v1639 = vpop.f32.mrf.mxu0
    %v1640 = vadd.f32 %v1608, %v1639
    %1641 = vmatmul.f32.gmra.mxu0 %v1589
    %v1642 = vpop.f32.mrf.mxu0
    %v1643 = vadd.f32 %v1608, %v1642
    %1644 = vdwg.mxu0
    %v1645 = vadd.f32 %v1100, %v1628
    %v1646 = vadd.f32 %v1101, %v1631
    %v1647 = vadd.f32 %v1102, %v1634
    %v1648 = vadd.f32 %v1103, %v1637
    %v1649 = vadd.f32 %v1104, %v1640
    %v1650 = vadd.f32 %v1105, %v1643
    %s1651 = scalar_lea.vmem %s5, 1
    %v1652 = vld [vmem:[%s1651] sm:$0x1]
    %s1653 = scalar_lea.vmem %s6, 1
    %v1654 = vld [vmem:[%s1653] sm:$0x1]
    %v1655 = vsel %vm115, %v1645, 0.0
    %1656 = vadd.xlane.f32.xlu0 %v1655
    %v1657 = vpop.xlane.xlu0 %1656
    %v1658 = vsel %vm115, %v1646, 0.0
    %1659 = vadd.xlane.f32.xlu0 %v1658
    %v1660 = vpop.xlane.xlu0 %1659
    %v1661 = vsel %vm115, %v1647, 0.0
    %1662 = vadd.xlane.f32.xlu0 %v1661
    %v1663 = vpop.xlane.xlu0 %1662
    %v1664 = vsel %vm115, %v1648, 0.0
    %1665 = vadd.xlane.f32.xlu0 %v1664
    %v1666 = vpop.xlane.xlu0 %1665
    %v1667 = vsel %vm115, %v1649, 0.0
    %1668 = vadd.xlane.f32.xlu0 %v1667
    %v1669 = vpop.xlane.xlu0 %1668
    %v1670 = vsel %vm115, %v1650, 0.0
    %1671 = vadd.xlane.f32.xlu0 %v1670
    %v1672 = vpop.xlane.xlu0 %1671
    %v1673 = vmul.f32 %v1657, %v179
    %v1674 = vmul.f32 %v1660, %v179
    %v1675 = vmul.f32 %v1663, %v179
    %v1676 = vmul.f32 %v1666, %v179
    %v1677 = vmul.f32 %v1669, %v179
    %v1678 = vmul.f32 %v1672, %v179
    %v1679 = vsub.f32 %v1645, %v1673
    %v1680 = vsub.f32 %v1646, %v1674
    %v1681 = vsub.f32 %v1647, %v1675
    %v1682 = vsub.f32 %v1648, %v1676
    %v1683 = vsub.f32 %v1649, %v1677
    %v1684 = vsub.f32 %v1650, %v1678
    %v1685 = vmul.f32 %v1679, %v1679
    %v1686 = vmul.f32 %v1680, %v1680
    %v1687 = vmul.f32 %v1681, %v1681
    %v1688 = vmul.f32 %v1682, %v1682
    %v1689 = vmul.f32 %v1683, %v1683
    %v1690 = vmul.f32 %v1684, %v1684
    %v1691 = vsel %vm115, %v1685, 0.0
    %1692 = vadd.xlane.f32.xlu0 %v1691
    %v1693 = vpop.xlane.xlu0 %1692
    %v1694 = vsel %vm115, %v1686, 0.0
    %1695 = vadd.xlane.f32.xlu0 %v1694
    %v1696 = vpop.xlane.xlu0 %1695
    %v1697 = vsel %vm115, %v1687, 0.0
    %1698 = vadd.xlane.f32.xlu0 %v1697
    %v1699 = vpop.xlane.xlu0 %1698
    %v1700 = vsel %vm115, %v1688, 0.0
    %1701 = vadd.xlane.f32.xlu0 %v1700
    %v1702 = vpop.xlane.xlu0 %1701
    %v1703 = vsel %vm115, %v1689, 0.0
    %1704 = vadd.xlane.f32.xlu0 %v1703
    %v1705 = vpop.xlane.xlu0 %1704
    %v1706 = vsel %vm115, %v1690, 0.0
    %1707 = vadd.xlane.f32.xlu0 %v1706
    %v1708 = vpop.xlane.xlu0 %1707
    %v1709 = vmul.f32 %v1693, %v179
    %v1710 = vmul.f32 %v1696, %v179
    %v1711 = vmul.f32 %v1699, %v179
    %v1712 = vmul.f32 %v1702, %v179
    %v1713 = vmul.f32 %v1705, %v179
    %v1714 = vmul.f32 %v1708, %v179
    %v1715 = vadd.f32 %v1709, 1e-05
    %v1716 = vadd.f32 %v1710, 1e-05
    %v1717 = vadd.f32 %v1711, 1e-05
    %v1718 = vadd.f32 %v1712, 1e-05
    %v1719 = vadd.f32 %v1713, 1e-05
    %v1720 = vadd.f32 %v1714, 1e-05
    %v1721 = vrsqrt.pop %v1715
    %v1722 = vmul.f32 %v1721, %v1715
    %v1723 = vmul.f32 %v1722, %v1721
    %v1724 = vmul.f32 0.5, %v1723
    %v1725 = vsub.f32 1.5, %v1724
    %v1726 = vmul.f32 %v1721, %v1725
    %vm1727 = vweird.f32 %v1715
    %vm1728 = vweird.f32 %v1721
    %vm1729 = vmor %vm1727, %vm1728
    %v1730 = vsel %vm1729, %v1721, %v1726
    %v1731 = vrsqrt.pop %v1716
    %v1732 = vmul.f32 %v1731, %v1716
    %v1733 = vmul.f32 %v1732, %v1731
    %v1734 = vmul.f32 0.5, %v1733
    %v1735 = vsub.f32 1.5, %v1734
    %v1736 = vmul.f32 %v1731, %v1735
    %vm1737 = vweird.f32 %v1716
    %vm1738 = vweird.f32 %v1731
    %vm1739 = vmor %vm1737, %vm1738
    %v1740 = vsel %vm1739, %v1731, %v1736
    %v1741 = vrsqrt.pop %v1717
    %v1742 = vmul.f32 %v1741, %v1717
    %v1743 = vmul.f32 %v1742, %v1741
    %v1744 = vmul.f32 0.5, %v1743
    %v1745 = vsub.f32 1.5, %v1744
    %v1746 = vmul.f32 %v1741, %v1745
    %vm1747 = vweird.f32 %v1717
    %vm1748 = vweird.f32 %v1741
    %vm1749 = vmor %vm1747, %vm1748
    %v1750 = vsel %vm1749, %v1741, %v1746
    %v1751 = vrsqrt.pop %v1718
    %v1752 = vmul.f32 %v1751, %v1718
    %v1753 = vmul.f32 %v1752, %v1751
    %v1754 = vmul.f32 0.5, %v1753
    %v1755 = vsub.f32 1.5, %v1754
    %v1756 = vmul.f32 %v1751, %v1755
    %vm1757 = vweird.f32 %v1718
    %vm1758 = vweird.f32 %v1751
    %vm1759 = vmor %vm1757, %vm1758
    %v1760 = vsel %vm1759, %v1751, %v1756
    %v1761 = vrsqrt.pop %v1719
    %v1762 = vmul.f32 %v1761, %v1719
    %v1763 = vmul.f32 %v1762, %v1761
    %v1764 = vmul.f32 0.5, %v1763
    %v1765 = vsub.f32 1.5, %v1764
    %v1766 = vmul.f32 %v1761, %v1765
    %vm1767 = vweird.f32 %v1719
    %vm1768 = vweird.f32 %v1761
    %vm1769 = vmor %vm1767, %vm1768
    %v1770 = vsel %vm1769, %v1761, %v1766
    %v1771 = vrsqrt.pop %v1720
    %v1772 = vmul.f32 %v1771, %v1720
    %v1773 = vmul.f32 %v1772, %v1771
    %v1774 = vmul.f32 0.5, %v1773
    %v1775 = vsub.f32 1.5, %v1774
    %v1776 = vmul.f32 %v1771, %v1775
    %vm1777 = vweird.f32 %v1720
    %vm1778 = vweird.f32 %v1771
    %vm1779 = vmor %vm1777, %vm1778
    %v1780 = vsel %vm1779, %v1771, %v1776
    %v1781 = vmul.f32 %v1679, %v1730
    %v1782 = vmul.f32 %v1680, %v1740
    %v1783 = vmul.f32 %v1681, %v1750
    %v1784 = vmul.f32 %v1682, %v1760
    %v1785 = vmul.f32 %v1683, %v1770
    %v1786 = vmul.f32 %v1684, %v1780
    %v1788 = vperm.slane %v1652, 0
    %v1790 = vmul.f32 %v1781, %v1788
    %v1791 = vmul.f32 %v1782, %v1788
    %v1792 = vmul.f32 %v1783, %v1788
    %v1793 = vmul.f32 %v1784, %v1788
    %v1794 = vmul.f32 %v1785, %v1788
    %v1795 = vmul.f32 %v1786, %v1788
    %v1797 = vperm.slane %v1654, 0
    %v1799 = vadd.f32 %v1790, %v1797
    %v1800 = vadd.f32 %v1791, %v1797
    %v1801 = vadd.f32 %v1792, %v1797
    %v1802 = vadd.f32 %v1793, %v1797
    %v1803 = vadd.f32 %v1794, %v1797
    %v1804 = vadd.f32 %v1795, %v1797
    %s1805 = scalar_lea.vmem %s7, 32
    %v1806 = vld [vmem:[%s1805] sm:$0xff]
    %v1807 = vld [vmem:[%s1805 + $0x8] sm:$0xff]
    %v1808 = vld [vmem:[%s1805 + $0x10] sm:$0xff]
    %v1809 = vld [vmem:[%s1805 + $0x18] sm:$0xff]
    %s1810 = scalar_lea.vmem %s8, 1
    %v1811 = vld [vmem:[%s1810] sm:$0x1]
    %v1813 = vperm.slane %v1811, 0
    %v1816 = vsel %vm115, %v1799, 0
    %v1819 = vsel %vm115, %v1800, 0
    %v1822 = vsel %vm115, %v1801, 0
    %v1825 = vsel %vm115, %v1802, 0
    %v1828 = vsel %vm115, %v1803, 0
    %v1831 = vsel %vm115, %v1804, 0
    %1833 = vmatpush.msra.mxu0 0.0
    %1834 = vmatpush.msra.mxu0 0.0
    %1835 = vmatpush.msra.mxu0 0.0
    %1836 = vmatpush.msra.mxu0 0.0
    %1837 = vmatpush.msra.mxu0 0.0
    %1838 = vmatpush.msra.mxu0 0.0
    %1839 = vmatpush.msra.mxu0 0.0
    %1840 = vmatpush.msra.mxu0 0.0
    %1841 = vmatpush.msra.mxu0 0.0
    %1842 = vmatpush.msra.mxu0 0.0
    %1843 = vmatpush.msra.mxu0 0.0
    %1844 = vmatpush.msra.mxu0 0.0
    %1845 = vmatpush.msra.mxu0 %v1809
    %1846 = vmatpush.msra.mxu0 %v1808
    %1847 = vmatpush.msra.mxu0 %v1807
    %1848 = vmatpush.msra.mxu0 %v1806
    %1849 = vmatmul.f32.gmra.mxu0 %v1816
    %v1850 = vpop.f32.mrf.mxu0
    %v1851 = vadd.f32 %v1813, %v1850
    %1852 = vmatmul.f32.gmra.mxu0 %v1819
    %v1853 = vpop.f32.mrf.mxu0
    %v1854 = vadd.f32 %v1813, %v1853
    %1855 = vmatmul.f32.gmra.mxu0 %v1822
    %v1856 = vpop.f32.mrf.mxu0
    %v1857 = vadd.f32 %v1813, %v1856
    %1858 = vmatmul.f32.gmra.mxu0 %v1825
    %v1859 = vpop.f32.mrf.mxu0
    %v1860 = vadd.f32 %v1813, %v1859
    %1861 = vmatmul.f32.gmra.mxu0 %v1828
    %v1862 = vpop.f32.mrf.mxu0
    %v1863 = vadd.f32 %v1813, %v1862
    %1864 = vmatmul.f32.gmra.mxu0 %v1831
    %v1865 = vpop.f32.mrf.mxu0
    %v1866 = vadd.f32 %v1813, %v1865
    %1867 = vdwg.mxu0
    %1871 = vrot.lane.b32.xlu0 %v1851, 96
    %v1872 = vpop.permute.xlu0 %1871
    %1873 = vrot.lane.b32.xlu0 %v1854, 96
    %v1874 = vpop.permute.xlu0 %1873
    %1875 = vrot.lane.b32.xlu0 %v1857, 96
    %v1876 = vpop.permute.xlu0 %1875
    %v1877 = vsel %vm382, %v1851, 0
    %v1879 = vsel %vm382, %v1854, 0
    %v1881 = vsel %vm382, %v1857, 0
    %v1883 = vsel %vm382, %v1872, 0
    %v1885 = vsel %vm382, %v1874, 0
    %v1887 = vsel %vm382, %v1876, 0
    %1889 = vmatpush.xpose.msra.mxu0 0.0
    %1890 = vmatpush.xpose.msra.mxu0 0.0
    %1891 = vmatpush.xpose.msra.mxu0 0.0
    %1892 = vmatpush.xpose.msra.mxu0 0.0
    %1893 = vmatpush.xpose.msra.mxu0 0.0
    %1894 = vmatpush.xpose.msra.mxu0 0.0
    %1895 = vmatpush.xpose.msra.mxu0 0.0
    %1896 = vmatpush.xpose.msra.mxu0 0.0
    %1897 = vmatpush.xpose.msra.mxu0 0.0
    %1898 = vmatpush.xpose.msra.mxu0 0.0
    %1899 = vmatpush.xpose.msra.mxu0 0.0
    %1900 = vmatpush.xpose.msra.mxu0 0.0
    %1901 = vmatpush.xpose.msra.mxu0 0.0
    %1902 = vmatpush.xpose.msra.mxu0 %v1887
    %1903 = vmatpush.xpose.msra.mxu0 %v1885
    %1904 = vmatpush.xpose.msra.mxu0 %v1883
    %1905 = vmatmul.f32.gmra.mxu0 %v1877
    %v1906 = vpop.f32.mrf.mxu0
    %v1907 = vadd.f32 0.0, %v1906
    %1908 = vmatmul.f32.gmra.mxu0 %v1879
    %v1909 = vpop.f32.mrf.mxu0
    %v1910 = vadd.f32 0.0, %v1909
    %1911 = vmatmul.f32.gmra.mxu0 %v1881
    %v1912 = vpop.f32.mrf.mxu0
    %v1913 = vadd.f32 0.0, %v1912
    %1914 = vdwg.mxu0
    %v1915 = vmul.f32 %v1907, 0.25
    %v1916 = vmul.f32 %v1910, 0.25
    %v1917 = vmul.f32 %v1913, 0.25
    %v1918 = vadd.f32 %v1915, %v152
    %v1919 = vadd.f32 %v1916, %v152
    %v1920 = vadd.f32 %v1917, %v152
    %v1921 = vsel %vm427, %v1918, -inf
    %1922 = vmax.xlane.f32.xlu0 %v1921
    %v1923 = vpop.xlane.xlu0 %1922
    %v1924 = vsel %vm427, %v1919, -inf
    %1925 = vmax.xlane.f32.xlu0 %v1924
    %v1926 = vpop.xlane.xlu0 %1925
    %v1927 = vsel %vm427, %v1920, -inf
    %1928 = vmax.xlane.f32.xlu0 %v1927
    %v1929 = vpop.xlane.xlu0 %1928
    %v1930 = vsub.f32 %v1918, %v1923
    %v1931 = vsub.f32 %v1919, %v1926
    %v1932 = vsub.f32 %v1920, %v1929
    %v1933 = vmul.f32 %v1930, 1.442695
    %v1934 = vpow.pop %v1933
    %v1935 = vmul.f32 %v1931, 1.442695
    %v1936 = vpow.pop %v1935
    %v1937 = vmul.f32 %v1932, 1.442695
    %v1938 = vpow.pop %v1937
    %v1939 = vsel %vm427, %v1934, 0.0
    %1940 = vadd.xlane.f32.xlu0 %v1939
    %v1941 = vpop.xlane.xlu0 %1940
    %v1942 = vsel %vm427, %v1936, 0.0
    %1943 = vadd.xlane.f32.xlu0 %v1942
    %v1944 = vpop.xlane.xlu0 %1943
    %v1945 = vsel %vm427, %v1938, 0.0
    %1946 = vadd.xlane.f32.xlu0 %v1945
    %v1947 = vpop.xlane.xlu0 %1946
    %v1948 = vrcp.pop %v1941
    %v1949 = vmul.f32 %v1941, %v1948
    %v1950 = vsub.f32 1.0, %v1949
    %v1951 = vmul.f32 %v1948, %v1950
    %v1952 = vadd.f32 %v1948, %v1951
    %vm1953 = vweird.f32 %v1941
    %vm1954 = vweird.f32 %v1948
    %vm1955 = vmor %vm1953, %vm1954
    %v1956 = vsel %vm1955, %v1948, %v1952
    %v1957 = vand.u32 2147483647, %v1941
    %vm1958 = vcmp.eq.f32.partialorder %v1957, 8.507059e+37
    %v1959 = vand.u32 %v1941, 2147483648
    %v1960 = vor.u32 1.1754944e-38, %v1959
    %v1961 = vsel %vm1958, %v1960, %v1956
    %v1962 = vmul.f32 %v1934, %v1961
    %v1963 = vrcp.pop %v1944
    %v1964 = vmul.f32 %v1944, %v1963
    %v1965 = vsub.f32 1.0, %v1964
    %v1966 = vmul.f32 %v1963, %v1965
    %v1967 = vadd.f32 %v1963, %v1966
    %vm1968 = vweird.f32 %v1944
    %vm1969 = vweird.f32 %v1963
    %vm1970 = vmor %vm1968, %vm1969
    %v1971 = vsel %vm1970, %v1963, %v1967
    %v1972 = vand.u32 2147483647, %v1944
    %vm1973 = vcmp.eq.f32.partialorder %v1972, 8.507059e+37
    %v1974 = vand.u32 %v1944, 2147483648
    %v1975 = vor.u32 1.1754944e-38, %v1974
    %v1976 = vsel %vm1973, %v1975, %v1971
    %v1977 = vmul.f32 %v1936, %v1976
    %v1978 = vrcp.pop %v1947
    %v1979 = vmul.f32 %v1947, %v1978
    %v1980 = vsub.f32 1.0, %v1979
    %v1981 = vmul.f32 %v1978, %v1980
    %v1982 = vadd.f32 %v1978, %v1981
    %vm1983 = vweird.f32 %v1947
    %vm1984 = vweird.f32 %v1978
    %vm1985 = vmor %vm1983, %vm1984
    %v1986 = vsel %vm1985, %v1978, %v1982
    %v1987 = vand.u32 2147483647, %v1947
    %vm1988 = vcmp.eq.f32.partialorder %v1987, 8.507059e+37
    %v1989 = vand.u32 %v1947, 2147483648
    %v1990 = vor.u32 1.1754944e-38, %v1989
    %v1991 = vsel %vm1988, %v1990, %v1986
    %v1992 = vmul.f32 %v1938, %v1991
    %1993 = vrot.lane.b32.xlu0 %v1851, 64
    %v1994 = vpop.permute.xlu0 %1993
    %1995 = vrot.lane.b32.xlu0 %v1854, 64
    %v1996 = vpop.permute.xlu0 %1995
    %1997 = vrot.lane.b32.xlu0 %v1857, 64
    %v1998 = vpop.permute.xlu0 %1997
    %v2003 = vsel %vm427, %v1962, 0
    %v2006 = vsel %vm427, %v1977, 0
    %v2009 = vsel %vm427, %v1992, 0
    %2011 = vmatpush.msra.mxu0 0.0
    %2012 = vmatpush.msra.mxu0 0.0
    %2013 = vmatpush.msra.mxu0 0.0
    %2014 = vmatpush.msra.mxu0 0.0
    %2015 = vmatpush.msra.mxu0 0.0
    %2016 = vmatpush.msra.mxu0 0.0
    %2017 = vmatpush.msra.mxu0 0.0
    %2018 = vmatpush.msra.mxu0 0.0
    %2019 = vmatpush.msra.mxu0 0.0
    %2020 = vmatpush.msra.mxu0 0.0
    %2021 = vmatpush.msra.mxu0 0.0
    %2022 = vmatpush.msra.mxu0 0.0
    %2023 = vmatpush.msra.mxu0 0.0
    %2024 = vmatpush.msra.mxu0 %v1998
    %2025 = vmatpush.msra.mxu0 %v1996
    %2026 = vmatpush.msra.mxu0 %v1994
    %2027 = vmatmul.f32.gmra.mxu0 %v2003
    %v2028 = vpop.f32.mrf.mxu0
    %v2029 = vadd.f32 0.0, %v2028
    %2030 = vmatmul.f32.gmra.mxu0 %v2006
    %v2031 = vpop.f32.mrf.mxu0
    %v2032 = vadd.f32 0.0, %v2031
    %2033 = vmatmul.f32.gmra.mxu0 %v2009
    %v2034 = vpop.f32.mrf.mxu0
    %v2035 = vadd.f32 0.0, %v2034
    %2036 = vdwg.mxu0
    %2037 = vst.msk [vmem:[#allocation3] sm:$0xff] %vm382, %v2029
    %2038 = vst.msk [vmem:[#allocation3 + $0x8] sm:$0xff] %vm382, %v2032
    %2039 = vst.msk [vmem:[#allocation3 + $0x10] sm:$0xff] %vm382, %v2035
    %2040 = vrot.lane.b32.xlu0 %v1851, 112
    %v2041 = vpop.permute.xlu0 %2040
    %2042 = vrot.lane.b32.xlu0 %v1854, 112
    %v2043 = vpop.permute.xlu0 %2042
    %2044 = vrot.lane.b32.xlu0 %v1857, 112
    %v2045 = vpop.permute.xlu0 %2044
    %2046 = vrot.lane.b32.xlu0 %v1851, 80
    %v2047 = vpop.permute.xlu0 %2046
    %2048 = vrot.lane.b32.xlu0 %v1854, 80
    %v2049 = vpop.permute.xlu0 %2048
    %2050 = vrot.lane.b32.xlu0 %v1857, 80
    %v2051 = vpop.permute.xlu0 %2050
    %v2052 = vsel %vm382, %v2041, 0
    %v2054 = vsel %vm382, %v2043, 0
    %v2056 = vsel %vm382, %v2045, 0
    %v2058 = vsel %vm382, %v2047, 0
    %v2060 = vsel %vm382, %v2049, 0
    %v2062 = vsel %vm382, %v2051, 0
    %2064 = vmatpush.xpose.msra.mxu0 0.0
    %2065 = vmatpush.xpose.msra.mxu0 0.0
    %2066 = vmatpush.xpose.msra.mxu0 0.0
    %2067 = vmatpush.xpose.msra.mxu0 0.0
    %2068 = vmatpush.xpose.msra.mxu0 0.0
    %2069 = vmatpush.xpose.msra.mxu0 0.0
    %2070 = vmatpush.xpose.msra.mxu0 0.0
    %2071 = vmatpush.xpose.msra.mxu0 0.0
    %2072 = vmatpush.xpose.msra.mxu0 0.0
    %2073 = vmatpush.xpose.msra.mxu0 0.0
    %2074 = vmatpush.xpose.msra.mxu0 0.0
    %2075 = vmatpush.xpose.msra.mxu0 0.0
    %2076 = vmatpush.xpose.msra.mxu0 0.0
    %2077 = vmatpush.xpose.msra.mxu0 %v2062
    %2078 = vmatpush.xpose.msra.mxu0 %v2060
    %2079 = vmatpush.xpose.msra.mxu0 %v2058
    %2080 = vmatmul.f32.gmra.mxu0 %v2052
    %v2081 = vpop.f32.mrf.mxu0
    %v2082 = vadd.f32 0.0, %v2081
    %2083 = vmatmul.f32.gmra.mxu0 %v2054
    %v2084 = vpop.f32.mrf.mxu0
    %v2085 = vadd.f32 0.0, %v2084
    %2086 = vmatmul.f32.gmra.mxu0 %v2056
    %v2087 = vpop.f32.mrf.mxu0
    %v2088 = vadd.f32 0.0, %v2087
    %2089 = vdwg.mxu0
    %v2090 = vmul.f32 %v2082, 0.25
    %v2091 = vmul.f32 %v2085, 0.25
    %v2092 = vmul.f32 %v2088, 0.25
    %v2093 = vadd.f32 %v2090, %v152
    %v2094 = vadd.f32 %v2091, %v152
    %v2095 = vadd.f32 %v2092, %v152
    %v2096 = vsel %vm427, %v2093, -inf
    %2097 = vmax.xlane.f32.xlu0 %v2096
    %v2098 = vpop.xlane.xlu0 %2097
    %v2099 = vsel %vm427, %v2094, -inf
    %2100 = vmax.xlane.f32.xlu0 %v2099
    %v2101 = vpop.xlane.xlu0 %2100
    %v2102 = vsel %vm427, %v2095, -inf
    %2103 = vmax.xlane.f32.xlu0 %v2102
    %v2104 = vpop.xlane.xlu0 %2103
    %v2105 = vsub.f32 %v2093, %v2098
    %v2106 = vsub.f32 %v2094, %v2101
    %v2107 = vsub.f32 %v2095, %v2104
    %v2108 = vmul.f32 %v2105, 1.442695
    %v2109 = vpow.pop %v2108
    %v2110 = vmul.f32 %v2106, 1.442695
    %v2111 = vpow.pop %v2110
    %v2112 = vmul.f32 %v2107, 1.442695
    %v2113 = vpow.pop %v2112
    %v2114 = vsel %vm427, %v2109, 0.0
    %2115 = vadd.xlane.f32.xlu0 %v2114
    %v2116 = vpop.xlane.xlu0 %2115
    %v2117 = vsel %vm427, %v2111, 0.0
    %2118 = vadd.xlane.f32.xlu0 %v2117
    %v2119 = vpop.xlane.xlu0 %2118
    %v2120 = vsel %vm427, %v2113, 0.0
    %2121 = vadd.xlane.f32.xlu0 %v2120
    %v2122 = vpop.xlane.xlu0 %2121
    %v2123 = vrcp.pop %v2116
    %v2124 = vmul.f32 %v2116, %v2123
    %v2125 = vsub.f32 1.0, %v2124
    %v2126 = vmul.f32 %v2123, %v2125
    %v2127 = vadd.f32 %v2123, %v2126
    %vm2128 = vweird.f32 %v2116
    %vm2129 = vweird.f32 %v2123
    %vm2130 = vmor %vm2128, %vm2129
    %v2131 = vsel %vm2130, %v2123, %v2127
    %v2132 = vand.u32 2147483647, %v2116
    %vm2133 = vcmp.eq.f32.partialorder %v2132, 8.507059e+37
    %v2134 = vand.u32 %v2116, 2147483648
    %v2135 = vor.u32 1.1754944e-38, %v2134
    %v2136 = vsel %vm2133, %v2135, %v2131
    %v2137 = vmul.f32 %v2109, %v2136
    %v2138 = vrcp.pop %v2119
    %v2139 = vmul.f32 %v2119, %v2138
    %v2140 = vsub.f32 1.0, %v2139
    %v2141 = vmul.f32 %v2138, %v2140
    %v2142 = vadd.f32 %v2138, %v2141
    %vm2143 = vweird.f32 %v2119
    %vm2144 = vweird.f32 %v2138
    %vm2145 = vmor %vm2143, %vm2144
    %v2146 = vsel %vm2145, %v2138, %v2142
    %v2147 = vand.u32 2147483647, %v2119
    %vm2148 = vcmp.eq.f32.partialorder %v2147, 8.507059e+37
    %v2149 = vand.u32 %v2119, 2147483648
    %v2150 = vor.u32 1.1754944e-38, %v2149
    %v2151 = vsel %vm2148, %v2150, %v2146
    %v2152 = vmul.f32 %v2111, %v2151
    %v2153 = vrcp.pop %v2122
    %v2154 = vmul.f32 %v2122, %v2153
    %v2155 = vsub.f32 1.0, %v2154
    %v2156 = vmul.f32 %v2153, %v2155
    %v2157 = vadd.f32 %v2153, %v2156
    %vm2158 = vweird.f32 %v2122
    %vm2159 = vweird.f32 %v2153
    %vm2160 = vmor %vm2158, %vm2159
    %v2161 = vsel %vm2160, %v2153, %v2157
    %v2162 = vand.u32 2147483647, %v2122
    %vm2163 = vcmp.eq.f32.partialorder %v2162, 8.507059e+37
    %v2164 = vand.u32 %v2122, 2147483648
    %v2165 = vor.u32 1.1754944e-38, %v2164
    %v2166 = vsel %vm2163, %v2165, %v2161
    %v2167 = vmul.f32 %v2113, %v2166
    %2168 = vrot.lane.b32.xlu0 %v1851, 48
    %v2169 = vpop.permute.xlu0 %2168
    %2170 = vrot.lane.b32.xlu0 %v1854, 48
    %v2171 = vpop.permute.xlu0 %2170
    %2172 = vrot.lane.b32.xlu0 %v1857, 48
    %v2173 = vpop.permute.xlu0 %2172
    %v2178 = vsel %vm427, %v2137, 0
    %v2181 = vsel %vm427, %v2152, 0
    %v2184 = vsel %vm427, %v2167, 0
    %2186 = vmatpush.msra.mxu0 0.0
    %2187 = vmatpush.msra.mxu0 0.0
    %2188 = vmatpush.msra.mxu0 0.0
    %2189 = vmatpush.msra.mxu0 0.0
    %2190 = vmatpush.msra.mxu0 0.0
    %2191 = vmatpush.msra.mxu0 0.0
    %2192 = vmatpush.msra.mxu0 0.0
    %2193 = vmatpush.msra.mxu0 0.0
    %2194 = vmatpush.msra.mxu0 0.0
    %2195 = vmatpush.msra.mxu0 0.0
    %2196 = vmatpush.msra.mxu0 0.0
    %2197 = vmatpush.msra.mxu0 0.0
    %2198 = vmatpush.msra.mxu0 0.0
    %2199 = vmatpush.msra.mxu0 %v2173
    %2200 = vmatpush.msra.mxu0 %v2171
    %2201 = vmatpush.msra.mxu0 %v2169
    %2202 = vmatmul.f32.gmra.mxu0 %v2178
    %v2203 = vpop.f32.mrf.mxu0
    %v2204 = vadd.f32 0.0, %v2203
    %2205 = vmatmul.f32.gmra.mxu0 %v2181
    %v2206 = vpop.f32.mrf.mxu0
    %v2207 = vadd.f32 0.0, %v2206
    %2208 = vmatmul.f32.gmra.mxu0 %v2184
    %v2209 = vpop.f32.mrf.mxu0
    %v2210 = vadd.f32 0.0, %v2209
    %2211 = vdwg.mxu0
    %2215 = vrot.lane.b32.xlu0 %v2204, 16
    %v2216 = vpop.permute.xlu0 %2215
    %2217 = vrot.lane.b32.xlu0 %v2207, 16
    %v2218 = vpop.permute.xlu0 %2217
    %2219 = vrot.lane.b32.xlu0 %v2210, 16
    %v2220 = vpop.permute.xlu0 %2219
    %2224 = vst.msk [vmem:[#allocation3] sm:$0xff] %vm731, %v2216
    %2225 = vst.msk [vmem:[#allocation3 + $0x8] sm:$0xff] %vm731, %v2218
    %2226 = vst.msk [vmem:[#allocation3 + $0x10] sm:$0xff] %vm731, %v2220
    %2230 = vrot.lane.b32.xlu0 %v1860, 96
    %v2231 = vpop.permute.xlu0 %2230
    %2232 = vrot.lane.b32.xlu0 %v1863, 96
    %v2233 = vpop.permute.xlu0 %2232
    %2234 = vrot.lane.b32.xlu0 %v1866, 96
    %v2235 = vpop.permute.xlu0 %2234
    %v2236 = vsel %vm382, %v1860, 0
    %v2238 = vsel %vm382, %v1863, 0
    %v2240 = vsel %vm382, %v1866, 0
    %v2242 = vsel %vm382, %v2231, 0
    %v2244 = vsel %vm382, %v2233, 0
    %v2246 = vsel %vm382, %v2235, 0
    %2248 = vmatpush.xpose.msra.mxu0 0.0
    %2249 = vmatpush.xpose.msra.mxu0 0.0
    %2250 = vmatpush.xpose.msra.mxu0 0.0
    %2251 = vmatpush.xpose.msra.mxu0 0.0
    %2252 = vmatpush.xpose.msra.mxu0 0.0
    %2253 = vmatpush.xpose.msra.mxu0 0.0
    %2254 = vmatpush.xpose.msra.mxu0 0.0
    %2255 = vmatpush.xpose.msra.mxu0 0.0
    %2256 = vmatpush.xpose.msra.mxu0 0.0
    %2257 = vmatpush.xpose.msra.mxu0 0.0
    %2258 = vmatpush.xpose.msra.mxu0 0.0
    %2259 = vmatpush.xpose.msra.mxu0 0.0
    %2260 = vmatpush.xpose.msra.mxu0 0.0
    %2261 = vmatpush.xpose.msra.mxu0 %v2246
    %2262 = vmatpush.xpose.msra.mxu0 %v2244
    %2263 = vmatpush.xpose.msra.mxu0 %v2242
    %2264 = vmatmul.f32.gmra.mxu0 %v2236
    %v2265 = vpop.f32.mrf.mxu0
    %v2266 = vadd.f32 0.0, %v2265
    %2267 = vmatmul.f32.gmra.mxu0 %v2238
    %v2268 = vpop.f32.mrf.mxu0
    %v2269 = vadd.f32 0.0, %v2268
    %2270 = vmatmul.f32.gmra.mxu0 %v2240
    %v2271 = vpop.f32.mrf.mxu0
    %v2272 = vadd.f32 0.0, %v2271
    %2273 = vdwg.mxu0
    %v2274 = vmul.f32 %v2266, 0.25
    %v2275 = vmul.f32 %v2269, 0.25
    %v2276 = vmul.f32 %v2272, 0.25
    %v2277 = vadd.f32 %v2274, %v152
    %v2278 = vadd.f32 %v2275, %v152
    %v2279 = vadd.f32 %v2276, %v152
    %v2280 = vsel %vm427, %v2277, -inf
    %2281 = vmax.xlane.f32.xlu0 %v2280
    %v2282 = vpop.xlane.xlu0 %2281
    %v2283 = vsel %vm427, %v2278, -inf
    %2284 = vmax.xlane.f32.xlu0 %v2283
    %v2285 = vpop.xlane.xlu0 %2284
    %v2286 = vsel %vm427, %v2279, -inf
    %2287 = vmax.xlane.f32.xlu0 %v2286
    %v2288 = vpop.xlane.xlu0 %2287
    %v2289 = vsub.f32 %v2277, %v2282
    %v2290 = vsub.f32 %v2278, %v2285
    %v2291 = vsub.f32 %v2279, %v2288
    %v2292 = vmul.f32 %v2289, 1.442695
    %v2293 = vpow.pop %v2292
    %v2294 = vmul.f32 %v2290, 1.442695
    %v2295 = vpow.pop %v2294
    %v2296 = vmul.f32 %v2291, 1.442695
    %v2297 = vpow.pop %v2296
    %v2298 = vsel %vm427, %v2293, 0.0
    %2299 = vadd.xlane.f32.xlu0 %v2298
    %v2300 = vpop.xlane.xlu0 %2299
    %v2301 = vsel %vm427, %v2295, 0.0
    %2302 = vadd.xlane.f32.xlu0 %v2301
    %v2303 = vpop.xlane.xlu0 %2302
    %v2304 = vsel %vm427, %v2297, 0.0
    %2305 = vadd.xlane.f32.xlu0 %v2304
    %v2306 = vpop.xlane.xlu0 %2305
    %v2307 = vrcp.pop %v2300
    %v2308 = vmul.f32 %v2300, %v2307
    %v2309 = vsub.f32 1.0, %v2308
    %v2310 = vmul.f32 %v2307, %v2309
    %v2311 = vadd.f32 %v2307, %v2310
    %vm2312 = vweird.f32 %v2300
    %vm2313 = vweird.f32 %v2307
    %vm2314 = vmor %vm2312, %vm2313
    %v2315 = vsel %vm2314, %v2307, %v2311
    %v2316 = vand.u32 2147483647, %v2300
    %vm2317 = vcmp.eq.f32.partialorder %v2316, 8.507059e+37
    %v2318 = vand.u32 %v2300, 2147483648
    %v2319 = vor.u32 1.1754944e-38, %v2318
    %v2320 = vsel %vm2317, %v2319, %v2315
    %v2321 = vmul.f32 %v2293, %v2320
    %v2322 = vrcp.pop %v2303
    %v2323 = vmul.f32 %v2303, %v2322
    %v2324 = vsub.f32 1.0, %v2323
    %v2325 = vmul.f32 %v2322, %v2324
    %v2326 = vadd.f32 %v2322, %v2325
    %vm2327 = vweird.f32 %v2303
    %vm2328 = vweird.f32 %v2322
    %vm2329 = vmor %vm2327, %vm2328
    %v2330 = vsel %vm2329, %v2322, %v2326
    %v2331 = vand.u32 2147483647, %v2303
    %vm2332 = vcmp.eq.f32.partialorder %v2331, 8.507059e+37
    %v2333 = vand.u32 %v2303, 2147483648
    %v2334 = vor.u32 1.1754944e-38, %v2333
    %v2335 = vsel %vm2332, %v2334, %v2330
    %v2336 = vmul.f32 %v2295, %v2335
    %v2337 = vrcp.pop %v2306
    %v2338 = vmul.f32 %v2306, %v2337
    %v2339 = vsub.f32 1.0, %v2338
    %v2340 = vmul.f32 %v2337, %v2339
    %v2341 = vadd.f32 %v2337, %v2340
    %vm2342 = vweird.f32 %v2306
    %vm2343 = vweird.f32 %v2337
    %vm2344 = vmor %vm2342, %vm2343
    %v2345 = vsel %vm2344, %v2337, %v2341
    %v2346 = vand.u32 2147483647, %v2306
    %vm2347 = vcmp.eq.f32.partialorder %v2346, 8.507059e+37
    %v2348 = vand.u32 %v2306, 2147483648
    %v2349 = vor.u32 1.1754944e-38, %v2348
    %v2350 = vsel %vm2347, %v2349, %v2345
    %v2351 = vmul.f32 %v2297, %v2350
    %2352 = vrot.lane.b32.xlu0 %v1860, 64
    %v2353 = vpop.permute.xlu0 %2352
    %2354 = vrot.lane.b32.xlu0 %v1863, 64
    %v2355 = vpop.permute.xlu0 %2354
    %2356 = vrot.lane.b32.xlu0 %v1866, 64
    %v2357 = vpop.permute.xlu0 %2356
    %v2362 = vsel %vm427, %v2321, 0
    %v2365 = vsel %vm427, %v2336, 0
    %v2368 = vsel %vm427, %v2351, 0
    %2370 = vmatpush.msra.mxu0 0.0
    %2371 = vmatpush.msra.mxu0 0.0
    %2372 = vmatpush.msra.mxu0 0.0
    %2373 = vmatpush.msra.mxu0 0.0
    %2374 = vmatpush.msra.mxu0 0.0
    %2375 = vmatpush.msra.mxu0 0.0
    %2376 = vmatpush.msra.mxu0 0.0
    %2377 = vmatpush.msra.mxu0 0.0
    %2378 = vmatpush.msra.mxu0 0.0
    %2379 = vmatpush.msra.mxu0 0.0
    %2380 = vmatpush.msra.mxu0 0.0
    %2381 = vmatpush.msra.mxu0 0.0
    %2382 = vmatpush.msra.mxu0 0.0
    %2383 = vmatpush.msra.mxu0 %v2357
    %2384 = vmatpush.msra.mxu0 %v2355
    %2385 = vmatpush.msra.mxu0 %v2353
    %2386 = vmatmul.f32.gmra.mxu0 %v2362
    %v2387 = vpop.f32.mrf.mxu0
    %v2388 = vadd.f32 0.0, %v2387
    %2389 = vmatmul.f32.gmra.mxu0 %v2365
    %v2390 = vpop.f32.mrf.mxu0
    %v2391 = vadd.f32 0.0, %v2390
    %2392 = vmatmul.f32.gmra.mxu0 %v2368
    %v2393 = vpop.f32.mrf.mxu0
    %v2394 = vadd.f32 0.0, %v2393
    %2395 = vdwg.mxu0
    %2396 = vst.msk [vmem:[#allocation3 + $0x18] sm:$0xff] %vm382, %v2388
    %2397 = vst.msk [vmem:[#allocation3 + $0x20] sm:$0xff] %vm382, %v2391
    %2398 = vst.msk [vmem:[#allocation3 + $0x28] sm:$0xff] %vm382, %v2394
    %2399 = vrot.lane.b32.xlu0 %v1860, 112
    %v2400 = vpop.permute.xlu0 %2399
    %2401 = vrot.lane.b32.xlu0 %v1863, 112
    %v2402 = vpop.permute.xlu0 %2401
    %2403 = vrot.lane.b32.xlu0 %v1866, 112
    %v2404 = vpop.permute.xlu0 %2403
    %2405 = vrot.lane.b32.xlu0 %v1860, 80
    %v2406 = vpop.permute.xlu0 %2405
    %2407 = vrot.lane.b32.xlu0 %v1863, 80
    %v2408 = vpop.permute.xlu0 %2407
    %2409 = vrot.lane.b32.xlu0 %v1866, 80
    %v2410 = vpop.permute.xlu0 %2409
    %v2411 = vsel %vm382, %v2400, 0
    %v2413 = vsel %vm382, %v2402, 0
    %v2415 = vsel %vm382, %v2404, 0
    %v2417 = vsel %vm382, %v2406, 0
    %v2419 = vsel %vm382, %v2408, 0
    %v2421 = vsel %vm382, %v2410, 0
    %2423 = vmatpush.xpose.msra.mxu0 0.0
    %2424 = vmatpush.xpose.msra.mxu0 0.0
    %2425 = vmatpush.xpose.msra.mxu0 0.0
    %2426 = vmatpush.xpose.msra.mxu0 0.0
    %2427 = vmatpush.xpose.msra.mxu0 0.0
    %2428 = vmatpush.xpose.msra.mxu0 0.0
    %2429 = vmatpush.xpose.msra.mxu0 0.0
    %2430 = vmatpush.xpose.msra.mxu0 0.0
    %2431 = vmatpush.xpose.msra.mxu0 0.0
    %2432 = vmatpush.xpose.msra.mxu0 0.0
    %2433 = vmatpush.xpose.msra.mxu0 0.0
    %2434 = vmatpush.xpose.msra.mxu0 0.0
    %2435 = vmatpush.xpose.msra.mxu0 0.0
    %2436 = vmatpush.xpose.msra.mxu0 %v2421
    %2437 = vmatpush.xpose.msra.mxu0 %v2419
    %2438 = vmatpush.xpose.msra.mxu0 %v2417
    %2439 = vmatmul.f32.gmra.mxu0 %v2411
    %v2440 = vpop.f32.mrf.mxu0
    %v2441 = vadd.f32 0.0, %v2440
    %2442 = vmatmul.f32.gmra.mxu0 %v2413
    %v2443 = vpop.f32.mrf.mxu0
    %v2444 = vadd.f32 0.0, %v2443
    %2445 = vmatmul.f32.gmra.mxu0 %v2415
    %v2446 = vpop.f32.mrf.mxu0
    %v2447 = vadd.f32 0.0, %v2446
    %2448 = vdwg.mxu0
    %v2449 = vmul.f32 %v2441, 0.25
    %v2450 = vmul.f32 %v2444, 0.25
    %v2451 = vmul.f32 %v2447, 0.25
    %v2452 = vadd.f32 %v2449, %v152
    %v2453 = vadd.f32 %v2450, %v152
    %v2454 = vadd.f32 %v2451, %v152
    %v2455 = vsel %vm427, %v2452, -inf
    %2456 = vmax.xlane.f32.xlu0 %v2455
    %v2457 = vpop.xlane.xlu0 %2456
    %v2458 = vsel %vm427, %v2453, -inf
    %2459 = vmax.xlane.f32.xlu0 %v2458
    %v2460 = vpop.xlane.xlu0 %2459
    %v2461 = vsel %vm427, %v2454, -inf
    %2462 = vmax.xlane.f32.xlu0 %v2461
    %v2463 = vpop.xlane.xlu0 %2462
    %v2464 = vsub.f32 %v2452, %v2457
    %v2465 = vsub.f32 %v2453, %v2460
    %v2466 = vsub.f32 %v2454, %v2463
    %v2467 = vmul.f32 %v2464, 1.442695
    %v2468 = vpow.pop %v2467
    %v2469 = vmul.f32 %v2465, 1.442695
    %v2470 = vpow.pop %v2469
    %v2471 = vmul.f32 %v2466, 1.442695
    %v2472 = vpow.pop %v2471
    %v2473 = vsel %vm427, %v2468, 0.0
    %2474 = vadd.xlane.f32.xlu0 %v2473
    %v2475 = vpop.xlane.xlu0 %2474
    %v2476 = vsel %vm427, %v2470, 0.0
    %2477 = vadd.xlane.f32.xlu0 %v2476
    %v2478 = vpop.xlane.xlu0 %2477
    %v2479 = vsel %vm427, %v2472, 0.0
    %2480 = vadd.xlane.f32.xlu0 %v2479
    %v2481 = vpop.xlane.xlu0 %2480
    %v2482 = vrcp.pop %v2475
    %v2483 = vmul.f32 %v2475, %v2482
    %v2484 = vsub.f32 1.0, %v2483
    %v2485 = vmul.f32 %v2482, %v2484
    %v2486 = vadd.f32 %v2482, %v2485
    %vm2487 = vweird.f32 %v2475
    %vm2488 = vweird.f32 %v2482
    %vm2489 = vmor %vm2487, %vm2488
    %v2490 = vsel %vm2489, %v2482, %v2486
    %v2491 = vand.u32 2147483647, %v2475
    %vm2492 = vcmp.eq.f32.partialorder %v2491, 8.507059e+37
    %v2493 = vand.u32 %v2475, 2147483648
    %v2494 = vor.u32 1.1754944e-38, %v2493
    %v2495 = vsel %vm2492, %v2494, %v2490
    %v2496 = vmul.f32 %v2468, %v2495
    %v2497 = vrcp.pop %v2478
    %v2498 = vmul.f32 %v2478, %v2497
    %v2499 = vsub.f32 1.0, %v2498
    %v2500 = vmul.f32 %v2497, %v2499
    %v2501 = vadd.f32 %v2497, %v2500
    %vm2502 = vweird.f32 %v2478
    %vm2503 = vweird.f32 %v2497
    %vm2504 = vmor %vm2502, %vm2503
    %v2505 = vsel %vm2504, %v2497, %v2501
    %v2506 = vand.u32 2147483647, %v2478
    %vm2507 = vcmp.eq.f32.partialorder %v2506, 8.507059e+37
    %v2508 = vand.u32 %v2478, 2147483648
    %v2509 = vor.u32 1.1754944e-38, %v2508
    %v2510 = vsel %vm2507, %v2509, %v2505
    %v2511 = vmul.f32 %v2470, %v2510
    %v2512 = vrcp.pop %v2481
    %v2513 = vmul.f32 %v2481, %v2512
    %v2514 = vsub.f32 1.0, %v2513
    %v2515 = vmul.f32 %v2512, %v2514
    %v2516 = vadd.f32 %v2512, %v2515
    %vm2517 = vweird.f32 %v2481
    %vm2518 = vweird.f32 %v2512
    %vm2519 = vmor %vm2517, %vm2518
    %v2520 = vsel %vm2519, %v2512, %v2516
    %v2521 = vand.u32 2147483647, %v2481
    %vm2522 = vcmp.eq.f32.partialorder %v2521, 8.507059e+37
    %v2523 = vand.u32 %v2481, 2147483648
    %v2524 = vor.u32 1.1754944e-38, %v2523
    %v2525 = vsel %vm2522, %v2524, %v2520
    %v2526 = vmul.f32 %v2472, %v2525
    %2527 = vrot.lane.b32.xlu0 %v1860, 48
    %v2528 = vpop.permute.xlu0 %2527
    %2529 = vrot.lane.b32.xlu0 %v1863, 48
    %v2530 = vpop.permute.xlu0 %2529
    %2531 = vrot.lane.b32.xlu0 %v1866, 48
    %v2532 = vpop.permute.xlu0 %2531
    %v2537 = vsel %vm427, %v2496, 0
    %v2540 = vsel %vm427, %v2511, 0
    %v2543 = vsel %vm427, %v2526, 0
    %2545 = vmatpush.msra.mxu0 0.0
    %2546 = vmatpush.msra.mxu0 0.0
    %2547 = vmatpush.msra.mxu0 0.0
    %2548 = vmatpush.msra.mxu0 0.0
    %2549 = vmatpush.msra.mxu0 0.0
    %2550 = vmatpush.msra.mxu0 0.0
    %2551 = vmatpush.msra.mxu0 0.0
    %2552 = vmatpush.msra.mxu0 0.0
    %2553 = vmatpush.msra.mxu0 0.0
    %2554 = vmatpush.msra.mxu0 0.0
    %2555 = vmatpush.msra.mxu0 0.0
    %2556 = vmatpush.msra.mxu0 0.0
    %2557 = vmatpush.msra.mxu0 0.0
    %2558 = vmatpush.msra.mxu0 %v2532
    %2559 = vmatpush.msra.mxu0 %v2530
    %2560 = vmatpush.msra.mxu0 %v2528
    %2561 = vmatmul.f32.gmra.mxu0 %v2537
    %v2562 = vpop.f32.mrf.mxu0
    %v2563 = vadd.f32 0.0, %v2562
    %2564 = vmatmul.f32.gmra.mxu0 %v2540
    %v2565 = vpop.f32.mrf.mxu0
    %v2566 = vadd.f32 0.0, %v2565
    %2567 = vmatmul.f32.gmra.mxu0 %v2543
    %v2568 = vpop.f32.mrf.mxu0
    %v2569 = vadd.f32 0.0, %v2568
    %2570 = vdwg.mxu0
    %2574 = vrot.lane.b32.xlu0 %v2563, 16
    %v2575 = vpop.permute.xlu0 %2574
    %2576 = vrot.lane.b32.xlu0 %v2566, 16
    %v2577 = vpop.permute.xlu0 %2576
    %2578 = vrot.lane.b32.xlu0 %v2569, 16
    %v2579 = vpop.permute.xlu0 %2578
    %2583 = vst.msk [vmem:[#allocation3 + $0x18] sm:$0xff] %vm731, %v2575
    %2584 = vst.msk [vmem:[#allocation3 + $0x20] sm:$0xff] %vm731, %v2577
    %2585 = vst.msk [vmem:[#allocation3 + $0x28] sm:$0xff] %vm731, %v2579
    %v2586 = vld [vmem:[#allocation3] sm:$0xff]
    %v2587 = vld [vmem:[#allocation3 + $0x8] sm:$0xff]
    %v2588 = vld [vmem:[#allocation3 + $0x10] sm:$0xff]
    %v2589 = vld [vmem:[#allocation3 + $0x18] sm:$0xff]
    %v2590 = vld [vmem:[#allocation3 + $0x20] sm:$0xff]
    %v2591 = vld [vmem:[#allocation3 + $0x28] sm:$0xff]
    %v2592 = vadd.f32 %v1645, %v2586
    %v2593 = vadd.f32 %v1646, %v2587
    %v2594 = vadd.f32 %v1647, %v2588
    %v2595 = vadd.f32 %v1648, %v2589
    %v2596 = vadd.f32 %v1649, %v2590
    %v2597 = vadd.f32 %v1650, %v2591
    %s2598 = scalar_lea.vmem %s9, 1
    %v2599 = vld [vmem:[%s2598] sm:$0x1]
    %s2600 = scalar_lea.vmem %s10, 1
    %v2601 = vld [vmem:[%s2600] sm:$0x1]
    %v2602 = vsel %vm115, %v2592, 0.0
    %2603 = vadd.xlane.f32.xlu0 %v2602
    %v2604 = vpop.xlane.xlu0 %2603
    %v2605 = vsel %vm115, %v2593, 0.0
    %2606 = vadd.xlane.f32.xlu0 %v2605
    %v2607 = vpop.xlane.xlu0 %2606
    %v2608 = vsel %vm115, %v2594, 0.0
    %2609 = vadd.xlane.f32.xlu0 %v2608
    %v2610 = vpop.xlane.xlu0 %2609
    %v2611 = vsel %vm115, %v2595, 0.0
    %2612 = vadd.xlane.f32.xlu0 %v2611
    %v2613 = vpop.xlane.xlu0 %2612
    %v2614 = vsel %vm115, %v2596, 0.0
    %2615 = vadd.xlane.f32.xlu0 %v2614
    %v2616 = vpop.xlane.xlu0 %2615
    %v2617 = vsel %vm115, %v2597, 0.0
    %2618 = vadd.xlane.f32.xlu0 %v2617
    %v2619 = vpop.xlane.xlu0 %2618
    %v2620 = vmul.f32 %v2604, %v179
    %v2621 = vmul.f32 %v2607, %v179
    %v2622 = vmul.f32 %v2610, %v179
    %v2623 = vmul.f32 %v2613, %v179
    %v2624 = vmul.f32 %v2616, %v179
    %v2625 = vmul.f32 %v2619, %v179
    %v2626 = vsub.f32 %v2592, %v2620
    %v2627 = vsub.f32 %v2593, %v2621
    %v2628 = vsub.f32 %v2594, %v2622
    %v2629 = vsub.f32 %v2595, %v2623
    %v2630 = vsub.f32 %v2596, %v2624
    %v2631 = vsub.f32 %v2597, %v2625
    %v2632 = vmul.f32 %v2626, %v2626
    %v2633 = vmul.f32 %v2627, %v2627
    %v2634 = vmul.f32 %v2628, %v2628
    %v2635 = vmul.f32 %v2629, %v2629
    %v2636 = vmul.f32 %v2630, %v2630
    %v2637 = vmul.f32 %v2631, %v2631
    %v2638 = vsel %vm115, %v2632, 0.0
    %2639 = vadd.xlane.f32.xlu0 %v2638
    %v2640 = vpop.xlane.xlu0 %2639
    %v2641 = vsel %vm115, %v2633, 0.0
    %2642 = vadd.xlane.f32.xlu0 %v2641
    %v2643 = vpop.xlane.xlu0 %2642
    %v2644 = vsel %vm115, %v2634, 0.0
    %2645 = vadd.xlane.f32.xlu0 %v2644
    %v2646 = vpop.xlane.xlu0 %2645
    %v2647 = vsel %vm115, %v2635, 0.0
    %2648 = vadd.xlane.f32.xlu0 %v2647
    %v2649 = vpop.xlane.xlu0 %2648
    %v2650 = vsel %vm115, %v2636, 0.0
    %2651 = vadd.xlane.f32.xlu0 %v2650
    %v2652 = vpop.xlane.xlu0 %2651
    %v2653 = vsel %vm115, %v2637, 0.0
    %2654 = vadd.xlane.f32.xlu0 %v2653
    %v2655 = vpop.xlane.xlu0 %2654
    %v2656 = vmul.f32 %v2640, %v179
    %v2657 = vmul.f32 %v2643, %v179
    %v2658 = vmul.f32 %v2646, %v179
    %v2659 = vmul.f32 %v2649, %v179
    %v2660 = vmul.f32 %v2652, %v179
    %v2661 = vmul.f32 %v2655, %v179
    %v2662 = vadd.f32 %v2656, 1e-05
    %v2663 = vadd.f32 %v2657, 1e-05
    %v2664 = vadd.f32 %v2658, 1e-05
    %v2665 = vadd.f32 %v2659, 1e-05
    %v2666 = vadd.f32 %v2660, 1e-05
    %v2667 = vadd.f32 %v2661, 1e-05
    %v2668 = vrsqrt.pop %v2662
    %v2669 = vmul.f32 %v2668, %v2662
    %v2670 = vmul.f32 %v2669, %v2668
    %v2671 = vmul.f32 0.5, %v2670
    %v2672 = vsub.f32 1.5, %v2671
    %v2673 = vmul.f32 %v2668, %v2672
    %vm2674 = vweird.f32 %v2662
    %vm2675 = vweird.f32 %v2668
    %vm2676 = vmor %vm2674, %vm2675
    %v2677 = vsel %vm2676, %v2668, %v2673
    %v2678 = vrsqrt.pop %v2663
    %v2679 = vmul.f32 %v2678, %v2663
    %v2680 = vmul.f32 %v2679, %v2678
    %v2681 = vmul.f32 0.5, %v2680
    %v2682 = vsub.f32 1.5, %v2681
    %v2683 = vmul.f32 %v2678, %v2682
    %vm2684 = vweird.f32 %v2663
    %vm2685 = vweird.f32 %v2678
    %vm2686 = vmor %vm2684, %vm2685
    %v2687 = vsel %vm2686, %v2678, %v2683
    %v2688 = vrsqrt.pop %v2664
    %v2689 = vmul.f32 %v2688, %v2664
    %v2690 = vmul.f32 %v2689, %v2688
    %v2691 = vmul.f32 0.5, %v2690
    %v2692 = vsub.f32 1.5, %v2691
    %v2693 = vmul.f32 %v2688, %v2692
    %vm2694 = vweird.f32 %v2664
    %vm2695 = vweird.f32 %v2688
    %vm2696 = vmor %vm2694, %vm2695
    %v2697 = vsel %vm2696, %v2688, %v2693
    %v2698 = vrsqrt.pop %v2665
    %v2699 = vmul.f32 %v2698, %v2665
    %v2700 = vmul.f32 %v2699, %v2698
    %v2701 = vmul.f32 0.5, %v2700
    %v2702 = vsub.f32 1.5, %v2701
    %v2703 = vmul.f32 %v2698, %v2702
    %vm2704 = vweird.f32 %v2665
    %vm2705 = vweird.f32 %v2698
    %vm2706 = vmor %vm2704, %vm2705
    %v2707 = vsel %vm2706, %v2698, %v2703
    %v2708 = vrsqrt.pop %v2666
    %v2709 = vmul.f32 %v2708, %v2666
    %v2710 = vmul.f32 %v2709, %v2708
    %v2711 = vmul.f32 0.5, %v2710
    %v2712 = vsub.f32 1.5, %v2711
    %v2713 = vmul.f32 %v2708, %v2712
    %vm2714 = vweird.f32 %v2666
    %vm2715 = vweird.f32 %v2708
    %vm2716 = vmor %vm2714, %vm2715
    %v2717 = vsel %vm2716, %v2708, %v2713
    %v2718 = vrsqrt.pop %v2667
    %v2719 = vmul.f32 %v2718, %v2667
    %v2720 = vmul.f32 %v2719, %v2718
    %v2721 = vmul.f32 0.5, %v2720
    %v2722 = vsub.f32 1.5, %v2721
    %v2723 = vmul.f32 %v2718, %v2722
    %vm2724 = vweird.f32 %v2667
    %vm2725 = vweird.f32 %v2718
    %vm2726 = vmor %vm2724, %vm2725
    %v2727 = vsel %vm2726, %v2718, %v2723
    %v2728 = vmul.f32 %v2626, %v2677
    %v2729 = vmul.f32 %v2627, %v2687
    %v2730 = vmul.f32 %v2628, %v2697
    %v2731 = vmul.f32 %v2629, %v2707
    %v2732 = vmul.f32 %v2630, %v2717
    %v2733 = vmul.f32 %v2631, %v2727
    %v2735 = vperm.slane %v2599, 0
    %v2737 = vmul.f32 %v2728, %v2735
    %v2738 = vmul.f32 %v2729, %v2735
    %v2739 = vmul.f32 %v2730, %v2735
    %v2740 = vmul.f32 %v2731, %v2735
    %v2741 = vmul.f32 %v2732, %v2735
    %v2742 = vmul.f32 %v2733, %v2735
    %v2744 = vperm.slane %v2601, 0
    %v2746 = vadd.f32 %v2737, %v2744
    %v2747 = vadd.f32 %v2738, %v2744
    %v2748 = vadd.f32 %v2739, %v2744
    %v2749 = vadd.f32 %v2740, %v2744
    %v2750 = vadd.f32 %v2741, %v2744
    %v2751 = vadd.f32 %v2742, %v2744
    %s2752 = scalar_lea.vmem %s11, 32
    %v2753 = vld [vmem:[%s2752] sm:$0xff]
    %v2754 = vld [vmem:[%s2752 + $0x8] sm:$0xff]
    %v2755 = vld [vmem:[%s2752 + $0x10] sm:$0xff]
    %v2756 = vld [vmem:[%s2752 + $0x18] sm:$0xff]
    %s2757 = scalar_lea.vmem %s12, 1
    %v2758 = vld [vmem:[%s2757] sm:$0x1]
    %v2760 = vperm.slane %v2758, 0
    %v2763 = vsel %vm115, %v2746, 0
    %v2766 = vsel %vm115, %v2747, 0
    %v2769 = vsel %vm115, %v2748, 0
    %v2772 = vsel %vm115, %v2749, 0
    %v2775 = vsel %vm115, %v2750, 0
    %v2778 = vsel %vm115, %v2751, 0
    %2780 = vmatpush.msra.mxu0 0.0
    %2781 = vmatpush.msra.mxu0 0.0
    %2782 = vmatpush.msra.mxu0 0.0
    %2783 = vmatpush.msra.mxu0 0.0
    %2784 = vmatpush.msra.mxu0 0.0
    %2785 = vmatpush.msra.mxu0 0.0
    %2786 = vmatpush.msra.mxu0 0.0
    %2787 = vmatpush.msra.mxu0 0.0
    %2788 = vmatpush.msra.mxu0 0.0
    %2789 = vmatpush.msra.mxu0 0.0
    %2790 = vmatpush.msra.mxu0 0.0
    %2791 = vmatpush.msra.mxu0 0.0
    %2792 = vmatpush.msra.mxu0 %v2756
    %2793 = vmatpush.msra.mxu0 %v2755
    %2794 = vmatpush.msra.mxu0 %v2754
    %2795 = vmatpush.msra.mxu0 %v2753
    %2796 = vmatmul.f32.gmra.mxu0 %v2763
    %v2797 = vpop.f32.mrf.mxu0
    %v2798 = vadd.f32 %v2760, %v2797
    %2799 = vmatmul.f32.gmra.mxu0 %v2766
    %v2800 = vpop.f32.mrf.mxu0
    %v2801 = vadd.f32 %v2760, %v2800
    %2802 = vmatmul.f32.gmra.mxu0 %v2769
    %v2803 = vpop.f32.mrf.mxu0
    %v2804 = vadd.f32 %v2760, %v2803
    %2805 = vmatmul.f32.gmra.mxu0 %v2772
    %v2806 = vpop.f32.mrf.mxu0
    %v2807 = vadd.f32 %v2760, %v2806
    %2808 = vmatmul.f32.gmra.mxu0 %v2775
    %v2809 = vpop.f32.mrf.mxu0
    %v2810 = vadd.f32 %v2760, %v2809
    %2811 = vmatmul.f32.gmra.mxu0 %v2778
    %v2812 = vpop.f32.mrf.mxu0
    %v2813 = vadd.f32 %v2760, %v2812
    %2814 = vdwg.mxu0
    %v2815 = vmul.f32 %v2798, 0.5
    %v2816 = vmul.f32 %v2801, 0.5
    %v2817 = vmul.f32 %v2804, 0.5
    %v2818 = vmul.f32 %v2807, 0.5
    %v2819 = vmul.f32 %v2810, 0.5
    %v2820 = vmul.f32 %v2813, 0.5
    %v2821 = vmul.f32 %v2798, %v1331
    %v2822 = vmul.f32 %v2801, %v1331
    %v2823 = vmul.f32 %v2804, %v1331
    %v2824 = vmul.f32 %v2807, %v1331
    %v2825 = vmul.f32 %v2810, %v1331
    %v2826 = vmul.f32 %v2813, %v1331
    %v2827 = vmul.f32 %v2821, %v2821
    %v2828 = vmin.f32 16.0, %v2827
    %v2829 = vmul.f32 %v2828, 2.1237322e-06
    %v2830 = vadd.f32 %v2829, 0.00028619796
    %v2831 = vmul.f32 %v2828, %v2830
    %v2832 = vadd.f32 %v2831, 0.0036580483
    %v2833 = vmul.f32 %v2828, %v2832
    %v2834 = vadd.f32 %v2833, 0.05243302
    %v2835 = vmul.f32 %v2828, %v2834
    %v2836 = vadd.f32 %v2835, 0.18741608
    %v2837 = vmul.f32 %v2828, %v2836
    %v2838 = vadd.f32 %v2837, 1.1283791
    %v2839 = vmul.f32 %v2821, %v2838
    %v2840 = vmul.f32 %v2828, 3.8918573e-05
    %v2841 = vadd.f32 %v2840, 0.001143296
    %v2842 = vmul.f32 %v2828, %v2841
    %v2843 = vadd.f32 %v2842, 0.014752088
    %v2844 = vmul.f32 %v2828, %v2843
    %v2845 = vadd.f32 %v2844, 0.112945676
    %v2846 = vmul.f32 %v2828, %v2845
    %v2847 = vadd.f32 %v2846, 0.4994258
    %v2848 = vmul.f32 %v2828, %v2847
    %v2849 = vadd.f32 %v2848, 1.0
    %v2850 = vrcp.pop %v2849
    %v2851 = vmul.f32 %v2849, %v2850
    %v2852 = vsub.f32 1.0, %v2851
    %v2853 = vmul.f32 %v2850, %v2852
    %v2854 = vadd.f32 %v2850, %v2853
    %vm2855 = vweird.f32 %v2849
    %vm2856 = vweird.f32 %v2850
    %vm2857 = vmor %vm2855, %vm2856
    %v2858 = vsel %vm2857, %v2850, %v2854
    %v2859 = vand.u32 2147483647, %v2849
    %vm2860 = vcmp.eq.f32.partialorder %v2859, 8.507059e+37
    %v2861 = vand.u32 %v2849, 2147483648
    %v2862 = vor.u32 1.1754944e-38, %v2861
    %v2863 = vsel %vm2860, %v2862, %v2858
    %v2864 = vmul.f32 %v2839, %v2863
    %v2865 = vmin.f32 %v2864, 1.0
    %v2866 = vmax.f32 %v2865, -1.0
    %v2867 = vmul.f32 %v2822, %v2822
    %v2868 = vmin.f32 16.0, %v2867
    %v2869 = vmul.f32 %v2868, 2.1237322e-06
    %v2870 = vadd.f32 %v2869, 0.00028619796
    %v2871 = vmul.f32 %v2868, %v2870
    %v2872 = vadd.f32 %v2871, 0.0036580483
    %v2873 = vmul.f32 %v2868, %v2872
    %v2874 = vadd.f32 %v2873, 0.05243302
    %v2875 = vmul.f32 %v2868, %v2874
    %v2876 = vadd.f32 %v2875, 0.18741608
    %v2877 = vmul.f32 %v2868, %v2876
    %v2878 = vadd.f32 %v2877, 1.1283791
    %v2879 = vmul.f32 %v2822, %v2878
    %v2880 = vmul.f32 %v2868, 3.8918573e-05
    %v2881 = vadd.f32 %v2880, 0.001143296
    %v2882 = vmul.f32 %v2868, %v2881
    %v2883 = vadd.f32 %v2882, 0.014752088
    %v2884 = vmul.f32 %v2868, %v2883
    %v2885 = vadd.f32 %v2884, 0.112945676
    %v2886 = vmul.f32 %v2868, %v2885
    %v2887 = vadd.f32 %v2886, 0.4994258
    %v2888 = vmul.f32 %v2868, %v2887
    %v2889 = vadd.f32 %v2888, 1.0
    %v2890 = vrcp.pop %v2889
    %v2891 = vmul.f32 %v2889, %v2890
    %v2892 = vsub.f32 1.0, %v2891
    %v2893 = vmul.f32 %v2890, %v2892
    %v2894 = vadd.f32 %v2890, %v2893
    %vm2895 = vweird.f32 %v2889
    %vm2896 = vweird.f32 %v2890
    %vm2897 = vmor %vm2895, %vm2896
    %v2898 = vsel %vm2897, %v2890, %v2894
    %v2899 = vand.u32 2147483647, %v2889
    %vm2900 = vcmp.eq.f32.partialorder %v2899, 8.507059e+37
    %v2901 = vand.u32 %v2889, 2147483648
    %v2902 = vor.u32 1.1754944e-38, %v2901
    %v2903 = vsel %vm2900, %v2902, %v2898
    %v2904 = vmul.f32 %v2879, %v2903
    %v2905 = vmin.f32 %v2904, 1.0
    %v2906 = vmax.f32 %v2905, -1.0
    %v2907 = vmul.f32 %v2823, %v2823
    %v2908 = vmin.f32 16.0, %v2907
    %v2909 = vmul.f32 %v2908, 2.1237322e-06
    %v2910 = vadd.f32 %v2909, 0.00028619796
    %v2911 = vmul.f32 %v2908, %v2910
    %v2912 = vadd.f32 %v2911, 0.0036580483
    %v2913 = vmul.f32 %v2908, %v2912
    %v2914 = vadd.f32 %v2913, 0.05243302
    %v2915 = vmul.f32 %v2908, %v2914
    %v2916 = vadd.f32 %v2915, 0.18741608
    %v2917 = vmul.f32 %v2908, %v2916
    %v2918 = vadd.f32 %v2917, 1.1283791
    %v2919 = vmul.f32 %v2823, %v2918
    %v2920 = vmul.f32 %v2908, 3.8918573e-05
    %v2921 = vadd.f32 %v2920, 0.001143296
    %v2922 = vmul.f32 %v2908, %v2921
    %v2923 = vadd.f32 %v2922, 0.014752088
    %v2924 = vmul.f32 %v2908, %v2923
    %v2925 = vadd.f32 %v2924, 0.112945676
    %v2926 = vmul.f32 %v2908, %v2925
    %v2927 = vadd.f32 %v2926, 0.4994258
    %v2928 = vmul.f32 %v2908, %v2927
    %v2929 = vadd.f32 %v2928, 1.0
    %v2930 = vrcp.pop %v2929
    %v2931 = vmul.f32 %v2929, %v2930
    %v2932 = vsub.f32 1.0, %v2931
    %v2933 = vmul.f32 %v2930, %v2932
    %v2934 = vadd.f32 %v2930, %v2933
    %vm2935 = vweird.f32 %v2929
    %vm2936 = vweird.f32 %v2930
    %vm2937 = vmor %vm2935, %vm2936
    %v2938 = vsel %vm2937, %v2930, %v2934
    %v2939 = vand.u32 2147483647, %v2929
    %vm2940 = vcmp.eq.f32.partialorder %v2939, 8.507059e+37
    %v2941 = vand.u32 %v2929, 2147483648
    %v2942 = vor.u32 1.1754944e-38, %v2941
    %v2943 = vsel %vm2940, %v2942, %v2938
    %v2944 = vmul.f32 %v2919, %v2943
    %v2945 = vmin.f32 %v2944, 1.0
    %v2946 = vmax.f32 %v2945, -1.0
    %v2947 = vmul.f32 %v2824, %v2824
    %v2948 = vmin.f32 16.0, %v2947
    %v2949 = vmul.f32 %v2948, 2.1237322e-06
    %v2950 = vadd.f32 %v2949, 0.00028619796
    %v2951 = vmul.f32 %v2948, %v2950
    %v2952 = vadd.f32 %v2951, 0.0036580483
    %v2953 = vmul.f32 %v2948, %v2952
    %v2954 = vadd.f32 %v2953, 0.05243302
    %v2955 = vmul.f32 %v2948, %v2954
    %v2956 = vadd.f32 %v2955, 0.18741608
    %v2957 = vmul.f32 %v2948, %v2956
    %v2958 = vadd.f32 %v2957, 1.1283791
    %v2959 = vmul.f32 %v2824, %v2958
    %v2960 = vmul.f32 %v2948, 3.8918573e-05
    %v2961 = vadd.f32 %v2960, 0.001143296
    %v2962 = vmul.f32 %v2948, %v2961
    %v2963 = vadd.f32 %v2962, 0.014752088
    %v2964 = vmul.f32 %v2948, %v2963
    %v2965 = vadd.f32 %v2964, 0.112945676
    %v2966 = vmul.f32 %v2948, %v2965
    %v2967 = vadd.f32 %v2966, 0.4994258
    %v2968 = vmul.f32 %v2948, %v2967
    %v2969 = vadd.f32 %v2968, 1.0
    %v2970 = vrcp.pop %v2969
    %v2971 = vmul.f32 %v2969, %v2970
    %v2972 = vsub.f32 1.0, %v2971
    %v2973 = vmul.f32 %v2970, %v2972
    %v2974 = vadd.f32 %v2970, %v2973
    %vm2975 = vweird.f32 %v2969
    %vm2976 = vweird.f32 %v2970
    %vm2977 = vmor %vm2975, %vm2976
    %v2978 = vsel %vm2977, %v2970, %v2974
    %v2979 = vand.u32 2147483647, %v2969
    %vm2980 = vcmp.eq.f32.partialorder %v2979, 8.507059e+37
    %v2981 = vand.u32 %v2969, 2147483648
    %v2982 = vor.u32 1.1754944e-38, %v2981
    %v2983 = vsel %vm2980, %v2982, %v2978
    %v2984 = vmul.f32 %v2959, %v2983
    %v2985 = vmin.f32 %v2984, 1.0
    %v2986 = vmax.f32 %v2985, -1.0
    %v2987 = vmul.f32 %v2825, %v2825
    %v2988 = vmin.f32 16.0, %v2987
    %v2989 = vmul.f32 %v2988, 2.1237322e-06
    %v2990 = vadd.f32 %v2989, 0.00028619796
    %v2991 = vmul.f32 %v2988, %v2990
    %v2992 = vadd.f32 %v2991, 0.0036580483
    %v2993 = vmul.f32 %v2988, %v2992
    %v2994 = vadd.f32 %v2993, 0.05243302
    %v2995 = vmul.f32 %v2988, %v2994
    %v2996 = vadd.f32 %v2995, 0.18741608
    %v2997 = vmul.f32 %v2988, %v2996
    %v2998 = vadd.f32 %v2997, 1.1283791
    %v2999 = vmul.f32 %v2825, %v2998
    %v3000 = vmul.f32 %v2988, 3.8918573e-05
    %v3001 = vadd.f32 %v3000, 0.001143296
    %v3002 = vmul.f32 %v2988, %v3001
    %v3003 = vadd.f32 %v3002, 0.014752088
    %v3004 = vmul.f32 %v2988, %v3003
    %v3005 = vadd.f32 %v3004, 0.112945676
    %v3006 = vmul.f32 %v2988, %v3005
    %v3007 = vadd.f32 %v3006, 0.4994258
    %v3008 = vmul.f32 %v2988, %v3007
    %v3009 = vadd.f32 %v3008, 1.0
    %v3010 = vrcp.pop %v3009
    %v3011 = vmul.f32 %v3009, %v3010
    %v3012 = vsub.f32 1.0, %v3011
    %v3013 = vmul.f32 %v3010, %v3012
    %v3014 = vadd.f32 %v3010, %v3013
    %vm3015 = vweird.f32 %v3009
    %vm3016 = vweird.f32 %v3010
    %vm3017 = vmor %vm3015, %vm3016
    %v3018 = vsel %vm3017, %v3010, %v3014
    %v3019 = vand.u32 2147483647, %v3009
    %vm3020 = vcmp.eq.f32.partialorder %v3019, 8.507059e+37
    %v3021 = vand.u32 %v3009, 2147483648
    %v3022 = vor.u32 1.1754944e-38, %v3021
    %v3023 = vsel %vm3020, %v3022, %v3018
    %v3024 = vmul.f32 %v2999, %v3023
    %v3025 = vmin.f32 %v3024, 1.0
    %v3026 = vmax.f32 %v3025, -1.0
    %v3027 = vmul.f32 %v2826, %v2826
    %v3028 = vmin.f32 16.0, %v3027
    %v3029 = vmul.f32 %v3028, 2.1237322e-06
    %v3030 = vadd.f32 %v3029, 0.00028619796
    %v3031 = vmul.f32 %v3028, %v3030
    %v3032 = vadd.f32 %v3031, 0.0036580483
    %v3033 = vmul.f32 %v3028, %v3032
    %v3034 = vadd.f32 %v3033, 0.05243302
    %v3035 = vmul.f32 %v3028, %v3034
    %v3036 = vadd.f32 %v3035, 0.18741608
    %v3037 = vmul.f32 %v3028, %v3036
    %v3038 = vadd.f32 %v3037, 1.1283791
    %v3039 = vmul.f32 %v2826, %v3038
    %v3040 = vmul.f32 %v3028, 3.8918573e-05
    %v3041 = vadd.f32 %v3040, 0.001143296
    %v3042 = vmul.f32 %v3028, %v3041
    %v3043 = vadd.f32 %v3042, 0.014752088
    %v3044 = vmul.f32 %v3028, %v3043
    %v3045 = vadd.f32 %v3044, 0.112945676
    %v3046 = vmul.f32 %v3028, %v3045
    %v3047 = vadd.f32 %v3046, 0.4994258
    %v3048 = vmul.f32 %v3028, %v3047
    %v3049 = vadd.f32 %v3048, 1.0
    %v3050 = vrcp.pop %v3049
    %v3051 = vmul.f32 %v3049, %v3050
    %v3052 = vsub.f32 1.0, %v3051
    %v3053 = vmul.f32 %v3050, %v3052
    %v3054 = vadd.f32 %v3050, %v3053
    %vm3055 = vweird.f32 %v3049
    %vm3056 = vweird.f32 %v3050
    %vm3057 = vmor %vm3055, %vm3056
    %v3058 = vsel %vm3057, %v3050, %v3054
    %v3059 = vand.u32 2147483647, %v3049
    %vm3060 = vcmp.eq.f32.partialorder %v3059, 8.507059e+37
    %v3061 = vand.u32 %v3049, 2147483648
    %v3062 = vor.u32 1.1754944e-38, %v3061
    %v3063 = vsel %vm3060, %v3062, %v3058
    %v3064 = vmul.f32 %v3039, %v3063
    %v3065 = vmin.f32 %v3064, 1.0
    %v3066 = vmax.f32 %v3065, -1.0
    %v3067 = vadd.f32 %v2866, 1.0
    %v3068 = vadd.f32 %v2906, 1.0
    %v3069 = vadd.f32 %v2946, 1.0
    %v3070 = vadd.f32 %v2986, 1.0
    %v3071 = vadd.f32 %v3026, 1.0
    %v3072 = vadd.f32 %v3066, 1.0
    %v3073 = vmul.f32 %v2815, %v3067
    %v3074 = vmul.f32 %v2816, %v3068
    %v3075 = vmul.f32 %v2817, %v3069
    %v3076 = vmul.f32 %v2818, %v3070
    %v3077 = vmul.f32 %v2819, %v3071
    %v3078 = vmul.f32 %v2820, %v3072
    %s3079 = scalar_lea.vmem %s13, 128
    %v3080 = vld [vmem:[%s3079] sm:$0xff]
    %v3081 = vld [vmem:[%s3079 + $0x8] sm:$0xff]
    %v3082 = vld [vmem:[%s3079 + $0x10] sm:$0xff]
    %v3083 = vld [vmem:[%s3079 + $0x18] sm:$0xff]
    %v3084 = vld [vmem:[%s3079 + $0x20] sm:$0xff]
    %v3085 = vld [vmem:[%s3079 + $0x28] sm:$0xff]
    %v3086 = vld [vmem:[%s3079 + $0x30] sm:$0xff]
    %v3087 = vld [vmem:[%s3079 + $0x38] sm:$0xff]
    %v3088 = vld [vmem:[%s3079 + $0x40] sm:$0xff]
    %v3089 = vld [vmem:[%s3079 + $0x48] sm:$0xff]
    %v3090 = vld [vmem:[%s3079 + $0x50] sm:$0xff]
    %v3091 = vld [vmem:[%s3079 + $0x58] sm:$0xff]
    %v3092 = vld [vmem:[%s3079 + $0x60] sm:$0xff]
    %v3093 = vld [vmem:[%s3079 + $0x68] sm:$0xff]
    %v3094 = vld [vmem:[%s3079 + $0x70] sm:$0xff]
    %v3095 = vld [vmem:[%s3079 + $0x78] sm:$0xff]
    %s3096 = scalar_lea.vmem %s14, 1
    %v3097 = vld [vmem:[%s3096] sm:$0x1]
    %v3099 = vperm.slane %v3097, 0
    %3101 = vmatpush.msra.mxu0 %v3095
    %3102 = vmatpush.msra.mxu0 %v3094
    %3103 = vmatpush.msra.mxu0 %v3093
    %3104 = vmatpush.msra.mxu0 %v3092
    %3105 = vmatpush.msra.mxu0 %v3091
    %3106 = vmatpush.msra.mxu0 %v3090
    %3107 = vmatpush.msra.mxu0 %v3089
    %3108 = vmatpush.msra.mxu0 %v3088
    %3109 = vmatpush.msra.mxu0 %v3087
    %3110 = vmatpush.msra.mxu0 %v3086
    %3111 = vmatpush.msra.mxu0 %v3085
    %3112 = vmatpush.msra.mxu0 %v3084
    %3113 = vmatpush.msra.mxu0 %v3083
    %3114 = vmatpush.msra.mxu0 %v3082
    %3115 = vmatpush.msra.mxu0 %v3081
    %3116 = vmatpush.msra.mxu0 %v3080
    %3117 = vmatmul.f32.gmra.mxu0 %v3073
    %v3118 = vpop.f32.mrf.mxu0
    %v3119 = vadd.f32 %v3099, %v3118
    %3120 = vmatmul.f32.gmra.mxu0 %v3074
    %v3121 = vpop.f32.mrf.mxu0
    %v3122 = vadd.f32 %v3099, %v3121
    %3123 = vmatmul.f32.gmra.mxu0 %v3075
    %v3124 = vpop.f32.mrf.mxu0
    %v3125 = vadd.f32 %v3099, %v3124
    %3126 = vmatmul.f32.gmra.mxu0 %v3076
    %v3127 = vpop.f32.mrf.mxu0
    %v3128 = vadd.f32 %v3099, %v3127
    %3129 = vmatmul.f32.gmra.mxu0 %v3077
    %v3130 = vpop.f32.mrf.mxu0
    %v3131 = vadd.f32 %v3099, %v3130
    %3132 = vmatmul.f32.gmra.mxu0 %v3078
    %v3133 = vpop.f32.mrf.mxu0
    %v3134 = vadd.f32 %v3099, %v3133
    %3135 = vdwg.mxu0
    %v3136 = vadd.f32 %v2592, %v3119
    %v3137 = vadd.f32 %v2593, %v3122
    %v3138 = vadd.f32 %v2594, %v3125
    %v3139 = vadd.f32 %v2595, %v3128
    %v3140 = vadd.f32 %v2596, %v3131
    %v3141 = vadd.f32 %v2597, %v3134
    %v3142 = vld [vmem:[%s15] sm:$0xff]
    %v3143 = vld [vmem:[%s15 + $0x8] sm:$0xff]
    %v3144 = vld [vmem:[%s15 + $0x10] sm:$0xff]
    %v3145 = vld [vmem:[%s15 + $0x18] sm:$0xff]
    %v3146 = vld [vmem:[%s16] sm:$0x1]
    %v3148 = vperm.slane %v3146, 0
    %v3151 = vsel %vm115, %v3136, 0
    %v3154 = vsel %vm115, %v3137, 0
    %v3157 = vsel %vm115, %v3138, 0
    %v3160 = vsel %vm115, %v3139, 0
    %v3163 = vsel %vm115, %v3140, 0
    %v3166 = vsel %vm115, %v3141, 0
    %3168 = vmatpush.msra.mxu0 0.0
    %3169 = vmatpush.msra.mxu0 0.0
    %3170 = vmatpush.msra.mxu0 0.0
    %3171 = vmatpush.msra.mxu0 0.0
    %3172 = vmatpush.msra.mxu0 0.0
    %3173 = vmatpush.msra.mxu0 0.0
    %3174 = vmatpush.msra.mxu0 0.0
    %3175 = vmatpush.msra.mxu0 0.0
    %3176 = vmatpush.msra.mxu0 0.0
    %3177 = vmatpush.msra.mxu0 0.0
    %3178 = vmatpush.msra.mxu0 0.0
    %3179 = vmatpush.msra.mxu0 0.0
    %3180 = vmatpush.msra.mxu0 %v3145
    %3181 = vmatpush.msra.mxu0 %v3144
    %3182 = vmatpush.msra.mxu0 %v3143
    %3183 = vmatpush.msra.mxu0 %v3142
    %3184 = vmatmul.f32.gmra.mxu0 %v3151
    %v3185 = vpop.f32.mrf.mxu0
    %3186 = vmatmul.f32.gmra.mxu0 %v3154
    %v3187 = vpop.f32.mrf.mxu0
    %3188 = vmatmul.f32.gmra.mxu0 %v3157
    %v3189 = vpop.f32.mrf.mxu0
    %v3190 = vadd.f32 %v3148, %v3189
    %3191 = vmatmul.f32.gmra.mxu0 %v3160
    %v3192 = vpop.f32.mrf.mxu0
    %3193 = vmatmul.f32.gmra.mxu0 %v3163
    %v3194 = vpop.f32.mrf.mxu0
    %3195 = vmatmul.f32.gmra.mxu0 %v3166
    %v3196 = vpop.f32.mrf.mxu0
    %v3197 = vadd.f32 %v3148, %v3196
    %3198 = vdwg.mxu0
    %vm3199 = vcmask 80896
    %v3200 = vsel %vm3199, %v3190, -inf
    %3201 = vmax.xlane.f32.xlu0 %v3200
    %v3202 = vpop.xlane.xlu0 %3201
    %v3203 = vsel %vm3199, %v3197, -inf
    %3204 = vmax.xlane.f32.xlu0 %v3203
    %v3205 = vpop.xlane.xlu0 %3204
    %v3206 = vsub.f32 %v3190, %v3202
    %v3207 = vsub.f32 %v3197, %v3205
    %v3208 = vmul.f32 %v3206, 1.442695
    %v3209 = vpow.pop %v3208
    %v3210 = vmul.f32 %v3207, 1.442695
    %v3211 = vpow.pop %v3210
    %v3212 = vsel %vm3199, %v3209, 0.0
    %3213 = vadd.xlane.f32.xlu0 %v3212
    %v3214 = vpop.xlane.xlu0 %3213
    %v3215 = vsel %vm3199, %v3211, 0.0
    %3216 = vadd.xlane.f32.xlu0 %v3215
    %v3217 = vpop.xlane.xlu0 %3216
    %v3218 = vrcp.pop %v3214
    %v3219 = vmul.f32 %v3214, %v3218
    %v3220 = vsub.f32 1.0, %v3219
    %v3221 = vmul.f32 %v3218, %v3220
    %v3222 = vadd.f32 %v3218, %v3221
    %vm3223 = vweird.f32 %v3214
    %vm3224 = vweird.f32 %v3218
    %vm3225 = vmor %vm3223, %vm3224
    %v3226 = vsel %vm3225, %v3218, %v3222
    %v3227 = vand.u32 2147483647, %v3214
    %vm3228 = vcmp.eq.f32.partialorder %v3227, 8.507059e+37
    %v3229 = vand.u32 %v3214, 2147483648
    %v3230 = vor.u32 1.1754944e-38, %v3229
    %v3231 = vsel %vm3228, %v3230, %v3226
    %v3232 = vmul.f32 %v3209, %v3231
    %v3233 = vrcp.pop %v3217
    %v3234 = vmul.f32 %v3217, %v3233
    %v3235 = vsub.f32 1.0, %v3234
    %v3236 = vmul.f32 %v3233, %v3235
    %v3237 = vadd.f32 %v3233, %v3236
    %vm3238 = vweird.f32 %v3217
    %vm3239 = vweird.f32 %v3233
    %vm3240 = vmor %vm3238, %vm3239
    %v3241 = vsel %vm3240, %v3233, %v3237
    %v3242 = vand.u32 2147483647, %v3217
    %vm3243 = vcmp.eq.f32.partialorder %v3242, 8.507059e+37
    %v3244 = vand.u32 %v3217, 2147483648
    %v3245 = vor.u32 1.1754944e-38, %v3244
    %v3246 = vsel %vm3243, %v3245, %v3241
    %v3247 = vmul.f32 %v3211, %v3246
    %vm3248 = vcmask 73728
    %3249 = vst.msk [vmem:[#allocation4] sm:$0x1] %vm3248, %v3232
    %3250 = vst.msk [vmem:[#allocation4 + $0x1] sm:$0x1] %vm3248, %v3247
    // Predicated region
    $region70: #{tpu_custom_call.1} parent=1 // pred_check
      _
    $region71: #{tpu_custom_call.1} parent=1 // pred_check_branch
      %3252 = sbr.rel (0) target = $region73
    $region72: #{tpu_custom_call.1} parent=1 // pred_region
      %3254 = vsyncadd [#allocation5], 0
      %s3256 = sshll.u32 [#allocation4], 4
      %s3257 = int_to_ptr.vmem [resolvable:$true] %s3256
      %s3258 = sshll.u32 %s17, 4
      %s3259 = int_to_ptr.hbm [resolvable:$true] %s3258
      %3261 = dma.vmem_to_hbm [thread:$0]  %s3257, 32, %s3259, [#allocation5]
    $region73: #{tpu_custom_call.1} parent=1 // pred_fallthru
      _
    // Predicated region
    $region74: #{tpu_custom_call.1} parent=1 // pred_check
      _
    $region75: #{tpu_custom_call.1} parent=1 // pred_check_branch
      %3263 = sbr.rel (0) target = $region77
    $region76: #{tpu_custom_call.1} parent=1 // pred_region
      %3265 = dma.done [#allocation5], 32
    $region77: #{tpu_custom_call.1} parent=1 // pred_fallthru
      _
    %3266 = vsyncpa [#allocation5], 1

</llo_original>
